<compile_context>
chip_gen: v5e
topology: v5e:2x2
jax: 0.10.0
libtpu: 0.0.40
codegen_flags: <defaults>
</compile_context>

<pallas_src>
import functools
import math

import jax
import jax.numpy as jnp
from jax import lax
from jax.experimental import pallas as pl
from jax.experimental.pallas import tpu as pltpu

LN_EPS = 1e-5  # torch.nn.LayerNorm default


def _round_up(n, m):
    return ((n + m - 1) // m) * m


def _layernorm_f32(xf, gamma_f32, beta_f32):
    mean = jnp.mean(xf, axis=-1, keepdims=True)
    var = jnp.mean(jnp.square(xf - mean), axis=-1, keepdims=True)
    return (xf - mean) * lax.rsqrt(var + LN_EPS) * gamma_f32 + beta_f32


def _pick_vmem_limit(need_bytes):
    """Only raise the scoped-VMEM limit when needed; cap at ~85% of physical VMEM."""
    default_scoped = 32 * 1024 * 1024
    if need_bytes <= default_scoped:
        return None  # default is plenty; keep it portable across v5e/v6e/v7x
    try:
        phys = int(pltpu.get_tpu_info().vmem_capacity_bytes)
    except Exception:
        phys = 64 * 1024 * 1024  # conservative fallback (v7x physical)
    cap = int(phys * 0.85)
    return int(max(default_scoped, min(need_bytes + (4 << 20), cap)))


def _const_spec(shape, *, buffered=False):
    """BlockSpec for an array whose block index is constant across the whole grid."""
    zeros = (0,) * len(shape)
    if buffered:
        # Constant block -> single-buffer it: the default double-buffer is wasted VMEM.
        return pl.BlockSpec(shape, lambda *_: zeros, pipeline_mode=pl.Buffered(1))
    return pl.BlockSpec(shape, lambda *_: zeros)


def _choose_row_tile(M, tm_req, min_steps=2):
    """Largest row tile that is a multiple of 8, divides M, and leaves >= min_steps grid steps.

    Falls back to a padded layout only when no such divisor exists."""
    tm_req = max(8, int(tm_req))
    if M <= 8:
        return max(M, 1), 0
    upper = min(tm_req, max(8, M // min_steps))
    upper -= upper % 8
    upper = max(upper, 8)
    for cand in range(upper, 7, -8):
        if M % cand == 0:
            return cand, 0
    return upper, (-M) % upper


# --------------------------------------------------------------------------
# Kernel 1: x + MHSA(LayerNorm1(x)), one batch element per grid step.
# --------------------------------------------------------------------------
def attn_block_kernel(x_ref, g1_ref, be1_ref, wqkv_ref, bqkv_ref, wo_ref, bo_ref,
                      o_ref, *, heads, scale):
    x = x_ref[0]                                   # (N, D), native dtype
    n, d = x.shape
    hd = d // heads

    xf = x.astype(jnp.float32)
    xn = _layernorm_f32(xf,
                        g1_ref[...].astype(jnp.float32),
                        be1_ref[...].astype(jnp.float32)).astype(x.dtype)

    # Fused QKV projection; bias add in f32, then ONE downcast to the native dtype.
    qkv = jnp.dot(xn, wqkv_ref[...], preferred_element_type=jnp.float32)
    qkv = (qkv + bqkv_ref[...].astype(jnp.float32)).astype(x.dtype)    # (N, 3D)

    # Split heads once up front (static lane slices), then run every head through the MXU
    # as batched einsums so Mosaic can pipeline the pushes across heads.
    qh = jnp.stack([qkv[:, h * hd:(h + 1) * hd] for h in range(heads)], axis=0)          # (H,N,hd)
    kh = jnp.stack([qkv[:, d + h * hd:d + (h + 1) * hd] for h in range(heads)], axis=0)  # (H,N,hd)
    vh = jnp.stack([qkv[:, 2 * d + h * hd:2 * d + (h + 1) * hd] for h in range(heads)], axis=0)

    # Fold 1/sqrt(hd) into q: N*D multiplies instead of heads*N*N on the score matrix.
    qh = qh * scale

    s = jnp.einsum('hqd,hkd->hqk', qh, kh, preferred_element_type=jnp.float32)  # (H,N,N) f32
    s = s - jnp.max(s, axis=-1, keepdims=True)
    p = jnp.exp(s)
    # Softmax denominator via EUP approx reciprocal + VPU muls instead of an (N,N) divide.
    inv = pl.reciprocal(jnp.sum(p, axis=-1, keepdims=True), approx=True)
    p = (p * inv).astype(x.dtype)

    ctx = jnp.einsum('hqk,hkd->hqd', p, vh, preferred_element_type=jnp.float32)  # (H,N,hd) f32
    ctx = jnp.concatenate([ctx[h] for h in range(heads)], axis=-1).astype(x.dtype)  # (N, D)

    y = jnp.dot(ctx, wo_ref[...], preferred_element_type=jnp.float32)
    y = y + bo_ref[...].astype(jnp.float32)

    o_ref[0] = (xf + y).astype(o_ref.dtype)        # residual add in f32, single downcast


def _attention_call(x, g1, be1, wqkv, bqkv, wo, bo, *, heads):
    B, N, D = x.shape
    hd = D // heads
    scale = float(hd) ** -0.5
    itemsize = x.dtype.itemsize

    flops = int(B * (2 * N * D * (3 * D)        # qkv projection
                     + 4 * N * N * D            # scores + attn@v over all heads
                     + 2 * N * D * D))          # output projection
    bytes_accessed = int((2 * B * N * D + 4 * D * D + 4 * D + 2 * D) * itemsize)
    cost = pl.CostEstimate(flops=flops,
                           transcendentals=int(B * heads * N * N),
                           bytes_accessed=bytes_accessed)

    # VMEM estimate: double-buffered x/o tiles + single-buffered resident weights
    # + f32/native intermediates (qkv, per-head tensors, scores, probs, ctx).
    need = (4 * N * D * itemsize                        # x + o, double-buffered
            + 4 * D * D * itemsize                      # W_qkv + W_out, Buffered(1)
            + 3 * N * D * 4 + 6 * N * D * itemsize      # qkv f32 + qkv/head-split native
            + 2 * heads * N * N * 4                     # scores + probs
            + 2 * N * D * 4)                            # ctx + residual accumulator

    kern = functools.partial(attn_block_kernel, heads=heads, scale=scale)
    return pl.pallas_call(
        kern,
        out_shape=jax.ShapeDtypeStruct((B, N, D), x.dtype),
        grid_spec=pltpu.PrefetchScalarGridSpec(
            num_scalar_prefetch=0,
            grid=(B,),
            in_specs=[
                pl.BlockSpec((1, N, D), lambda b: (b, 0, 0)),        # x (per batch)
                _const_spec((1, D)),                                 # ln1 gamma
                _const_spec((1, D)),                                 # ln1 beta
                _const_spec((D, 3 * D), buffered=True),              # W_qkv (resident, 1-buf)
                _const_spec((1, 3 * D)),                             # b_qkv
                _const_spec((D, D), buffered=True),                  # W_out (resident, 1-buf)
                _const_spec((1, D)),                                 # b_out
            ],
            out_specs=pl.BlockSpec((1, N, D), lambda b: (b, 0, 0)),
        ),
        compiler_params=pltpu.CompilerParams(
            dimension_semantics=("parallel",),
            vmem_limit_bytes=_pick_vmem_limit(need)),
        cost_estimate=cost,
    )(x, g1, be1, wqkv, bqkv, wo, bo)


# --------------------------------------------------------------------------
# Kernel 2: x + FFN(LayerNorm2(x)), tiled over flattened rows.
# --------------------------------------------------------------------------
def ffn_block_kernel(x_ref, g2_ref, be2_ref, w1_ref, b1_ref, w2_ref, b2_ref, o_ref):
    x = x_ref[...]                                 # (tm, D), native dtype
    xf = x.astype(jnp.float32)
    xn = _layernorm_f32(xf,
                        g2_ref[...].astype(jnp.float32),
                        be2_ref[...].astype(jnp.float32)).astype(x.dtype)

    h = jnp.dot(xn, w1_ref[...], preferred_element_type=jnp.float32)
    h = jnp.maximum(h + b1_ref[...].astype(jnp.float32), 0.0)        # f32 epilogue
    h = h.astype(x.dtype)

    y = jnp.dot(h, w2_ref[...], preferred_element_type=jnp.float32)
    y = y + b2_ref[...].astype(jnp.float32)

    o_ref[...] = (xf + y).astype(o_ref.dtype)      # residual, single downcast


def _ffn_call(x2d, g2, be2, w1, b1, w2, b2, *, tm):
    M, D = x2d.shape
    H = w1.shape[1]
    itemsize = x2d.dtype.itemsize

    cost = pl.CostEstimate(
        flops=int(4 * M * D * H),
        transcendentals=0,
        bytes_accessed=int((2 * M * D + 2 * D * H + D + H + 2 * D) * itemsize))

    # Double-buffered x/o row tiles + single-buffered resident weights + f32 intermediates.
    need = (4 * tm * D * itemsize
            + 2 * D * H * itemsize
            + 4 * tm * (H + 2 * D))

    return pl.pallas_call(
        ffn_block_kernel,
        out_shape=jax.ShapeDtypeStruct((M, D), x2d.dtype),
        grid_spec=pltpu.PrefetchScalarGridSpec(
            num_scalar_prefetch=0,
            grid=(M // tm,),
            in_specs=[
                pl.BlockSpec((tm, D), lambda i: (i, 0)),             # x rows
                _const_spec((1, D)),                                 # ln2 gamma
                _const_spec((1, D)),                                 # ln2 beta
                _const_spec((D, H), buffered=True),                  # W1 (resident, 1-buf)
                _const_spec((1, H)),                                 # b1
                _const_spec((H, D), buffered=True),                  # W2 (resident, 1-buf)
                _const_spec((1, D)),                                 # b2
            ],
            out_specs=pl.BlockSpec((tm, D), lambda i: (i, 0)),
        ),
        compiler_params=pltpu.CompilerParams(
            dimension_semantics=("parallel",),
            vmem_limit_bytes=_pick_vmem_limit(need)),
        cost_estimate=cost,
    )(x2d, g2, be2, w1, b1, w2, b2)


# --------------------------------------------------------------------------
# Full TransformerBlock forward.
# --------------------------------------------------------------------------
@functools.partial(jax.jit, static_argnames=("heads", "tm"))
def transformer_block(x, params, *, heads, tm=256):
    """x: (B, N, D) -> (B, N, D); matches the PyTorch TransformerBlock.forward."""
    (g1, be1, wqkv, bqkv, wo, bo, g2, be2, w1, b1, w2, b2) = params
    B, N, D = x.shape
    if D % heads != 0:
        raise ValueError(f"heads={heads} must divide dim={D}")

    # x = x + attn(norm1(x))
    h1 = _attention_call(x, g1, be1, wqkv, bqkv, wo, bo, heads=heads)

    # x = x + ff(norm2(x)), tiled over flattened rows.
    M = B * N
    tm_eff, pad = _choose_row_tile(M, tm, min_steps=2)
    x2d = h1.reshape(M, D)
    if pad:  # fallback only; the divisor search avoids this for the test config
        x2d = jnp.pad(x2d, ((0, pad), (0, 0)))
    out2d = _ffn_call(x2d, g2, be2, w1, b1, w2, b2, tm=tm_eff)
    if pad:
        out2d = out2d[:M]
    return out2d.reshape(B, N, D)


# --------------------------------------------------------------------------
# Parameter init mimicking PyTorch defaults (Linear: U(±1/sqrt(fan_in)); LN: ones/zeros).
# Linear weights stored as (in_features, out_features) = transpose of torch layout.
# --------------------------------------------------------------------------
def init_transformer_block_params(key, dim, heads, hidden_dim, dtype=jnp.float32):
    ks = jax.random.split(key, 8)

    def linear(kw, kb, fan_in, fan_out):
        bound = 1.0 / math.sqrt(fan_in)
        w = jax.random.uniform(kw, (fan_in, fan_out), dtype, -bound, bound)
        b = jax.random.uniform(kb, (1, fan_out), dtype, -bound, bound)
        return w, b

    wqkv, bqkv = linear(ks[0], ks[1], dim, 3 * dim)
    wo, bo = linear(ks[2], ks[3], dim, dim)
    w1, b1 = linear(ks[4], ks[5], dim, hidden_dim)
    w2, b2 = linear(ks[6], ks[7], hidden_dim, dim)
    g1 = jnp.ones((1, dim), dtype)
    be1 = jnp.zeros((1, dim), dtype)
    g2 = jnp.ones((1, dim), dtype)
    be2 = jnp.zeros((1, dim), dtype)
    return (g1, be1, wqkv, bqkv, wo, bo, g2, be2, w1, b1, w2, b2)


# --------------------------------------------------------------------------
# Pure-JAX reference (same math as the PyTorch module).
# --------------------------------------------------------------------------
def transformer_block_ref(x, params, heads):
    (g1, be1, wqkv, bqkv, wo, bo, g2, be2, w1, b1, w2, b2) = params
    hp = jax.lax.Precision.HIGHEST

    def ln(z, g, b):
        zf = z.astype(jnp.float32)
        m = zf.mean(-1, keepdims=True)
        v = ((zf - m) ** 2).mean(-1, keepdims=True)
        return (zf - m) * jax.lax.rsqrt(v + LN_EPS) * g + b

    def mm(a, b):
        return jnp.dot(a, b, precision=hp)

    B, N, D = x.shape
    hd = D // heads

    xn = ln(x, g1, be1)
    qkv = mm(xn, wqkv) + bqkv
    q, k, v = jnp.split(qkv, 3, axis=-1)
    q = q.reshape(B, N, heads, hd).transpose(0, 2, 1, 3)
    k = k.reshape(B, N, heads, hd).transpose(0, 2, 1, 3)
    v = v.reshape(B, N, heads, hd).transpose(0, 2, 1, 3)
    scores = jnp.einsum("bhqd,bhkd->bhqk", q, k, precision=hp) * (hd ** -0.5)
    attn = jax.nn.softmax(scores, axis=-1)
    ctx = jnp.einsum("bhqk,bhkd->bhqd", attn, v, precision=hp)
    ctx = ctx.transpose(0, 2, 1, 3).reshape(B, N, D)
    x1 = x + mm(ctx, wo) + bo

    xn2 = ln(x1, g2, be2)
    h = jnp.maximum(mm(xn2, w1) + b1, 0.0)
    return x1 + mm(h, w2) + b2


if __name__ == "__main__":
    key = jax.random.PRNGKey(0)
    k_x, k_p = jax.random.split(key)

    # Lane-dense sizes: dim and hidden multiples of 128; M = B*N = 256 -> FFN tile 128, grid 2.
    batch, seq, dim, heads, hidden_dim = 2, 128, 128, 4, 256
    x = jax.random.normal(k_x, (batch, seq, dim), jnp.float32)
    params = init_transformer_block_params(k_p, dim, heads, hidden_dim)

    y = transformer_block(x, params, heads=heads, tm=256)
    y = jax.block_until_ready(y)

    ref = transformer_block_ref(x, params, heads)
    assert y.shape == x.shape
    max_err = float(jnp.max(jnp.abs(y - ref)))
    assert jnp.allclose(y, ref, atol=2e-2, rtol=2e-2), max_err

    print("KERNEL_OK")
</pallas_src>

<mosaic_0001>
module attributes {stable_mosaic.version = 11 : i64} {
  func.func @ffn_block_kernel(%arg0: i32, %arg1: memref<128x128xf32, #tpu.memory_space<vmem>>, %arg2: memref<1x128xf32, #tpu.memory_space<vmem>>, %arg3: memref<1x128xf32, #tpu.memory_space<vmem>>, %arg4: memref<128x256xf32, #tpu.memory_space<vmem>>, %arg5: memref<1x256xf32, #tpu.memory_space<vmem>>, %arg6: memref<256x128xf32, #tpu.memory_space<vmem>>, %arg7: memref<1x128xf32, #tpu.memory_space<vmem>>, %arg8: memref<128x128xf32, #tpu.memory_space<vmem>>) attributes {dimension_semantics = [#tpu.dimension_semantics<parallel>], iteration_bounds = array<i64: 2>, scalar_prefetch = 0 : i64, scratch_operands = 0 : i64, tpu.core_type = #tpu.core_type<tc>, window_params = [{transform_indices = @transform_0, window_bounds = array<i64: 128, 128>}, {pipeline_mode = #tpu.pipeline_mode<synchronous>, transform_indices = @transform_1, window_bounds = array<i64: 1, 128>}, {pipeline_mode = #tpu.pipeline_mode<synchronous>, transform_indices = @transform_2, window_bounds = array<i64: 1, 128>}, {pipeline_mode = #tpu.pipeline_mode<synchronous>, transform_indices = @transform_3, window_bounds = array<i64: 128, 256>}, {pipeline_mode = #tpu.pipeline_mode<synchronous>, transform_indices = @transform_4, window_bounds = array<i64: 1, 256>}, {pipeline_mode = #tpu.pipeline_mode<synchronous>, transform_indices = @transform_5, window_bounds = array<i64: 256, 128>}, {pipeline_mode = #tpu.pipeline_mode<synchronous>, transform_indices = @transform_6, window_bounds = array<i64: 1, 128>}, {transform_indices = @transform_7, window_bounds = array<i64: 128, 128>}]} {
    %c0 = arith.constant 0 : index
    %c0_0 = arith.constant 0 : index
    %0 = vector.load %arg1[%c0, %c0_0] : memref<128x128xf32, #tpu.memory_space<vmem>>, vector<128x128xf32>
    %c0_1 = arith.constant 0 : index
    %c0_2 = arith.constant 0 : index
    %1 = vector.load %arg2[%c0_1, %c0_2] : memref<1x128xf32, #tpu.memory_space<vmem>>, vector<1x128xf32>
    %c0_3 = arith.constant 0 : index
    %c0_4 = arith.constant 0 : index
    %2 = vector.load %arg3[%c0_3, %c0_4] : memref<1x128xf32, #tpu.memory_space<vmem>>, vector<1x128xf32>
    %cst = arith.constant dense<0.000000e+00> : vector<128xf32>
    %3 = vector.multi_reduction <add>, %0, %cst [1] : vector<128x128xf32> to vector<128xf32>
    %4 = vector.shape_cast %3 : vector<128xf32> to vector<128x1xf32>
    %cst_5 = arith.constant 1.280000e+02 : f32
    %5 = vector.broadcast %cst_5 : f32 to vector<128x1xf32>
    %6 = arith.divf %4, %5 : vector<128x1xf32>
    %7 = vector.broadcast %6 : vector<128x1xf32> to vector<128x128xf32>
    %8 = arith.subf %0, %7 : vector<128x128xf32>
    %9 = arith.mulf %8, %8 : vector<128x128xf32>
    %cst_6 = arith.constant dense<0.000000e+00> : vector<128xf32>
    %10 = vector.multi_reduction <add>, %9, %cst_6 [1] : vector<128x128xf32> to vector<128xf32>
    %11 = vector.shape_cast %10 : vector<128xf32> to vector<128x1xf32>
    %cst_7 = arith.constant 1.280000e+02 : f32
    %12 = vector.broadcast %cst_7 : f32 to vector<128x1xf32>
    %13 = arith.divf %11, %12 : vector<128x1xf32>
    %14 = vector.broadcast %6 : vector<128x1xf32> to vector<128x128xf32>
    %15 = arith.subf %0, %14 : vector<128x128xf32>
    %cst_8 = arith.constant 9.99999974E-6 : f32
    %16 = vector.broadcast %cst_8 : f32 to vector<128x1xf32>
    %17 = arith.addf %13, %16 : vector<128x1xf32>
    %18 = math.rsqrt %17 : vector<128x1xf32>
    %19 = vector.broadcast %18 : vector<128x1xf32> to vector<128x128xf32>
    %20 = arith.mulf %15, %19 : vector<128x128xf32>
    %21 = vector.broadcast %1 : vector<1x128xf32> to vector<128x128xf32>
    %22 = arith.mulf %20, %21 : vector<128x128xf32>
    %23 = vector.broadcast %2 : vector<1x128xf32> to vector<128x128xf32>
    %24 = arith.addf %22, %23 : vector<128x128xf32>
    %c0_9 = arith.constant 0 : index
    %c0_10 = arith.constant 0 : index
    %25 = vector.load %arg4[%c0_9, %c0_10] : memref<128x256xf32, #tpu.memory_space<vmem>>, vector<128x256xf32>
    %cst_11 = arith.constant dense<0.000000e+00> : vector<128x256xf32>
    %26 = tpu.matmul %24, %25, %cst_11 {dimension_numbers = #tpu.dot_dimension_numbers<[1], [0], [0], [1], [0, 0, 1, 1], [], []>} : vector<128x128xf32>, vector<128x256xf32>, vector<128x256xf32> -> vector<128x256xf32>
    %c0_12 = arith.constant 0 : index
    %c0_13 = arith.constant 0 : index
    %27 = vector.load %arg5[%c0_12, %c0_13] : memref<1x256xf32, #tpu.memory_space<vmem>>, vector<1x256xf32>
    %28 = vector.broadcast %27 : vector<1x256xf32> to vector<128x256xf32>
    %29 = arith.addf %26, %28 : vector<128x256xf32>
    %cst_14 = arith.constant 0.000000e+00 : f32
    %30 = vector.broadcast %cst_14 : f32 to vector<128x256xf32>
    %31 = arith.maximumf %29, %30 : vector<128x256xf32>
    %c0_15 = arith.constant 0 : index
    %c0_16 = arith.constant 0 : index
    %32 = vector.load %arg6[%c0_15, %c0_16] : memref<256x128xf32, #tpu.memory_space<vmem>>, vector<256x128xf32>
    %cst_17 = arith.constant dense<0.000000e+00> : vector<128x128xf32>
    %33 = tpu.matmul %31, %32, %cst_17 {dimension_numbers = #tpu.dot_dimension_numbers<[1], [0], [0], [1], [0, 0, 1, 1], [], []>} : vector<128x256xf32>, vector<256x128xf32>, vector<128x128xf32> -> vector<128x128xf32>
    %c0_18 = arith.constant 0 : index
    %c0_19 = arith.constant 0 : index
    %34 = vector.load %arg7[%c0_18, %c0_19] : memref<1x128xf32, #tpu.memory_space<vmem>>, vector<1x128xf32>
    %35 = vector.broadcast %34 : vector<1x128xf32> to vector<128x128xf32>
    %36 = arith.addf %33, %35 : vector<128x128xf32>
    %37 = arith.addf %0, %36 : vector<128x128xf32>
    %c0_20 = arith.constant 0 : index
    %c0_21 = arith.constant 0 : index
    %38 = vector.load %arg8[%c0_20, %c0_21] : memref<128x128xf32, #tpu.memory_space<vmem>>, vector<128x128xf32>
    tpu.vector_store %arg8[%c0_20, %c0_21], %37 {strides = array<i32>} : memref<128x128xf32, #tpu.memory_space<vmem>>, vector<128x128xf32>,
    return
  }
  func.func @transform_0(%arg0: i32) -> (i32, i32) {
    %c0_i32 = arith.constant 0 : i32
    %c0_i32_0 = arith.constant 0 : i32
    return %arg0, %c0_i32 : i32, i32
  }
  func.func @transform_1(%arg0: i32) -> (i32, i32) {
    %c0_i32 = arith.constant 0 : i32
    %c0_i32_0 = arith.constant 0 : i32
    %c0_i32_1 = arith.constant 0 : i32
    return %c0_i32, %c0_i32_0 : i32, i32
  }
  func.func @transform_2(%arg0: i32) -> (i32, i32) {
    %c0_i32 = arith.constant 0 : i32
    %c0_i32_0 = arith.constant 0 : i32
    %c0_i32_1 = arith.constant 0 : i32
    return %c0_i32, %c0_i32_0 : i32, i32
  }
  func.func @transform_3(%arg0: i32) -> (i32, i32) {
    %c0_i32 = arith.constant 0 : i32
    %c0_i32_0 = arith.constant 0 : i32
    %c0_i32_1 = arith.constant 0 : i32
    return %c0_i32, %c0_i32_0 : i32, i32
  }
  func.func @transform_4(%arg0: i32) -> (i32, i32) {
    %c0_i32 = arith.constant 0 : i32
    %c0_i32_0 = arith.constant 0 : i32
    %c0_i32_1 = arith.constant 0 : i32
    return %c0_i32, %c0_i32_0 : i32, i32
  }
  func.func @transform_5(%arg0: i32) -> (i32, i32) {
    %c0_i32 = arith.constant 0 : i32
    %c0_i32_0 = arith.constant 0 : i32
    %c0_i32_1 = arith.constant 0 : i32
    return %c0_i32, %c0_i32_0 : i32, i32
  }
  func.func @transform_6(%arg0: i32) -> (i32, i32) {
    %c0_i32 = arith.constant 0 : i32
    %c0_i32_0 = arith.constant 0 : i32
    %c0_i32_1 = arith.constant 0 : i32
    return %c0_i32, %c0_i32_0 : i32, i32
  }
  func.func @transform_7(%arg0: i32) -> (i32, i32) {
    %c0_i32 = arith.constant 0 : i32
    %c0_i32_0 = arith.constant 0 : i32
    return %arg0, %c0_i32 : i32, i32
  }
}

module attributes {stable_mosaic.version = 11 : i64} {
  func.func @attn_block_kernel(%arg0: i32, %arg1: memref<1x128x128xf32, #tpu.memory_space<vmem>>, %arg2: memref<1x128xf32, #tpu.memory_space<vmem>>, %arg3: memref<1x128xf32, #tpu.memory_space<vmem>>, %arg4: memref<128x384xf32, #tpu.memory_space<vmem>>, %arg5: memref<1x384xf32, #tpu.memory_space<vmem>>, %arg6: memref<128x128xf32, #tpu.memory_space<vmem>>, %arg7: memref<1x128xf32, #tpu.memory_space<vmem>>, %arg8: memref<1x128x128xf32, #tpu.memory_space<vmem>>) attributes {dimension_semantics = [#tpu.dimension_semantics<parallel>], iteration_bounds = array<i64: 2>, scalar_prefetch = 0 : i64, scratch_operands = 0 : i64, tpu.core_type = #tpu.core_type<tc>, window_params = [{transform_indices = @transform_0, window_bounds = array<i64: 1, 128, 128>}, {pipeline_mode = #tpu.pipeline_mode<synchronous>, transform_indices = @transform_1, window_bounds = array<i64: 1, 128>}, {pipeline_mode = #tpu.pipeline_mode<synchronous>, transform_indices = @transform_2, window_bounds = array<i64: 1, 128>}, {pipeline_mode = #tpu.pipeline_mode<synchronous>, transform_indices = @transform_3, window_bounds = array<i64: 128, 384>}, {pipeline_mode = #tpu.pipeline_mode<synchronous>, transform_indices = @transform_4, window_bounds = array<i64: 1, 384>}, {pipeline_mode = #tpu.pipeline_mode<synchronous>, transform_indices = @transform_5, window_bounds = array<i64: 128, 128>}, {pipeline_mode = #tpu.pipeline_mode<synchronous>, transform_indices = @transform_6, window_bounds = array<i64: 1, 128>}, {transform_indices = @transform_7, window_bounds = array<i64: 1, 128, 128>}]} {
    %c0 = arith.constant 0 : index
    %c0_0 = arith.constant 0 : index
    %c0_1 = arith.constant 0 : index
    %0 = vector.load %arg1[%c0, %c0_0, %c0_1] : memref<1x128x128xf32, #tpu.memory_space<vmem>>, vector<1x128x128xf32>
    %1 = vector.shape_cast %0 : vector<1x128x128xf32> to vector<128x128xf32>
    %c0_2 = arith.constant 0 : index
    %c0_3 = arith.constant 0 : index
    %2 = vector.load %arg2[%c0_2, %c0_3] : memref<1x128xf32, #tpu.memory_space<vmem>>, vector<1x128xf32>
    %c0_4 = arith.constant 0 : index
    %c0_5 = arith.constant 0 : index
    %3 = vector.load %arg3[%c0_4, %c0_5] : memref<1x128xf32, #tpu.memory_space<vmem>>, vector<1x128xf32>
    %cst = arith.constant dense<0.000000e+00> : vector<128xf32>
    %4 = vector.multi_reduction <add>, %1, %cst [1] : vector<128x128xf32> to vector<128xf32>
    %5 = vector.shape_cast %4 : vector<128xf32> to vector<128x1xf32>
    %cst_6 = arith.constant 1.280000e+02 : f32
    %6 = vector.broadcast %cst_6 : f32 to vector<128x1xf32>
    %7 = arith.divf %5, %6 : vector<128x1xf32>
    %8 = vector.broadcast %7 : vector<128x1xf32> to vector<128x128xf32>
    %9 = arith.subf %1, %8 : vector<128x128xf32>
    %10 = arith.mulf %9, %9 : vector<128x128xf32>
    %cst_7 = arith.constant dense<0.000000e+00> : vector<128xf32>
    %11 = vector.multi_reduction <add>, %10, %cst_7 [1] : vector<128x128xf32> to vector<128xf32>
    %12 = vector.shape_cast %11 : vector<128xf32> to vector<128x1xf32>
    %cst_8 = arith.constant 1.280000e+02 : f32
    %13 = vector.broadcast %cst_8 : f32 to vector<128x1xf32>
    %14 = arith.divf %12, %13 : vector<128x1xf32>
    %15 = vector.broadcast %7 : vector<128x1xf32> to vector<128x128xf32>
    %16 = arith.subf %1, %15 : vector<128x128xf32>
    %cst_9 = arith.constant 9.99999974E-6 : f32
    %17 = vector.broadcast %cst_9 : f32 to vector<128x1xf32>
    %18 = arith.addf %14, %17 : vector<128x1xf32>
    %19 = math.rsqrt %18 : vector<128x1xf32>
    %20 = vector.broadcast %19 : vector<128x1xf32> to vector<128x128xf32>
    %21 = arith.mulf %16, %20 : vector<128x128xf32>
    %22 = vector.broadcast %2 : vector<1x128xf32> to vector<128x128xf32>
    %23 = arith.mulf %21, %22 : vector<128x128xf32>
    %24 = vector.broadcast %3 : vector<1x128xf32> to vector<128x128xf32>
    %25 = arith.addf %23, %24 : vector<128x128xf32>
    %c0_10 = arith.constant 0 : index
    %c0_11 = arith.constant 0 : index
    %26 = vector.load %arg4[%c0_10, %c0_11] : memref<128x384xf32, #tpu.memory_space<vmem>>, vector<128x384xf32>
    %cst_12 = arith.constant dense<0.000000e+00> : vector<128x384xf32>
    %27 = tpu.matmul %25, %26, %cst_12 {dimension_numbers = #tpu.dot_dimension_numbers<[1], [0], [0], [1], [0, 0, 1, 1], [], []>} : vector<128x128xf32>, vector<128x384xf32>, vector<128x384xf32> -> vector<128x384xf32>
    %c0_13 = arith.constant 0 : index
    %c0_14 = arith.constant 0 : index
    %28 = vector.load %arg5[%c0_13, %c0_14] : memref<1x384xf32, #tpu.memory_space<vmem>>, vector<1x384xf32>
    %29 = vector.broadcast %28 : vector<1x384xf32> to vector<128x384xf32>
    %30 = arith.addf %27, %29 : vector<128x384xf32>
    %31 = vector.extract_strided_slice %30 {offsets = [0, 0], sizes = [128, 32], strides = [1, 1]} : vector<128x384xf32> to vector<128x32xf32>
    %32 = vector.extract_strided_slice %30 {offsets = [0, 32], sizes = [128, 32], strides = [1, 1]} : vector<128x384xf32> to vector<128x32xf32>
    %33 = vector.extract_strided_slice %30 {offsets = [0, 64], sizes = [128, 32], strides = [1, 1]} : vector<128x384xf32> to vector<128x32xf32>
    %34 = vector.extract_strided_slice %30 {offsets = [0, 96], sizes = [128, 32], strides = [1, 1]} : vector<128x384xf32> to vector<128x32xf32>
    %35 = vector.shape_cast %31 : vector<128x32xf32> to vector<1x128x32xf32>
    %36 = vector.shape_cast %32 : vector<128x32xf32> to vector<1x128x32xf32>
    %37 = vector.shape_cast %33 : vector<128x32xf32> to vector<1x128x32xf32>
    %38 = vector.shape_cast %34 : vector<128x32xf32> to vector<1x128x32xf32>
    %39 = tpu.concatenate %35, %36, %37, %38 in 0 : vector<1x128x32xf32>, vector<1x128x32xf32>, vector<1x128x32xf32>, vector<1x128x32xf32> -> vector<4x128x32xf32>
    %40 = vector.extract_strided_slice %30 {offsets = [0, 128], sizes = [128, 32], strides = [1, 1]} : vector<128x384xf32> to vector<128x32xf32>
    %41 = vector.extract_strided_slice %30 {offsets = [0, 160], sizes = [128, 32], strides = [1, 1]} : vector<128x384xf32> to vector<128x32xf32>
    %42 = vector.extract_strided_slice %30 {offsets = [0, 192], sizes = [128, 32], strides = [1, 1]} : vector<128x384xf32> to vector<128x32xf32>
    %43 = vector.extract_strided_slice %30 {offsets = [0, 224], sizes = [128, 32], strides = [1, 1]} : vector<128x384xf32> to vector<128x32xf32>
    %44 = vector.shape_cast %40 : vector<128x32xf32> to vector<1x128x32xf32>
    %45 = vector.shape_cast %41 : vector<128x32xf32> to vector<1x128x32xf32>
    %46 = vector.shape_cast %42 : vector<128x32xf32> to vector<1x128x32xf32>
    %47 = vector.shape_cast %43 : vector<128x32xf32> to vector<1x128x32xf32>
    %48 = tpu.concatenate %44, %45, %46, %47 in 0 : vector<1x128x32xf32>, vector<1x128x32xf32>, vector<1x128x32xf32>, vector<1x128x32xf32> -> vector<4x128x32xf32>
    %49 = vector.extract_strided_slice %30 {offsets = [0, 256], sizes = [128, 32], strides = [1, 1]} : vector<128x384xf32> to vector<128x32xf32>
    %50 = vector.extract_strided_slice %30 {offsets = [0, 288], sizes = [128, 32], strides = [1, 1]} : vector<128x384xf32> to vector<128x32xf32>
    %51 = vector.extract_strided_slice %30 {offsets = [0, 320], sizes = [128, 32], strides = [1, 1]} : vector<128x384xf32> to vector<128x32xf32>
    %52 = vector.extract_strided_slice %30 {offsets = [0, 352], sizes = [128, 32], strides = [1, 1]} : vector<128x384xf32> to vector<128x32xf32>
    %53 = vector.shape_cast %49 : vector<128x32xf32> to vector<1x128x32xf32>
    %54 = vector.shape_cast %50 : vector<128x32xf32> to vector<1x128x32xf32>
    %55 = vector.shape_cast %51 : vector<128x32xf32> to vector<1x128x32xf32>
    %56 = vector.shape_cast %52 : vector<128x32xf32> to vector<1x128x32xf32>
    %57 = tpu.concatenate %53, %54, %55, %56 in 0 : vector<1x128x32xf32>, vector<1x128x32xf32>, vector<1x128x32xf32>, vector<1x128x32xf32> -> vector<4x128x32xf32>
    %cst_15 = arith.constant 0.176776692 : f32
    %58 = vector.broadcast %cst_15 : f32 to vector<4x128x32xf32>
    %59 = arith.mulf %39, %58 : vector<4x128x32xf32>
    "tpu.trace_start"() <{level = 10 : i32, message = "hqd,hkd->hqk"}> : () -> ()
    %cst_16 = arith.constant dense<0.000000e+00> : vector<4x128x128xf32>
    %60 = tpu.matmul %59, %48, %cst_16 {dimension_numbers = #tpu.dot_dimension_numbers<[2], [2], [1], [1], [0, 0, 0, 1, 1, 1], [0], [0]>} : vector<4x128x32xf32>, vector<4x128x32xf32>, vector<4x128x128xf32> -> vector<4x128x128xf32>
    "tpu.trace_stop"() : () -> ()
    %cst_17 = arith.constant dense<0xFF800000> : vector<4x128xf32>
    %61 = vector.multi_reduction <maximumf>, %60, %cst_17 [2] : vector<4x128x128xf32> to vector<4x128xf32>
    %62 = vector.shape_cast %61 : vector<4x128xf32> to vector<4x128x1xf32>
    %63 = vector.broadcast %62 : vector<4x128x1xf32> to vector<4x128x128xf32>
    %64 = arith.subf %60, %63 : vector<4x128x128xf32>
    %65 = math.exp %64 : vector<4x128x128xf32>
    %cst_18 = arith.constant dense<0.000000e+00> : vector<4x128xf32>
    %66 = vector.multi_reduction <add>, %65, %cst_18 [2] : vector<4x128x128xf32> to vector<4x128xf32>
    %67 = vector.shape_cast %66 : vector<4x128xf32> to vector<4x128x1xf32>
    %68 = tpu.reciprocal %67 {approx = true} : vector<4x128x1xf32> -> vector<4x128x1xf32>
    %69 = vector.broadcast %68 : vector<4x128x1xf32> to vector<4x128x128xf32>
    %70 = arith.mulf %65, %69 : vector<4x128x128xf32>
    "tpu.trace_start"() <{level = 10 : i32, message = "hqk,hkd->hqd"}> : () -> ()
    %cst_19 = arith.constant dense<0.000000e+00> : vector<4x128x32xf32>
    %71 = tpu.matmul %70, %57, %cst_19 {dimension_numbers = #tpu.dot_dimension_numbers<[2], [1], [1], [2], [0, 0, 0, 1, 1, 2], [0], [0]>} : vector<4x128x128xf32>, vector<4x128x32xf32>, vector<4x128x32xf32> -> vector<4x128x32xf32>
    "tpu.trace_stop"() : () -> ()
    %72 = vector.extract_strided_slice %71 {offsets = [0, 0, 0], sizes = [1, 128, 32], strides = [1, 1, 1]} : vector<4x128x32xf32> to vector<1x128x32xf32>
    %73 = vector.shape_cast %72 : vector<1x128x32xf32> to vector<128x32xf32>
    %74 = vector.extract_strided_slice %71 {offsets = [1, 0, 0], sizes = [1, 128, 32], strides = [1, 1, 1]} : vector<4x128x32xf32> to vector<1x128x32xf32>
    %75 = vector.shape_cast %74 : vector<1x128x32xf32> to vector<128x32xf32>
    %76 = vector.extract_strided_slice %71 {offsets = [2, 0, 0], sizes = [1, 128, 32], strides = [1, 1, 1]} : vector<4x128x32xf32> to vector<1x128x32xf32>
    %77 = vector.shape_cast %76 : vector<1x128x32xf32> to vector<128x32xf32>
    %78 = vector.extract_strided_slice %71 {offsets = [3, 0, 0], sizes = [1, 128, 32], strides = [1, 1, 1]} : vector<4x128x32xf32> to vector<1x128x32xf32>
    %79 = vector.shape_cast %78 : vector<1x128x32xf32> to vector<128x32xf32>
    %80 = tpu.concatenate %73, %75, %77, %79 in 1 : vector<128x32xf32>, vector<128x32xf32>, vector<128x32xf32>, vector<128x32xf32> -> vector<128x128xf32>
    %c0_20 = arith.constant 0 : index
    %c0_21 = arith.constant 0 : index
    %81 = vector.load %arg6[%c0_20, %c0_21] : memref<128x128xf32, #tpu.memory_space<vmem>>, vector<128x128xf32>
    %cst_22 = arith.constant dense<0.000000e+00> : vector<128x128xf32>
    %82 = tpu.matmul %80, %81, %cst_22 {dimension_numbers = #tpu.dot_dimension_numbers<[1], [0], [0], [1], [0, 0, 1, 1], [], []>} : vector<128x128xf32>, vector<128x128xf32>, vector<128x128xf32> -> vector<128x128xf32>
    %c0_23 = arith.constant 0 : index
    %c0_24 = arith.constant 0 : index
    %83 = vector.load %arg7[%c0_23, %c0_24] : memref<1x128xf32, #tpu.memory_space<vmem>>, vector<1x128xf32>
    %84 = vector.broadcast %83 : vector<1x128xf32> to vector<128x128xf32>
    %85 = arith.addf %82, %84 : vector<128x128xf32>
    %86 = arith.addf %1, %85 : vector<128x128xf32>
    %c0_25 = arith.constant 0 : index
    %c0_26 = arith.constant 0 : index
    %c0_27 = arith.constant 0 : index
    %87 = vector.load %arg8[%c0_25, %c0_26, %c0_27] : memref<1x128x128xf32, #tpu.memory_space<vmem>>, vector<1x128x128xf32>
    %88 = vector.shape_cast %87 : vector<1x128x128xf32> to vector<128x128xf32>
    %89 = vector.shape_cast %86 : vector<128x128xf32> to vector<1x128x128xf32>
    tpu.vector_store %arg8[%c0_25, %c0_26, %c0_27], %89 {strides = array<i32>} : memref<1x128x128xf32, #tpu.memory_space<vmem>>, vector<1x128x128xf32>,
    return
  }
  func.func @transform_0(%arg0: i32) -> (i32, i32, i32) {
    %c0_i32 = arith.constant 0 : i32
    %c0_i32_0 = arith.constant 0 : i32
    %c0_i32_1 = arith.constant 0 : i32
    return %arg0, %c0_i32, %c0_i32_0 : i32, i32, i32
  }
  func.func @transform_1(%arg0: i32) -> (i32, i32) {
    %c0_i32 = arith.constant 0 : i32
    %c0_i32_0 = arith.constant 0 : i32
    %c0_i32_1 = arith.constant 0 : i32
    return %c0_i32, %c0_i32_0 : i32, i32
  }
  func.func @transform_2(%arg0: i32) -> (i32, i32) {
    %c0_i32 = arith.constant 0 : i32
    %c0_i32_0 = arith.constant 0 : i32
    %c0_i32_1 = arith.constant 0 : i32
    return %c0_i32, %c0_i32_0 : i32, i32
  }
  func.func @transform_3(%arg0: i32) -> (i32, i32) {
    %c0_i32 = arith.constant 0 : i32
    %c0_i32_0 = arith.constant 0 : i32
    %c0_i32_1 = arith.constant 0 : i32
    return %c0_i32, %c0_i32_0 : i32, i32
  }
  func.func @transform_4(%arg0: i32) -> (i32, i32) {
    %c0_i32 = arith.constant 0 : i32
    %c0_i32_0 = arith.constant 0 : i32
    %c0_i32_1 = arith.constant 0 : i32
    return %c0_i32, %c0_i32_0 : i32, i32
  }
  func.func @transform_5(%arg0: i32) -> (i32, i32) {
    %c0_i32 = arith.constant 0 : i32
    %c0_i32_0 = arith.constant 0 : i32
    %c0_i32_1 = arith.constant 0 : i32
    return %c0_i32, %c0_i32_0 : i32, i32
  }
  func.func @transform_6(%arg0: i32) -> (i32, i32) {
    %c0_i32 = arith.constant 0 : i32
    %c0_i32_0 = arith.constant 0 : i32
    %c0_i32_1 = arith.constant 0 : i32
    return %c0_i32, %c0_i32_0 : i32, i32
  }
  func.func @transform_7(%arg0: i32) -> (i32, i32, i32) {
    %c0_i32 = arith.constant 0 : i32
    %c0_i32_0 = arith.constant 0 : i32
    %c0_i32_1 = arith.constant 0 : i32
    return %arg0, %c0_i32, %c0_i32_0 : i32, i32, i32
  }
}

</mosaic_0001>

<llo_original>
// kernel: transformer_block.3
$region0: #{transformer_block.3}
  #allocation0 [shape = 'u32[]', space=smem, size = 0x4, offset = 0x4, fixed_abs, tag = 'smem constant byte address 0x4 - core index']
  #allocation1 [shape = 'u32[72,128]{1,0:T(1,128)}', space=vmem, size = 0x9000, scoped, tag = 'internal scratch']
  %s0 = inlined_call_operand.vmem [shape: f32[256,128], index: 0, kind: input, shape index: {}]
  %s1 = inlined_call_operand.vmem [shape: f32[1,128], index: 1, kind: input, shape index: {}]
  %s2 = inlined_call_operand.vmem [shape: f32[1,128], index: 2, kind: input, shape index: {}]
  %s3 = inlined_call_operand.vmem [shape: f32[128,256], index: 3, kind: input, shape index: {}]
  %s4 = inlined_call_operand.vmem [shape: f32[1,256], index: 4, kind: input, shape index: {}]
  %s5 = inlined_call_operand.vmem [shape: f32[256,128], index: 5, kind: input, shape index: {}]
  %s6 = inlined_call_operand.vmem [shape: f32[1,128], index: 6, kind: input, shape index: {}]
  %s7 = inlined_call_operand.hbm [shape: f32[256,128], index: 7, kind: output, shape index: {}]
  %s8 = sld [smem:[#allocation0]]
  $region61: #{transformer_block.3} parent=0
    _
  %s10 = ssub.s32 1, %s8
  %s11 = scalar_select 0, %s10, %s8
  $region1: #{transformer_block.3} parent=0
    #allocation2 [shape = 'u8[131072]{0}', space=vmem, size = 0x20000, scoped, tag = 'output window, operand 0']
    #allocation3 [shape = 's32[2]{0}', space=sflag, size = 0x8, scoped, tag = 'scoped memory for transformer_block.3']
    %12 = vsyncpa [#allocation3], 0
    %s13 = scalar_lea.sflag [#allocation3], 1
    %14 = vsyncpa %s13, 0
    loop: start=0, step=1, limit=4
    $region2: #{transformer_block.3} parent=1 // loop_pre_header
      _
    $region3: #{transformer_block.3} parent=1 // loop_header
      %s16 = sphi 0, %s20
      %p17 = scmp.ge.s32.totalorder %s16, 4
      %s26 = sphi 0, %s28
      %s29 = sphi 0, %s26
      %s30 = sphi 0, %s29
      %s46 = sphi 0, %s30
      %s50 = sphi 0, %s50
      %s52 = sphi 0, %s50
      %s53 = sphi 0, %s52
      %s67 = sphi 0, %s53
      %s71 = sphi 0, %s71
      %s73 = sphi 0, %s71
      %s74 = sphi 0, %s73
      %s88 = sphi 0, %s74
      %s92 = sphi 0, %s92
      %s94 = sphi 0, %s92
      %s95 = sphi 0, %s94
      %s109 = sphi 0, %s95
      %s113 = sphi 0, %s113
      %s115 = sphi 0, %s113
      %s116 = sphi 0, %s115
      %s130 = sphi 0, %s116
      %s134 = sphi 0, %s134
      %s136 = sphi 0, %s134
      %s137 = sphi 0, %s136
      %s151 = sphi 0, %s137
      %s155 = sphi 0, %s155
      %s157 = sphi 0, %s155
      %s158 = sphi 0, %s157
      %s172 = sphi 0, %s158
      %s178 = sphi 0, %s180
      %s181 = sphi 0, %s178
      %s182 = sphi 0, %s181
      %s198 = sphi 0, %s182
    $region4: #{transformer_block.3} parent=1 // loop_header_branch
      %19 = sbr.rel (%p17) target = $region8
    $region5: #{transformer_block.3} parent=1 // loop_body
      %s21 = ssub.s32 %s16, 1
      %s22 = ssub.s32 %s16, 2
      %s23 = sadd.s32 %s16, 1
      %s24 = ssub.s32 %s16, %s23
      %p25 = scmp.eq.s32.totalorder %s24, 0
      %s27 = sadd.s32 %s26, 1
      %s28 = scalar_select %p25, %s26, %s27
      %p31 = pneg %p25
      %p32 = scmp.eq.s32.totalorder %s16, 1
      %p33 = por %p31, %p32
      %p34 = scmp.ne.s32.totalorder %s26, %s29
      %p35 = scmp.eq.s32.totalorder %s16, 0
      %p36 = por %p34, %p35
      %p37 = scmp.ne.s32.totalorder %s26, %s29
      %p38 = scmp.eq.s32.totalorder %s21, 1
      %p39 = por %p37, %p38
      %p40 = scmp.ne.s32.totalorder %s29, %s30
      %p41 = scmp.eq.s32.totalorder %s21, 0
      %p42 = por %p40, %p41
      %p43 = scmp.ne.s32.totalorder %s29, %s30
      %p44 = scmp.eq.s32.totalorder %s22, 1
      %p45 = por %p43, %p44
      %p47 = scmp.ne.s32.totalorder %s30, %s46
      %p48 = scmp.eq.s32.totalorder %s22, 0
      %p49 = por %p47, %p48
      %s51 = sadd.s32 %s50, 1
      %p54 = scmp.eq.s32.totalorder %s16, 1
      %p55 = scmp.ne.s32.totalorder %s50, %s52
      %p56 = scmp.eq.s32.totalorder %s16, 0
      %p57 = por %p55, %p56
      %p58 = scmp.ne.s32.totalorder %s50, %s52
      %p59 = scmp.eq.s32.totalorder %s21, 1
      %p60 = por %p58, %p59
      %p61 = scmp.ne.s32.totalorder %s52, %s53
      %p62 = scmp.eq.s32.totalorder %s21, 0
      %p63 = por %p61, %p62
      %p64 = scmp.ne.s32.totalorder %s52, %s53
      %p65 = scmp.eq.s32.totalorder %s22, 1
      %p66 = por %p64, %p65
      %p68 = scmp.ne.s32.totalorder %s53, %s67
      %p69 = scmp.eq.s32.totalorder %s22, 0
      %p70 = por %p68, %p69
      %s72 = sadd.s32 %s71, 1
      %p75 = scmp.eq.s32.totalorder %s16, 1
      %p76 = scmp.ne.s32.totalorder %s71, %s73
      %p77 = scmp.eq.s32.totalorder %s16, 0
      %p78 = por %p76, %p77
      %p79 = scmp.ne.s32.totalorder %s71, %s73
      %p80 = scmp.eq.s32.totalorder %s21, 1
      %p81 = por %p79, %p80
      %p82 = scmp.ne.s32.totalorder %s73, %s74
      %p83 = scmp.eq.s32.totalorder %s21, 0
      %p84 = por %p82, %p83
      %p85 = scmp.ne.s32.totalorder %s73, %s74
      %p86 = scmp.eq.s32.totalorder %s22, 1
      %p87 = por %p85, %p86
      %p89 = scmp.ne.s32.totalorder %s74, %s88
      %p90 = scmp.eq.s32.totalorder %s22, 0
      %p91 = por %p89, %p90
      %s93 = sadd.s32 %s92, 1
      %p96 = scmp.eq.s32.totalorder %s16, 1
      %p97 = scmp.ne.s32.totalorder %s92, %s94
      %p98 = scmp.eq.s32.totalorder %s16, 0
      %p99 = por %p97, %p98
      %p100 = scmp.ne.s32.totalorder %s92, %s94
      %p101 = scmp.eq.s32.totalorder %s21, 1
      %p102 = por %p100, %p101
      %p103 = scmp.ne.s32.totalorder %s94, %s95
      %p104 = scmp.eq.s32.totalorder %s21, 0
      %p105 = por %p103, %p104
      %p106 = scmp.ne.s32.totalorder %s94, %s95
      %p107 = scmp.eq.s32.totalorder %s22, 1
      %p108 = por %p106, %p107
      %p110 = scmp.ne.s32.totalorder %s95, %s109
      %p111 = scmp.eq.s32.totalorder %s22, 0
      %p112 = por %p110, %p111
      %s114 = sadd.s32 %s113, 1
      %p117 = scmp.eq.s32.totalorder %s16, 1
      %p118 = scmp.ne.s32.totalorder %s113, %s115
      %p119 = scmp.eq.s32.totalorder %s16, 0
      %p120 = por %p118, %p119
      %p121 = scmp.ne.s32.totalorder %s113, %s115
      %p122 = scmp.eq.s32.totalorder %s21, 1
      %p123 = por %p121, %p122
      %p124 = scmp.ne.s32.totalorder %s115, %s116
      %p125 = scmp.eq.s32.totalorder %s21, 0
      %p126 = por %p124, %p125
      %p127 = scmp.ne.s32.totalorder %s115, %s116
      %p128 = scmp.eq.s32.totalorder %s22, 1
      %p129 = por %p127, %p128
      %p131 = scmp.ne.s32.totalorder %s116, %s130
      %p132 = scmp.eq.s32.totalorder %s22, 0
      %p133 = por %p131, %p132
      %s135 = sadd.s32 %s134, 1
      %p138 = scmp.eq.s32.totalorder %s16, 1
      %p139 = scmp.ne.s32.totalorder %s134, %s136
      %p140 = scmp.eq.s32.totalorder %s16, 0
      %p141 = por %p139, %p140
      %p142 = scmp.ne.s32.totalorder %s134, %s136
      %p143 = scmp.eq.s32.totalorder %s21, 1
      %p144 = por %p142, %p143
      %p145 = scmp.ne.s32.totalorder %s136, %s137
      %p146 = scmp.eq.s32.totalorder %s21, 0
      %p147 = por %p145, %p146
      %p148 = scmp.ne.s32.totalorder %s136, %s137
      %p149 = scmp.eq.s32.totalorder %s22, 1
      %p150 = por %p148, %p149
      %p152 = scmp.ne.s32.totalorder %s137, %s151
      %p153 = scmp.eq.s32.totalorder %s22, 0
      %p154 = por %p152, %p153
      %s156 = sadd.s32 %s155, 1
      %p159 = scmp.eq.s32.totalorder %s16, 1
      %p160 = scmp.ne.s32.totalorder %s155, %s157
      %p161 = scmp.eq.s32.totalorder %s16, 0
      %p162 = por %p160, %p161
      %p163 = scmp.ne.s32.totalorder %s155, %s157
      %p164 = scmp.eq.s32.totalorder %s21, 1
      %p165 = por %p163, %p164
      %p166 = scmp.ne.s32.totalorder %s157, %s158
      %p167 = scmp.eq.s32.totalorder %s21, 0
      %p168 = por %p166, %p167
      %p169 = scmp.ne.s32.totalorder %s157, %s158
      %p170 = scmp.eq.s32.totalorder %s22, 1
      %p171 = por %p169, %p170
      %p173 = scmp.ne.s32.totalorder %s158, %s172
      %p174 = scmp.eq.s32.totalorder %s22, 0
      %p175 = por %p173, %p174
      %s176 = ssub.s32 %s16, %s23
      %p177 = scmp.eq.s32.totalorder %s176, 0
      %s179 = sadd.s32 %s178, 1
      %s180 = scalar_select %p177, %s178, %s179
      %p183 = pneg %p177
      %p184 = scmp.eq.s32.totalorder %s16, 1
      %p185 = por %p183, %p184
      %p186 = scmp.ne.s32.totalorder %s178, %s181
      %p187 = scmp.eq.s32.totalorder %s16, 0
      %p188 = por %p186, %p187
      %p189 = scmp.ne.s32.totalorder %s178, %s181
      %p190 = scmp.eq.s32.totalorder %s21, 1
      %p191 = por %p189, %p190
      %p192 = scmp.ne.s32.totalorder %s181, %s182
      %p193 = scmp.eq.s32.totalorder %s21, 0
      %p194 = por %p192, %p193
      %p195 = scmp.ne.s32.totalorder %s181, %s182
      %p196 = scmp.eq.s32.totalorder %s22, 1
      %p197 = por %p195, %p196
      %p199 = scmp.ne.s32.totalorder %s182, %s198
      %p200 = scmp.eq.s32.totalorder %s22, 0
      %p201 = por %p199, %p200
      %p202 = scmp.le.s32.totalorder 1, %s16
      %p203 = scmp.lt.s32.totalorder %s16, 3
      %p204 = pnand %p202, %p203
      %p205 = pneg %p204
      // Predicated region
      $region9: #{transformer_block.3} parent=5 // pred_check
        _
      $region10: #{transformer_block.3} parent=5 // pred_check_branch
        %207 = sbr.rel (%p204) target = $region12
      $region11: #{transformer_block.3} parent=5 // pred_region
        %s208 = ssub.s32 %s16, 1
        // Predicated region
        $region13: #{transformer_block.3} parent=11 // pred_check
          %p209 = pneg %p63
        $region14: #{transformer_block.3} parent=11 // pred_check_branch
          %211 = sbr.rel (%p209) target = $region16
        $region15: #{transformer_block.3} parent=11 // pred_region
          _
        $region16: #{transformer_block.3} parent=11 // pred_fallthru
          _
        // Predicated region
        $region17: #{transformer_block.3} parent=11 // pred_check
          %p212 = pneg %p84
        $region18: #{transformer_block.3} parent=11 // pred_check_branch
          %214 = sbr.rel (%p212) target = $region20
        $region19: #{transformer_block.3} parent=11 // pred_region
          _
        $region20: #{transformer_block.3} parent=11 // pred_fallthru
          _
        // Predicated region
        $region21: #{transformer_block.3} parent=11 // pred_check
          %p215 = pneg %p105
        $region22: #{transformer_block.3} parent=11 // pred_check_branch
          %217 = sbr.rel (%p215) target = $region24
        $region23: #{transformer_block.3} parent=11 // pred_region
          _
        $region24: #{transformer_block.3} parent=11 // pred_fallthru
          _
        // Predicated region
        $region25: #{transformer_block.3} parent=11 // pred_check
          %p218 = pneg %p126
        $region26: #{transformer_block.3} parent=11 // pred_check_branch
          %220 = sbr.rel (%p218) target = $region28
        $region27: #{transformer_block.3} parent=11 // pred_region
          _
        $region28: #{transformer_block.3} parent=11 // pred_fallthru
          _
        // Predicated region
        $region29: #{transformer_block.3} parent=11 // pred_check
          %p221 = pneg %p147
        $region30: #{transformer_block.3} parent=11 // pred_check_branch
          %223 = sbr.rel (%p221) target = $region32
        $region31: #{transformer_block.3} parent=11 // pred_region
          _
        $region32: #{transformer_block.3} parent=11 // pred_fallthru
          _
        // Predicated region
        $region33: #{transformer_block.3} parent=11 // pred_check
          %p224 = pneg %p168
        $region34: #{transformer_block.3} parent=11 // pred_check_branch
          %226 = sbr.rel (%p224) target = $region36
        $region35: #{transformer_block.3} parent=11 // pred_region
          _
        $region36: #{transformer_block.3} parent=11 // pred_fallthru
          _
      $region12: #{transformer_block.3} parent=5 // pred_fallthru
        _
      %p227 = scmp.lt.s32.totalorder %s16, 2
      // Predicated region
      $region37: #{transformer_block.3} parent=5 // pred_check
        %p228 = pneg %p227
      $region38: #{transformer_block.3} parent=5 // pred_check_branch
        %230 = sbr.rel (%p228) target = $region40
      $region39: #{transformer_block.3} parent=5 // pred_region
        // Predicated region
        $region41: #{transformer_block.3} parent=39 // pred_check
          %p231 = pneg %p36
        $region42: #{transformer_block.3} parent=39 // pred_check_branch
          %233 = sbr.rel (%p231) target = $region44
        $region43: #{transformer_block.3} parent=39 // pred_region
          %s234 = smul.u32 16, %s16
          %p235 = scmp.lt.s32.totalorder %s234, 31
          %s236 = scalar_select %p235, %s234, 31
          %s237 = smul.addr %s236, 8
          %s238 = scalar_lea.vmem %s0, %s237
          %s239 = smul.u32 16, %s16
        $region44: #{transformer_block.3} parent=39 // pred_fallthru
          _
      $region40: #{transformer_block.3} parent=5 // pred_fallthru
        _
      %p240 = scmp.le.s32.totalorder 1, %s16
      %p241 = scmp.lt.s32.totalorder %s16, 3
      %p242 = pnand %p240, %p241
      %p243 = pneg %p242
      // Predicated region
      $region45: #{transformer_block.3} parent=5 // pred_check
        _
      $region46: #{transformer_block.3} parent=5 // pred_check_branch
        %245 = sbr.rel (%p242) target = $region48
      $region47: #{transformer_block.3} parent=5 // pred_region
        %s246 = ssub.s32 %s16, 1
        %s247 = smul.u32 16, %s21
        %p248 = scmp.lt.s32.totalorder %s247, 31
        %s249 = scalar_select %p248, %s247, 31
        %s250 = smul.addr %s249, 8
        %s251 = scalar_lea.vmem %s0, %s250
        %p252 = pneg %p42
        %p253 = pneg %p39
        %p254 = pneg %p63
        %p255 = pneg %p60
        %p256 = pneg %p84
        %p257 = pneg %p81
        %p258 = pneg %p105
        %p259 = pneg %p102
        %p260 = pneg %p126
        %p261 = pneg %p123
        %p262 = pneg %p147
        %p263 = pneg %p144
        %p264 = pneg %p168
        %p265 = pneg %p165
        %p266 = pneg %p194
        %p267 = pneg %p191
        %s268 = sand.u32 %s181, 1
        %s269 = scalar_lea.sflag [#allocation3], %s268
        %s270 = sand.u32 %s181, 1
        %s271 = smul.addr %s270, 128
        %s272 = scalar_lea.vmem [#allocation2], %s271
        %s273 = smul.u32 16, %s21
        %p274 = scmp.lt.s32.totalorder %s273, 31
        %s275 = scalar_select %p274, %s273, 31
        %s276 = smul.addr %s275, 8
        %s277 = scalar_lea.vmem %s0, %s276
        %s278 = smul.u32 16, %s21
        %s279 = smul.u32 16, %s21
        %v280 = vld [vmem:[%s277] sm:$0xff]
        %v281 = vld [vmem:[%s277 + $0x8] sm:$0xff]
        %v282 = vld [vmem:[%s277 + $0x10] sm:$0xff]
        %v283 = vld [vmem:[%s277 + $0x18] sm:$0xff]
        %v284 = vld [vmem:[%s277 + $0x20] sm:$0xff]
        %v285 = vld [vmem:[%s277 + $0x28] sm:$0xff]
        %v286 = vld [vmem:[%s277 + $0x30] sm:$0xff]
        %v287 = vld [vmem:[%s277 + $0x38] sm:$0xff]
        %v288 = vld [vmem:[%s277 + $0x40] sm:$0xff]
        %v289 = vld [vmem:[%s277 + $0x48] sm:$0xff]
        %v290 = vld [vmem:[%s277 + $0x50] sm:$0xff]
        %v291 = vld [vmem:[%s277 + $0x58] sm:$0xff]
        %v292 = vld [vmem:[%s277 + $0x60] sm:$0xff]
        %v293 = vld [vmem:[%s277 + $0x68] sm:$0xff]
        %v294 = vld [vmem:[%s277 + $0x70] sm:$0xff]
        %v295 = vld [vmem:[%s277 + $0x78] sm:$0xff]
        %v296 = vld [vmem:[%s1] sm:$0x1]
        %v297 = vld [vmem:[%s2] sm:$0x1]
        %298 = vadd.xlane.f32.xlu0 %v280
        %v299 = vpop.xlane.xlu0 %298
        %300 = vadd.xlane.f32.xlu0 %v281
        %v301 = vpop.xlane.xlu0 %300
        %302 = vadd.xlane.f32.xlu0 %v282
        %v303 = vpop.xlane.xlu0 %302
        %304 = vadd.xlane.f32.xlu0 %v283
        %v305 = vpop.xlane.xlu0 %304
        %306 = vadd.xlane.f32.xlu0 %v284
        %v307 = vpop.xlane.xlu0 %306
        %308 = vadd.xlane.f32.xlu0 %v285
        %v309 = vpop.xlane.xlu0 %308
        %310 = vadd.xlane.f32.xlu0 %v286
        %v311 = vpop.xlane.xlu0 %310
        %312 = vadd.xlane.f32.xlu0 %v287
        %v313 = vpop.xlane.xlu0 %312
        %314 = vadd.xlane.f32.xlu0 %v288
        %v315 = vpop.xlane.xlu0 %314
        %316 = vadd.xlane.f32.xlu0 %v289
        %v317 = vpop.xlane.xlu0 %316
        %318 = vadd.xlane.f32.xlu0 %v290
        %v319 = vpop.xlane.xlu0 %318
        %320 = vadd.xlane.f32.xlu0 %v291
        %v321 = vpop.xlane.xlu0 %320
        %322 = vadd.xlane.f32.xlu0 %v292
        %v323 = vpop.xlane.xlu0 %322
        %324 = vadd.xlane.f32.xlu0 %v293
        %v325 = vpop.xlane.xlu0 %324
        %326 = vadd.xlane.f32.xlu0 %v294
        %v327 = vpop.xlane.xlu0 %326
        %328 = vadd.xlane.f32.xlu0 %v295
        %v329 = vpop.xlane.xlu0 %328
        %v330 = vrcp.pop 128.0
        %v331 = vmul.f32 128.0, %v330
        %v332 = vsub.f32 1.0, %v331
        %v333 = vmul.f32 %v330, %v332
        %v334 = vadd.f32 %v330, %v333
        %vm335 = vweird.f32 %v330
        %v336 = vsel %vm335, %v330, %v334
        %v337 = vmul.f32 %v299, %v336
        %v338 = vmul.f32 %v301, %v336
        %v339 = vmul.f32 %v303, %v336
        %v340 = vmul.f32 %v305, %v336
        %v341 = vmul.f32 %v307, %v336
        %v342 = vmul.f32 %v309, %v336
        %v343 = vmul.f32 %v311, %v336
        %v344 = vmul.f32 %v313, %v336
        %v345 = vmul.f32 %v315, %v336
        %v346 = vmul.f32 %v317, %v336
        %v347 = vmul.f32 %v319, %v336
        %v348 = vmul.f32 %v321, %v336
        %v349 = vmul.f32 %v323, %v336
        %v350 = vmul.f32 %v325, %v336
        %v351 = vmul.f32 %v327, %v336
        %v352 = vmul.f32 %v329, %v336
        %v353 = vsub.f32 %v280, %v337
        %v354 = vsub.f32 %v281, %v338
        %v355 = vsub.f32 %v282, %v339
        %v356 = vsub.f32 %v283, %v340
        %v357 = vsub.f32 %v284, %v341
        %v358 = vsub.f32 %v285, %v342
        %v359 = vsub.f32 %v286, %v343
        %v360 = vsub.f32 %v287, %v344
        %v361 = vsub.f32 %v288, %v345
        %v362 = vsub.f32 %v289, %v346
        %v363 = vsub.f32 %v290, %v347
        %v364 = vsub.f32 %v291, %v348
        %v365 = vsub.f32 %v292, %v349
        %v366 = vsub.f32 %v293, %v350
        %v367 = vsub.f32 %v294, %v351
        %v368 = vsub.f32 %v295, %v352
        %v369 = vmul.f32 %v353, %v353
        %v370 = vmul.f32 %v354, %v354
        %v371 = vmul.f32 %v355, %v355
        %v372 = vmul.f32 %v356, %v356
        %v373 = vmul.f32 %v357, %v357
        %v374 = vmul.f32 %v358, %v358
        %v375 = vmul.f32 %v359, %v359
        %v376 = vmul.f32 %v360, %v360
        %v377 = vmul.f32 %v361, %v361
        %v378 = vmul.f32 %v362, %v362
        %v379 = vmul.f32 %v363, %v363
        %v380 = vmul.f32 %v364, %v364
        %v381 = vmul.f32 %v365, %v365
        %v382 = vmul.f32 %v366, %v366
        %v383 = vmul.f32 %v367, %v367
        %v384 = vmul.f32 %v368, %v368
        %385 = vadd.xlane.f32.xlu0 %v369
        %v386 = vpop.xlane.xlu0 %385
        %387 = vadd.xlane.f32.xlu0 %v370
        %v388 = vpop.xlane.xlu0 %387
        %389 = vadd.xlane.f32.xlu0 %v371
        %v390 = vpop.xlane.xlu0 %389
        %391 = vadd.xlane.f32.xlu0 %v372
        %v392 = vpop.xlane.xlu0 %391
        %393 = vadd.xlane.f32.xlu0 %v373
        %v394 = vpop.xlane.xlu0 %393
        %395 = vadd.xlane.f32.xlu0 %v374
        %v396 = vpop.xlane.xlu0 %395
        %397 = vadd.xlane.f32.xlu0 %v375
        %v398 = vpop.xlane.xlu0 %397
        %399 = vadd.xlane.f32.xlu0 %v376
        %v400 = vpop.xlane.xlu0 %399
        %401 = vadd.xlane.f32.xlu0 %v377
        %v402 = vpop.xlane.xlu0 %401
        %403 = vadd.xlane.f32.xlu0 %v378
        %v404 = vpop.xlane.xlu0 %403
        %405 = vadd.xlane.f32.xlu0 %v379
        %v406 = vpop.xlane.xlu0 %405
        %407 = vadd.xlane.f32.xlu0 %v380
        %v408 = vpop.xlane.xlu0 %407
        %409 = vadd.xlane.f32.xlu0 %v381
        %v410 = vpop.xlane.xlu0 %409
        %411 = vadd.xlane.f32.xlu0 %v382
        %v412 = vpop.xlane.xlu0 %411
        %413 = vadd.xlane.f32.xlu0 %v383
        %v414 = vpop.xlane.xlu0 %413
        %415 = vadd.xlane.f32.xlu0 %v384
        %v416 = vpop.xlane.xlu0 %415
        %v417 = vmul.f32 %v386, %v336
        %v418 = vmul.f32 %v388, %v336
        %v419 = vmul.f32 %v390, %v336
        %v420 = vmul.f32 %v392, %v336
        %v421 = vmul.f32 %v394, %v336
        %v422 = vmul.f32 %v396, %v336
        %v423 = vmul.f32 %v398, %v336
        %v424 = vmul.f32 %v400, %v336
        %v425 = vmul.f32 %v402, %v336
        %v426 = vmul.f32 %v404, %v336
        %v427 = vmul.f32 %v406, %v336
        %v428 = vmul.f32 %v408, %v336
        %v429 = vmul.f32 %v410, %v336
        %v430 = vmul.f32 %v412, %v336
        %v431 = vmul.f32 %v414, %v336
        %v432 = vmul.f32 %v416, %v336
        %v433 = vadd.f32 %v417, 1e-05
        %v434 = vadd.f32 %v418, 1e-05
        %v435 = vadd.f32 %v419, 1e-05
        %v436 = vadd.f32 %v420, 1e-05
        %v437 = vadd.f32 %v421, 1e-05
        %v438 = vadd.f32 %v422, 1e-05
        %v439 = vadd.f32 %v423, 1e-05
        %v440 = vadd.f32 %v424, 1e-05
        %v441 = vadd.f32 %v425, 1e-05
        %v442 = vadd.f32 %v426, 1e-05
        %v443 = vadd.f32 %v427, 1e-05
        %v444 = vadd.f32 %v428, 1e-05
        %v445 = vadd.f32 %v429, 1e-05
        %v446 = vadd.f32 %v430, 1e-05
        %v447 = vadd.f32 %v431, 1e-05
        %v448 = vadd.f32 %v432, 1e-05
        %v449 = vrsqrt.pop %v433
        %v450 = vmul.f32 %v449, %v433
        %v451 = vmul.f32 %v450, %v449
        %v452 = vmul.f32 0.5, %v451
        %v453 = vsub.f32 1.5, %v452
        %v454 = vmul.f32 %v449, %v453
        %vm455 = vweird.f32 %v433
        %vm456 = vweird.f32 %v449
        %vm457 = vmor %vm455, %vm456
        %v458 = vsel %vm457, %v449, %v454
        %v459 = vrsqrt.pop %v434
        %v460 = vmul.f32 %v459, %v434
        %v461 = vmul.f32 %v460, %v459
        %v462 = vmul.f32 0.5, %v461
        %v463 = vsub.f32 1.5, %v462
        %v464 = vmul.f32 %v459, %v463
        %vm465 = vweird.f32 %v434
        %vm466 = vweird.f32 %v459
        %vm467 = vmor %vm465, %vm466
        %v468 = vsel %vm467, %v459, %v464
        %v469 = vrsqrt.pop %v435
        %v470 = vmul.f32 %v469, %v435
        %v471 = vmul.f32 %v470, %v469
        %v472 = vmul.f32 0.5, %v471
        %v473 = vsub.f32 1.5, %v472
        %v474 = vmul.f32 %v469, %v473
        %vm475 = vweird.f32 %v435
        %vm476 = vweird.f32 %v469
        %vm477 = vmor %vm475, %vm476
        %v478 = vsel %vm477, %v469, %v474
        %v479 = vrsqrt.pop %v436
        %v480 = vmul.f32 %v479, %v436
        %v481 = vmul.f32 %v480, %v479
        %v482 = vmul.f32 0.5, %v481
        %v483 = vsub.f32 1.5, %v482
        %v484 = vmul.f32 %v479, %v483
        %vm485 = vweird.f32 %v436
        %vm486 = vweird.f32 %v479
        %vm487 = vmor %vm485, %vm486
        %v488 = vsel %vm487, %v479, %v484
        %v489 = vrsqrt.pop %v437
        %v490 = vmul.f32 %v489, %v437
        %v491 = vmul.f32 %v490, %v489
        %v492 = vmul.f32 0.5, %v491
        %v493 = vsub.f32 1.5, %v492
        %v494 = vmul.f32 %v489, %v493
        %vm495 = vweird.f32 %v437
        %vm496 = vweird.f32 %v489
        %vm497 = vmor %vm495, %vm496
        %v498 = vsel %vm497, %v489, %v494
        %v499 = vrsqrt.pop %v438
        %v500 = vmul.f32 %v499, %v438
        %v501 = vmul.f32 %v500, %v499
        %v502 = vmul.f32 0.5, %v501
        %v503 = vsub.f32 1.5, %v502
        %v504 = vmul.f32 %v499, %v503
        %vm505 = vweird.f32 %v438
        %vm506 = vweird.f32 %v499
        %vm507 = vmor %vm505, %vm506
        %v508 = vsel %vm507, %v499, %v504
        %v509 = vrsqrt.pop %v439
        %v510 = vmul.f32 %v509, %v439
        %v511 = vmul.f32 %v510, %v509
        %v512 = vmul.f32 0.5, %v511
        %v513 = vsub.f32 1.5, %v512
        %v514 = vmul.f32 %v509, %v513
        %vm515 = vweird.f32 %v439
        %vm516 = vweird.f32 %v509
        %vm517 = vmor %vm515, %vm516
        %v518 = vsel %vm517, %v509, %v514
        %v519 = vrsqrt.pop %v440
        %v520 = vmul.f32 %v519, %v440
        %v521 = vmul.f32 %v520, %v519
        %v522 = vmul.f32 0.5, %v521
        %v523 = vsub.f32 1.5, %v522
        %v524 = vmul.f32 %v519, %v523
        %vm525 = vweird.f32 %v440
        %vm526 = vweird.f32 %v519
        %vm527 = vmor %vm525, %vm526
        %v528 = vsel %vm527, %v519, %v524
        %v529 = vrsqrt.pop %v441
        %v530 = vmul.f32 %v529, %v441
        %v531 = vmul.f32 %v530, %v529
        %v532 = vmul.f32 0.5, %v531
        %v533 = vsub.f32 1.5, %v532
        %v534 = vmul.f32 %v529, %v533
        %vm535 = vweird.f32 %v441
        %vm536 = vweird.f32 %v529
        %vm537 = vmor %vm535, %vm536
        %v538 = vsel %vm537, %v529, %v534
        %v539 = vrsqrt.pop %v442
        %v540 = vmul.f32 %v539, %v442
        %v541 = vmul.f32 %v540, %v539
        %v542 = vmul.f32 0.5, %v541
        %v543 = vsub.f32 1.5, %v542
        %v544 = vmul.f32 %v539, %v543
        %vm545 = vweird.f32 %v442
        %vm546 = vweird.f32 %v539
        %vm547 = vmor %vm545, %vm546
        %v548 = vsel %vm547, %v539, %v544
        %v549 = vrsqrt.pop %v443
        %v550 = vmul.f32 %v549, %v443
        %v551 = vmul.f32 %v550, %v549
        %v552 = vmul.f32 0.5, %v551
        %v553 = vsub.f32 1.5, %v552
        %v554 = vmul.f32 %v549, %v553
        %vm555 = vweird.f32 %v443
        %vm556 = vweird.f32 %v549
        %vm557 = vmor %vm555, %vm556
        %v558 = vsel %vm557, %v549, %v554
        %v559 = vrsqrt.pop %v444
        %v560 = vmul.f32 %v559, %v444
        %v561 = vmul.f32 %v560, %v559
        %v562 = vmul.f32 0.5, %v561
        %v563 = vsub.f32 1.5, %v562
        %v564 = vmul.f32 %v559, %v563
        %vm565 = vweird.f32 %v444
        %vm566 = vweird.f32 %v559
        %vm567 = vmor %vm565, %vm566
        %v568 = vsel %vm567, %v559, %v564
        %v569 = vrsqrt.pop %v445
        %v570 = vmul.f32 %v569, %v445
        %v571 = vmul.f32 %v570, %v569
        %v572 = vmul.f32 0.5, %v571
        %v573 = vsub.f32 1.5, %v572
        %v574 = vmul.f32 %v569, %v573
        %vm575 = vweird.f32 %v445
        %vm576 = vweird.f32 %v569
        %vm577 = vmor %vm575, %vm576
        %v578 = vsel %vm577, %v569, %v574
        %v579 = vrsqrt.pop %v446
        %v580 = vmul.f32 %v579, %v446
        %v581 = vmul.f32 %v580, %v579
        %v582 = vmul.f32 0.5, %v581
        %v583 = vsub.f32 1.5, %v582
        %v584 = vmul.f32 %v579, %v583
        %vm585 = vweird.f32 %v446
        %vm586 = vweird.f32 %v579
        %vm587 = vmor %vm585, %vm586
        %v588 = vsel %vm587, %v579, %v584
        %v589 = vrsqrt.pop %v447
        %v590 = vmul.f32 %v589, %v447
        %v591 = vmul.f32 %v590, %v589
        %v592 = vmul.f32 0.5, %v591
        %v593 = vsub.f32 1.5, %v592
        %v594 = vmul.f32 %v589, %v593
        %vm595 = vweird.f32 %v447
        %vm596 = vweird.f32 %v589
        %vm597 = vmor %vm595, %vm596
        %v598 = vsel %vm597, %v589, %v594
        %v599 = vrsqrt.pop %v448
        %v600 = vmul.f32 %v599, %v448
        %v601 = vmul.f32 %v600, %v599
        %v602 = vmul.f32 0.5, %v601
        %v603 = vsub.f32 1.5, %v602
        %v604 = vmul.f32 %v599, %v603
        %vm605 = vweird.f32 %v448
        %vm606 = vweird.f32 %v599
        %vm607 = vmor %vm605, %vm606
        %v608 = vsel %vm607, %v599, %v604
        %v609 = vmul.f32 %v353, %v458
        %v610 = vmul.f32 %v354, %v468
        %v611 = vmul.f32 %v355, %v478
        %v612 = vmul.f32 %v356, %v488
        %v613 = vmul.f32 %v357, %v498
        %v614 = vmul.f32 %v358, %v508
        %v615 = vmul.f32 %v359, %v518
        %v616 = vmul.f32 %v360, %v528
        %v617 = vmul.f32 %v361, %v538
        %v618 = vmul.f32 %v362, %v548
        %v619 = vmul.f32 %v363, %v558
        %v620 = vmul.f32 %v364, %v568
        %v621 = vmul.f32 %v365, %v578
        %v622 = vmul.f32 %v366, %v588
        %v623 = vmul.f32 %v367, %v598
        %v624 = vmul.f32 %v368, %v608
        %v626 = vperm.slane %v296, 0
        %v628 = vmul.f32 %v609, %v626
        %v629 = vmul.f32 %v610, %v626
        %v630 = vmul.f32 %v611, %v626
        %v631 = vmul.f32 %v612, %v626
        %v632 = vmul.f32 %v613, %v626
        %v633 = vmul.f32 %v614, %v626
        %v634 = vmul.f32 %v615, %v626
        %v635 = vmul.f32 %v616, %v626
        %v636 = vmul.f32 %v617, %v626
        %v637 = vmul.f32 %v618, %v626
        %v638 = vmul.f32 %v619, %v626
        %v639 = vmul.f32 %v620, %v626
        %v640 = vmul.f32 %v621, %v626
        %v641 = vmul.f32 %v622, %v626
        %v642 = vmul.f32 %v623, %v626
        %v643 = vmul.f32 %v624, %v626
        %v645 = vperm.slane %v297, 0
        %v647 = vadd.f32 %v628, %v645
        %v648 = vadd.f32 %v629, %v645
        %v649 = vadd.f32 %v630, %v645
        %v650 = vadd.f32 %v631, %v645
        %v651 = vadd.f32 %v632, %v645
        %v652 = vadd.f32 %v633, %v645
        %v653 = vadd.f32 %v634, %v645
        %v654 = vadd.f32 %v635, %v645
        %v655 = vadd.f32 %v636, %v645
        %v656 = vadd.f32 %v637, %v645
        %v657 = vadd.f32 %v638, %v645
        %v658 = vadd.f32 %v639, %v645
        %v659 = vadd.f32 %v640, %v645
        %v660 = vadd.f32 %v641, %v645
        %v661 = vadd.f32 %v642, %v645
        %v662 = vadd.f32 %v643, %v645
        %v663 = vld [vmem:[%s3] sm:$0xff]
        %v664 = vld [vmem:[%s3 + $0x8] sm:$0xff]
        %v665 = vld [vmem:[%s3 + $0x10] sm:$0xff]
        %v666 = vld [vmem:[%s3 + $0x18] sm:$0xff]
        %v667 = vld [vmem:[%s3 + $0x20] sm:$0xff]
        %v668 = vld [vmem:[%s3 + $0x28] sm:$0xff]
        %v669 = vld [vmem:[%s3 + $0x30] sm:$0xff]
        %v670 = vld [vmem:[%s3 + $0x38] sm:$0xff]
        %v671 = vld [vmem:[%s3 + $0x40] sm:$0xff]
        %v672 = vld [vmem:[%s3 + $0x48] sm:$0xff]
        %v673 = vld [vmem:[%s3 + $0x50] sm:$0xff]
        %v674 = vld [vmem:[%s3 + $0x58] sm:$0xff]
        %v675 = vld [vmem:[%s3 + $0x60] sm:$0xff]
        %v676 = vld [vmem:[%s3 + $0x68] sm:$0xff]
        %v677 = vld [vmem:[%s3 + $0x70] sm:$0xff]
        %v678 = vld [vmem:[%s3 + $0x78] sm:$0xff]
        %v679 = vld [vmem:[%s3 + $0x80] sm:$0xff]
        %v680 = vld [vmem:[%s3 + $0x88] sm:$0xff]
        %v681 = vld [vmem:[%s3 + $0x90] sm:$0xff]
        %v682 = vld [vmem:[%s3 + $0x98] sm:$0xff]
        %v683 = vld [vmem:[%s3 + $0xa0] sm:$0xff]
        %v684 = vld [vmem:[%s3 + $0xa8] sm:$0xff]
        %v685 = vld [vmem:[%s3 + $0xb0] sm:$0xff]
        %v686 = vld [vmem:[%s3 + $0xb8] sm:$0xff]
        %v687 = vld [vmem:[%s3 + $0xc0] sm:$0xff]
        %v688 = vld [vmem:[%s3 + $0xc8] sm:$0xff]
        %v689 = vld [vmem:[%s3 + $0xd0] sm:$0xff]
        %v690 = vld [vmem:[%s3 + $0xd8] sm:$0xff]
        %v691 = vld [vmem:[%s3 + $0xe0] sm:$0xff]
        %v692 = vld [vmem:[%s3 + $0xe8] sm:$0xff]
        %v693 = vld [vmem:[%s3 + $0xf0] sm:$0xff]
        %v694 = vld [vmem:[%s3 + $0xf8] sm:$0xff]
        %v695 = vld [vmem:[%s4] sm:$0x3]
        %v697 = vperm.slane %v695, 0
        %v698 = vperm.slane %v695, 1
        %701 = vmatpush.msra.mxu0 %v693
        %702 = vmatpush.msra.mxu0 %v691
        %703 = vmatpush.msra.mxu0 %v689
        %704 = vmatpush.msra.mxu0 %v687
        %705 = vmatpush.msra.mxu0 %v685
        %706 = vmatpush.msra.mxu0 %v683
        %707 = vmatpush.msra.mxu0 %v681
        %708 = vmatpush.msra.mxu0 %v679
        %709 = vmatpush.msra.mxu0 %v677
        %710 = vmatpush.msra.mxu0 %v675
        %711 = vmatpush.msra.mxu0 %v673
        %712 = vmatpush.msra.mxu0 %v671
        %713 = vmatpush.msra.mxu0 %v669
        %714 = vmatpush.msra.mxu0 %v667
        %715 = vmatpush.msra.mxu0 %v665
        %716 = vmatpush.msra.mxu0 %v663
        %717 = vmatmul.f32.gmra.mxu0 %v647
        %v718 = vpop.f32.mrf.mxu0
        %v719 = vadd.f32 %v697, %v718
        %720 = vmatmul.f32.gmra.mxu0 %v648
        %v721 = vpop.f32.mrf.mxu0
        %v722 = vadd.f32 %v697, %v721
        %723 = vmatmul.f32.gmra.mxu0 %v649
        %v724 = vpop.f32.mrf.mxu0
        %v725 = vadd.f32 %v697, %v724
        %726 = vmatmul.f32.gmra.mxu0 %v650
        %v727 = vpop.f32.mrf.mxu0
        %v728 = vadd.f32 %v697, %v727
        %729 = vmatmul.f32.gmra.mxu0 %v651
        %v730 = vpop.f32.mrf.mxu0
        %v731 = vadd.f32 %v697, %v730
        %732 = vmatmul.f32.gmra.mxu0 %v652
        %v733 = vpop.f32.mrf.mxu0
        %v734 = vadd.f32 %v697, %v733
        %735 = vmatmul.f32.gmra.mxu0 %v653
        %v736 = vpop.f32.mrf.mxu0
        %v737 = vadd.f32 %v697, %v736
        %738 = vmatmul.f32.gmra.mxu0 %v654
        %v739 = vpop.f32.mrf.mxu0
        %v740 = vadd.f32 %v697, %v739
        %741 = vmatmul.f32.gmra.mxu0 %v655
        %v742 = vpop.f32.mrf.mxu0
        %v743 = vadd.f32 %v697, %v742
        %744 = vmatmul.f32.gmra.mxu0 %v656
        %v745 = vpop.f32.mrf.mxu0
        %v746 = vadd.f32 %v697, %v745
        %747 = vmatmul.f32.gmra.mxu0 %v657
        %v748 = vpop.f32.mrf.mxu0
        %v749 = vadd.f32 %v697, %v748
        %750 = vmatmul.f32.gmra.mxu0 %v658
        %v751 = vpop.f32.mrf.mxu0
        %v752 = vadd.f32 %v697, %v751
        %753 = vmatmul.f32.gmra.mxu0 %v659
        %v754 = vpop.f32.mrf.mxu0
        %v755 = vadd.f32 %v697, %v754
        %756 = vmatmul.f32.gmra.mxu0 %v660
        %v757 = vpop.f32.mrf.mxu0
        %v758 = vadd.f32 %v697, %v757
        %759 = vmatmul.f32.gmra.mxu0 %v661
        %v760 = vpop.f32.mrf.mxu0
        %v761 = vadd.f32 %v697, %v760
        %762 = vmatmul.f32.gmra.mxu0 %v662
        %v763 = vpop.f32.mrf.mxu0
        %v764 = vadd.f32 %v697, %v763
        %765 = vdwg.mxu0
        %766 = vmatpush.msra.mxu0 %v694
        %767 = vmatpush.msra.mxu0 %v692
        %768 = vmatpush.msra.mxu0 %v690
        %769 = vmatpush.msra.mxu0 %v688
        %770 = vmatpush.msra.mxu0 %v686
        %771 = vmatpush.msra.mxu0 %v684
        %772 = vmatpush.msra.mxu0 %v682
        %773 = vmatpush.msra.mxu0 %v680
        %774 = vmatpush.msra.mxu0 %v678
        %775 = vmatpush.msra.mxu0 %v676
        %776 = vmatpush.msra.mxu0 %v674
        %777 = vmatpush.msra.mxu0 %v672
        %778 = vmatpush.msra.mxu0 %v670
        %779 = vmatpush.msra.mxu0 %v668
        %780 = vmatpush.msra.mxu0 %v666
        %781 = vmatpush.msra.mxu0 %v664
        %782 = vmatmul.f32.gmra.mxu0 %v647
        %v783 = vpop.f32.mrf.mxu0
        %v784 = vadd.f32 %v698, %v783
        %785 = vmatmul.f32.gmra.mxu0 %v648
        %v786 = vpop.f32.mrf.mxu0
        %v787 = vadd.f32 %v698, %v786
        %788 = vmatmul.f32.gmra.mxu0 %v649
        %v789 = vpop.f32.mrf.mxu0
        %v790 = vadd.f32 %v698, %v789
        %791 = vmatmul.f32.gmra.mxu0 %v650
        %v792 = vpop.f32.mrf.mxu0
        %v793 = vadd.f32 %v698, %v792
        %794 = vmatmul.f32.gmra.mxu0 %v651
        %v795 = vpop.f32.mrf.mxu0
        %v796 = vadd.f32 %v698, %v795
        %797 = vmatmul.f32.gmra.mxu0 %v652
        %v798 = vpop.f32.mrf.mxu0
        %v799 = vadd.f32 %v698, %v798
        %800 = vmatmul.f32.gmra.mxu0 %v653
        %v801 = vpop.f32.mrf.mxu0
        %v802 = vadd.f32 %v698, %v801
        %803 = vmatmul.f32.gmra.mxu0 %v654
        %v804 = vpop.f32.mrf.mxu0
        %v805 = vadd.f32 %v698, %v804
        %806 = vmatmul.f32.gmra.mxu0 %v655
        %v807 = vpop.f32.mrf.mxu0
        %v808 = vadd.f32 %v698, %v807
        %809 = vmatmul.f32.gmra.mxu0 %v656
        %v810 = vpop.f32.mrf.mxu0
        %v811 = vadd.f32 %v698, %v810
        %812 = vmatmul.f32.gmra.mxu0 %v657
        %v813 = vpop.f32.mrf.mxu0
        %v814 = vadd.f32 %v698, %v813
        %815 = vmatmul.f32.gmra.mxu0 %v658
        %v816 = vpop.f32.mrf.mxu0
        %v817 = vadd.f32 %v698, %v816
        %818 = vmatmul.f32.gmra.mxu0 %v659
        %v819 = vpop.f32.mrf.mxu0
        %v820 = vadd.f32 %v698, %v819
        %821 = vmatmul.f32.gmra.mxu0 %v660
        %v822 = vpop.f32.mrf.mxu0
        %v823 = vadd.f32 %v698, %v822
        %824 = vmatmul.f32.gmra.mxu0 %v661
        %v825 = vpop.f32.mrf.mxu0
        %v826 = vadd.f32 %v698, %v825
        %827 = vmatmul.f32.gmra.mxu0 %v662
        %v828 = vpop.f32.mrf.mxu0
        %v829 = vadd.f32 %v698, %v828
        %830 = vdwg.mxu0
        %v831 = vmax.f32 %v719, 0.0
        %v832 = vmax.f32 %v784, 0.0
        %v833 = vmax.f32 %v722, 0.0
        %v834 = vmax.f32 %v787, 0.0
        %v835 = vmax.f32 %v725, 0.0
        %v836 = vmax.f32 %v790, 0.0
        %v837 = vmax.f32 %v728, 0.0
        %v838 = vmax.f32 %v793, 0.0
        %v839 = vmax.f32 %v731, 0.0
        %v840 = vmax.f32 %v796, 0.0
        %v841 = vmax.f32 %v734, 0.0
        %v842 = vmax.f32 %v799, 0.0
        %v843 = vmax.f32 %v737, 0.0
        %v844 = vmax.f32 %v802, 0.0
        %v845 = vmax.f32 %v740, 0.0
        %v846 = vmax.f32 %v805, 0.0
        %v847 = vmax.f32 %v743, 0.0
        %v848 = vmax.f32 %v808, 0.0
        %v849 = vmax.f32 %v746, 0.0
        %v850 = vmax.f32 %v811, 0.0
        %v851 = vmax.f32 %v749, 0.0
        %v852 = vmax.f32 %v814, 0.0
        %v853 = vmax.f32 %v752, 0.0
        %v854 = vmax.f32 %v817, 0.0
        %v855 = vmax.f32 %v755, 0.0
        %v856 = vmax.f32 %v820, 0.0
        %v857 = vmax.f32 %v758, 0.0
        %v858 = vmax.f32 %v823, 0.0
        %v859 = vmax.f32 %v761, 0.0
        %v860 = vmax.f32 %v826, 0.0
        %v861 = vmax.f32 %v764, 0.0
        %v862 = vmax.f32 %v829, 0.0
        %v863 = vld [vmem:[%s5] sm:$0xff]
        %v864 = vld [vmem:[%s5 + $0x8] sm:$0xff]
        %v865 = vld [vmem:[%s5 + $0x10] sm:$0xff]
        %v866 = vld [vmem:[%s5 + $0x18] sm:$0xff]
        %v867 = vld [vmem:[%s5 + $0x20] sm:$0xff]
        %v868 = vld [vmem:[%s5 + $0x28] sm:$0xff]
        %v869 = vld [vmem:[%s5 + $0x30] sm:$0xff]
        %v870 = vld [vmem:[%s5 + $0x38] sm:$0xff]
        %v871 = vld [vmem:[%s5 + $0x40] sm:$0xff]
        %v872 = vld [vmem:[%s5 + $0x48] sm:$0xff]
        %v873 = vld [vmem:[%s5 + $0x50] sm:$0xff]
        %v874 = vld [vmem:[%s5 + $0x58] sm:$0xff]
        %v875 = vld [vmem:[%s5 + $0x60] sm:$0xff]
        %v876 = vld [vmem:[%s5 + $0x68] sm:$0xff]
        %v877 = vld [vmem:[%s5 + $0x70] sm:$0xff]
        %v878 = vld [vmem:[%s5 + $0x78] sm:$0xff]
        %v879 = vld [vmem:[%s5 + $0x80] sm:$0xff]
        %v880 = vld [vmem:[%s5 + $0x88] sm:$0xff]
        %v881 = vld [vmem:[%s5 + $0x90] sm:$0xff]
        %v882 = vld [vmem:[%s5 + $0x98] sm:$0xff]
        %v883 = vld [vmem:[%s5 + $0xa0] sm:$0xff]
        %v884 = vld [vmem:[%s5 + $0xa8] sm:$0xff]
        %v885 = vld [vmem:[%s5 + $0xb0] sm:$0xff]
        %v886 = vld [vmem:[%s5 + $0xb8] sm:$0xff]
        %v887 = vld [vmem:[%s5 + $0xc0] sm:$0xff]
        %v888 = vld [vmem:[%s5 + $0xc8] sm:$0xff]
        %v889 = vld [vmem:[%s5 + $0xd0] sm:$0xff]
        %v890 = vld [vmem:[%s5 + $0xd8] sm:$0xff]
        %v891 = vld [vmem:[%s5 + $0xe0] sm:$0xff]
        %v892 = vld [vmem:[%s5 + $0xe8] sm:$0xff]
        %v893 = vld [vmem:[%s5 + $0xf0] sm:$0xff]
        %v894 = vld [vmem:[%s5 + $0xf8] sm:$0xff]
        %v895 = vld [vmem:[%s6] sm:$0x1]
        %v897 = vperm.slane %v895, 0
        %899 = vmatpush.msra.mxu0 %v878
        %900 = vmatpush.msra.mxu0 %v877
        %901 = vmatpush.msra.mxu0 %v876
        %902 = vmatpush.msra.mxu0 %v875
        %903 = vmatpush.msra.mxu0 %v874
        %904 = vmatpush.msra.mxu0 %v873
        %905 = vmatpush.msra.mxu0 %v872
        %906 = vmatpush.msra.mxu0 %v871
        %907 = vmatpush.msra.mxu0 %v870
        %908 = vmatpush.msra.mxu0 %v869
        %909 = vmatpush.msra.mxu0 %v868
        %910 = vmatpush.msra.mxu0 %v867
        %911 = vmatpush.msra.mxu0 %v866
        %912 = vmatpush.msra.mxu0 %v865
        %913 = vmatpush.msra.mxu0 %v864
        %914 = vmatpush.msra.mxu0 %v863
        %915 = vmatmul.f32.gmra.mxu0 %v831
        %v916 = vpop.f32.mrf.mxu0
        %v917 = vadd.f32 %v897, %v916
        %918 = vmatmul.f32.gmra.mxu0 %v833
        %v919 = vpop.f32.mrf.mxu0
        %v920 = vadd.f32 %v897, %v919
        %921 = vmatmul.f32.gmra.mxu0 %v835
        %v922 = vpop.f32.mrf.mxu0
        %v923 = vadd.f32 %v897, %v922
        %924 = vmatmul.f32.gmra.mxu0 %v837
        %v925 = vpop.f32.mrf.mxu0
        %v926 = vadd.f32 %v897, %v925
        %927 = vmatmul.f32.gmra.mxu0 %v839
        %v928 = vpop.f32.mrf.mxu0
        %v929 = vadd.f32 %v897, %v928
        %930 = vmatmul.f32.gmra.mxu0 %v841
        %v931 = vpop.f32.mrf.mxu0
        %v932 = vadd.f32 %v897, %v931
        %933 = vmatmul.f32.gmra.mxu0 %v843
        %v934 = vpop.f32.mrf.mxu0
        %v935 = vadd.f32 %v897, %v934
        %936 = vmatmul.f32.gmra.mxu0 %v845
        %v937 = vpop.f32.mrf.mxu0
        %v938 = vadd.f32 %v897, %v937
        %939 = vmatmul.f32.gmra.mxu0 %v847
        %v940 = vpop.f32.mrf.mxu0
        %v941 = vadd.f32 %v897, %v940
        %942 = vmatmul.f32.gmra.mxu0 %v849
        %v943 = vpop.f32.mrf.mxu0
        %v944 = vadd.f32 %v897, %v943
        %945 = vmatmul.f32.gmra.mxu0 %v851
        %v946 = vpop.f32.mrf.mxu0
        %v947 = vadd.f32 %v897, %v946
        %948 = vmatmul.f32.gmra.mxu0 %v853
        %v949 = vpop.f32.mrf.mxu0
        %v950 = vadd.f32 %v897, %v949
        %951 = vmatmul.f32.gmra.mxu0 %v855
        %v952 = vpop.f32.mrf.mxu0
        %v953 = vadd.f32 %v897, %v952
        %954 = vmatmul.f32.gmra.mxu0 %v857
        %v955 = vpop.f32.mrf.mxu0
        %v956 = vadd.f32 %v897, %v955
        %957 = vmatmul.f32.gmra.mxu0 %v859
        %v958 = vpop.f32.mrf.mxu0
        %v959 = vadd.f32 %v897, %v958
        %960 = vmatmul.f32.gmra.mxu0 %v861
        %v961 = vpop.f32.mrf.mxu0
        %v962 = vadd.f32 %v897, %v961
        %963 = vdwg.mxu0
        %964 = vmatpush.msra.mxu0 %v894
        %965 = vmatpush.msra.mxu0 %v893
        %966 = vmatpush.msra.mxu0 %v892
        %967 = vmatpush.msra.mxu0 %v891
        %968 = vmatpush.msra.mxu0 %v890
        %969 = vmatpush.msra.mxu0 %v889
        %970 = vmatpush.msra.mxu0 %v888
        %971 = vmatpush.msra.mxu0 %v887
        %972 = vmatpush.msra.mxu0 %v886
        %973 = vmatpush.msra.mxu0 %v885
        %974 = vmatpush.msra.mxu0 %v884
        %975 = vmatpush.msra.mxu0 %v883
        %976 = vmatpush.msra.mxu0 %v882
        %977 = vmatpush.msra.mxu0 %v881
        %978 = vmatpush.msra.mxu0 %v880
        %979 = vmatpush.msra.mxu0 %v879
        %980 = vmatmul.f32.gmra.mxu0 %v832
        %v981 = vpop.f32.mrf.mxu0
        %v982 = vadd.f32 %v917, %v981
        %983 = vmatmul.f32.gmra.mxu0 %v834
        %v984 = vpop.f32.mrf.mxu0
        %v985 = vadd.f32 %v920, %v984
        %986 = vmatmul.f32.gmra.mxu0 %v836
        %v987 = vpop.f32.mrf.mxu0
        %v988 = vadd.f32 %v923, %v987
        %989 = vmatmul.f32.gmra.mxu0 %v838
        %v990 = vpop.f32.mrf.mxu0
        %v991 = vadd.f32 %v926, %v990
        %992 = vmatmul.f32.gmra.mxu0 %v840
        %v993 = vpop.f32.mrf.mxu0
        %v994 = vadd.f32 %v929, %v993
        %995 = vmatmul.f32.gmra.mxu0 %v842
        %v996 = vpop.f32.mrf.mxu0
        %v997 = vadd.f32 %v932, %v996
        %998 = vmatmul.f32.gmra.mxu0 %v844
        %v999 = vpop.f32.mrf.mxu0
        %v1000 = vadd.f32 %v935, %v999
        %1001 = vmatmul.f32.gmra.mxu0 %v846
        %v1002 = vpop.f32.mrf.mxu0
        %v1003 = vadd.f32 %v938, %v1002
        %1004 = vmatmul.f32.gmra.mxu0 %v848
        %v1005 = vpop.f32.mrf.mxu0
        %v1006 = vadd.f32 %v941, %v1005
        %1007 = vmatmul.f32.gmra.mxu0 %v850
        %v1008 = vpop.f32.mrf.mxu0
        %v1009 = vadd.f32 %v944, %v1008
        %1010 = vmatmul.f32.gmra.mxu0 %v852
        %v1011 = vpop.f32.mrf.mxu0
        %v1012 = vadd.f32 %v947, %v1011
        %1013 = vmatmul.f32.gmra.mxu0 %v854
        %v1014 = vpop.f32.mrf.mxu0
        %v1015 = vadd.f32 %v950, %v1014
        %1016 = vmatmul.f32.gmra.mxu0 %v856
        %v1017 = vpop.f32.mrf.mxu0
        %v1018 = vadd.f32 %v953, %v1017
        %1019 = vmatmul.f32.gmra.mxu0 %v858
        %v1020 = vpop.f32.mrf.mxu0
        %v1021 = vadd.f32 %v956, %v1020
        %1022 = vmatmul.f32.gmra.mxu0 %v860
        %v1023 = vpop.f32.mrf.mxu0
        %v1024 = vadd.f32 %v959, %v1023
        %1025 = vmatmul.f32.gmra.mxu0 %v862
        %v1026 = vpop.f32.mrf.mxu0
        %v1027 = vadd.f32 %v962, %v1026
        %1028 = vdwg.mxu0
        %v1029 = vadd.f32 %v280, %v982
        %v1030 = vadd.f32 %v281, %v985
        %v1031 = vadd.f32 %v282, %v988
        %v1032 = vadd.f32 %v283, %v991
        %v1033 = vadd.f32 %v284, %v994
        %v1034 = vadd.f32 %v285, %v997
        %v1035 = vadd.f32 %v286, %v1000
        %v1036 = vadd.f32 %v287, %v1003
        %v1037 = vadd.f32 %v288, %v1006
        %v1038 = vadd.f32 %v289, %v1009
        %v1039 = vadd.f32 %v290, %v1012
        %v1040 = vadd.f32 %v291, %v1015
        %v1041 = vadd.f32 %v292, %v1018
        %v1042 = vadd.f32 %v293, %v1021
        %v1043 = vadd.f32 %v294, %v1024
        %v1044 = vadd.f32 %v295, %v1027
        %1045 = vst [vmem:[%s272] sm:$0xff] %v1029
        %1046 = vst [vmem:[%s272 + $0x8] sm:$0xff] %v1030
        %1047 = vst [vmem:[%s272 + $0x10] sm:$0xff] %v1031
        %1048 = vst [vmem:[%s272 + $0x18] sm:$0xff] %v1032
        %1049 = vst [vmem:[%s272 + $0x20] sm:$0xff] %v1033
        %1050 = vst [vmem:[%s272 + $0x28] sm:$0xff] %v1034
        %1051 = vst [vmem:[%s272 + $0x30] sm:$0xff] %v1035
        %1052 = vst [vmem:[%s272 + $0x38] sm:$0xff] %v1036
        %1053 = vst [vmem:[%s272 + $0x40] sm:$0xff] %v1037
        %1054 = vst [vmem:[%s272 + $0x48] sm:$0xff] %v1038
        %1055 = vst [vmem:[%s272 + $0x50] sm:$0xff] %v1039
        %1056 = vst [vmem:[%s272 + $0x58] sm:$0xff] %v1040
        %1057 = vst [vmem:[%s272 + $0x60] sm:$0xff] %v1041
        %1058 = vst [vmem:[%s272 + $0x68] sm:$0xff] %v1042
        %1059 = vst [vmem:[%s272 + $0x70] sm:$0xff] %v1043
        %1060 = vst [vmem:[%s272 + $0x78] sm:$0xff] %v1044
        %s1061 = sand.u32 %s181, 1
        %s1062 = scalar_lea.sflag [#allocation3], %s1061
        %s1063 = sand.u32 %s181, 1
        %s1064 = smul.addr %s1063, 128
        %s1065 = scalar_lea.vmem [#allocation2], %s1064
        // Predicated region
        $region49: #{transformer_block.3} parent=47 // pred_check
          %p1066 = pneg %p191
        $region50: #{transformer_block.3} parent=47 // pred_check_branch
          %1068 = sbr.rel (%p1066) target = $region52
        $region51: #{transformer_block.3} parent=47 // pred_region
          %s1069 = smul.u32 16, %s21
          %1071 = vsyncadd %s1062, 0
          %s1072 = smul.addr %s1069, 8
          %s1073 = scalar_lea.hbm %s7, %s1072
          %s1074 = sshll.u32 %s1065, 4
          %s1075 = int_to_ptr.vmem [resolvable:$true] %s1074
          %s1076 = sshll.u32 %s1073, 4
          %s1077 = int_to_ptr.hbm [resolvable:$true] %s1076
          %1082 = dma.vmem_to_hbm [thread:$0]  %s1075, 2048, %s1077, %s1062, 128, 128, 8
        $region52: #{transformer_block.3} parent=47 // pred_fallthru
          _
      $region48: #{transformer_block.3} parent=5 // pred_fallthru
        _
      %p1083 = scmp.le.s32.totalorder 2, %s16
      // Predicated region
      $region53: #{transformer_block.3} parent=5 // pred_check
        %p1084 = pneg %p1083
      $region54: #{transformer_block.3} parent=5 // pred_check_branch
        %1086 = sbr.rel (%p1084) target = $region56
      $region55: #{transformer_block.3} parent=5 // pred_region
        %s1087 = ssub.s32 %s16, 2
        // Predicated region
        $region57: #{transformer_block.3} parent=55 // pred_check
          %p1088 = pneg %p197
        $region58: #{transformer_block.3} parent=55 // pred_check_branch
          %1090 = sbr.rel (%p1088) target = $region60
        $region59: #{transformer_block.3} parent=55 // pred_region
          %s1091 = sand.u32 %s182, 1
          %s1092 = scalar_lea.sflag [#allocation3], %s1091
          %s1093 = sand.u32 %s182, 1
          %s1094 = smul.addr %s1093, 128
          %s1095 = scalar_lea.vmem [#allocation2], %s1094
          %1097 = dma.done %s1092, 2048
        $region60: #{transformer_block.3} parent=55 // pred_fallthru
          _
      $region56: #{transformer_block.3} parent=5 // pred_fallthru
        _
    $region6: #{transformer_block.3} parent=1 // loop_footer
      %s20 = sadd.s32 1, %s16
    $region7: #{transformer_block.3} parent=1 // loop_footer_branch
      %15 = sbr.rel target = $region3
    $region8: #{transformer_block.3} parent=1 // loop_exit
      _
    %1098 = vsyncpa [#allocation3], 1
    %s1099 = scalar_lea.sflag [#allocation3], 1
    %1100 = vsyncpa %s1099, 1

// kernel: transformer_block.2
$region0: #{transformer_block.2}
  #allocation0 [shape = 'u32[]', space=smem, size = 0x4, offset = 0x4, fixed_abs, tag = 'smem constant byte address 0x4 - core index']
  #allocation1 [shape = 'u32[72,128]{1,0:T(1,128)}', space=vmem, size = 0x9000, scoped, tag = 'internal scratch']
  %s0 = inlined_call_operand.hbm [shape: f32[2,128,128], index: 0, kind: input, shape index: {}]
  %s1 = inlined_call_operand.hbm [shape: f32[1,128], index: 1, kind: input, shape index: {}]
  %s2 = inlined_call_operand.hbm [shape: f32[1,128], index: 2, kind: input, shape index: {}]
  %s3 = inlined_call_operand.hbm [shape: f32[128,384], index: 3, kind: input, shape index: {}]
  %s4 = inlined_call_operand.vmem [shape: f32[1,384], index: 4, kind: input, shape index: {}]
  %s5 = inlined_call_operand.hbm [shape: f32[128,128], index: 5, kind: input, shape index: {}]
  %s6 = inlined_call_operand.vmem [shape: f32[1,128], index: 6, kind: input, shape index: {}]
  %s7 = inlined_call_operand.vmem [shape: f32[2,128,128], index: 7, kind: output, shape index: {}]
  %s8 = sld [smem:[#allocation0]]
  $region81: #{transformer_block.2} parent=0
    _
  %s10 = ssub.s32 1, %s8
  %s11 = scalar_select 0, %s10, %s8
  $region1: #{transformer_block.2} parent=0
    #allocation2 [shape = 'u8[131072]{0}', space=vmem, size = 0x20000, scoped, tag = 'input window, operand 0']
    #allocation3 [shape = 's32[2]{0}', space=sflag, size = 0x8, scoped, tag = 'scoped memory for transformer_block.2']
    #allocation4 [shape = 'u8[512]{0}', space=vmem, size = 0x400, scoped, tag = 'input window, operand 1, single buffered']
    #allocation5 [shape = 's32[1]{0}', space=sflag, size = 0x4, scoped, tag = 'scoped memory for transformer_block.2']
    #allocation6 [shape = 'u8[512]{0}', space=vmem, size = 0x400, scoped, tag = 'input window, operand 2, single buffered']
    #allocation7 [shape = 'u8[196608]{0}', space=vmem, size = 0x30000, scoped, tag = 'input window, operand 3, single buffered']
    #allocation8 [shape = 's32[1]{0}', space=sflag, size = 0x4, scoped, tag = 'scoped memory for transformer_block.2']
    #allocation9 [shape = 'u8[65536]{0}', space=vmem, size = 0x10000, scoped, tag = 'input window, operand 5, single buffered']
    %12 = vsyncpa [#allocation3], 0
    %s13 = scalar_lea.sflag [#allocation3], 1
    %14 = vsyncpa %s13, 0
    %15 = vsyncpa [#allocation5], 0
    %16 = vsyncpa [#allocation8], 0
    loop: start=0, step=1, limit=4
    $region2: #{transformer_block.2} parent=1 // loop_pre_header
      _
    $region3: #{transformer_block.2} parent=1 // loop_header
      %s18 = sphi 0, %s22
      %p19 = scmp.ge.s32.totalorder %s18, 4
      %s28 = sphi 0, %s30
      %s31 = sphi 0, %s28
      %s32 = sphi 0, %s31
      %s48 = sphi 0, %s32
      %s52 = sphi 0, %s52
      %s54 = sphi 0, %s52
      %s55 = sphi 0, %s54
      %s69 = sphi 0, %s55
      %s73 = sphi 0, %s73
      %s75 = sphi 0, %s73
      %s76 = sphi 0, %s75
      %s90 = sphi 0, %s76
      %s94 = sphi 0, %s94
      %s96 = sphi 0, %s94
      %s97 = sphi 0, %s96
      %s111 = sphi 0, %s97
      %s115 = sphi 0, %s115
      %s117 = sphi 0, %s115
      %s118 = sphi 0, %s117
      %s132 = sphi 0, %s118
      %s136 = sphi 0, %s136
      %s138 = sphi 0, %s136
      %s139 = sphi 0, %s138
      %s153 = sphi 0, %s139
      %s157 = sphi 0, %s157
      %s159 = sphi 0, %s157
      %s160 = sphi 0, %s159
      %s174 = sphi 0, %s160
      %s180 = sphi 0, %s182
      %s183 = sphi 0, %s180
      %s184 = sphi 0, %s183
      %s200 = sphi 0, %s184
    $region4: #{transformer_block.2} parent=1 // loop_header_branch
      %21 = sbr.rel (%p19) target = $region8
    $region5: #{transformer_block.2} parent=1 // loop_body
      %s23 = ssub.s32 %s18, 1
      %s24 = ssub.s32 %s18, 2
      %s25 = sadd.s32 %s18, 1
      %s26 = ssub.s32 %s18, %s25
      %p27 = scmp.eq.s32.totalorder %s26, 0
      %s29 = sadd.s32 %s28, 1
      %s30 = scalar_select %p27, %s28, %s29
      %p33 = pneg %p27
      %p34 = scmp.eq.s32.totalorder %s18, 1
      %p35 = por %p33, %p34
      %p36 = scmp.ne.s32.totalorder %s28, %s31
      %p37 = scmp.eq.s32.totalorder %s18, 0
      %p38 = por %p36, %p37
      %p39 = scmp.ne.s32.totalorder %s28, %s31
      %p40 = scmp.eq.s32.totalorder %s23, 1
      %p41 = por %p39, %p40
      %p42 = scmp.ne.s32.totalorder %s31, %s32
      %p43 = scmp.eq.s32.totalorder %s23, 0
      %p44 = por %p42, %p43
      %p45 = scmp.ne.s32.totalorder %s31, %s32
      %p46 = scmp.eq.s32.totalorder %s24, 1
      %p47 = por %p45, %p46
      %p49 = scmp.ne.s32.totalorder %s32, %s48
      %p50 = scmp.eq.s32.totalorder %s24, 0
      %p51 = por %p49, %p50
      %s53 = sadd.s32 %s52, 1
      %p56 = scmp.eq.s32.totalorder %s18, 1
      %p57 = scmp.ne.s32.totalorder %s52, %s54
      %p58 = scmp.eq.s32.totalorder %s18, 0
      %p59 = por %p57, %p58
      %p60 = scmp.ne.s32.totalorder %s52, %s54
      %p61 = scmp.eq.s32.totalorder %s23, 1
      %p62 = por %p60, %p61
      %p63 = scmp.ne.s32.totalorder %s54, %s55
      %p64 = scmp.eq.s32.totalorder %s23, 0
      %p65 = por %p63, %p64
      %p66 = scmp.ne.s32.totalorder %s54, %s55
      %p67 = scmp.eq.s32.totalorder %s24, 1
      %p68 = por %p66, %p67
      %p70 = scmp.ne.s32.totalorder %s55, %s69
      %p71 = scmp.eq.s32.totalorder %s24, 0
      %p72 = por %p70, %p71
      %s74 = sadd.s32 %s73, 1
      %p77 = scmp.eq.s32.totalorder %s18, 1
      %p78 = scmp.ne.s32.totalorder %s73, %s75
      %p79 = scmp.eq.s32.totalorder %s18, 0
      %p80 = por %p78, %p79
      %p81 = scmp.ne.s32.totalorder %s73, %s75
      %p82 = scmp.eq.s32.totalorder %s23, 1
      %p83 = por %p81, %p82
      %p84 = scmp.ne.s32.totalorder %s75, %s76
      %p85 = scmp.eq.s32.totalorder %s23, 0
      %p86 = por %p84, %p85
      %p87 = scmp.ne.s32.totalorder %s75, %s76
      %p88 = scmp.eq.s32.totalorder %s24, 1
      %p89 = por %p87, %p88
      %p91 = scmp.ne.s32.totalorder %s76, %s90
      %p92 = scmp.eq.s32.totalorder %s24, 0
      %p93 = por %p91, %p92
      %s95 = sadd.s32 %s94, 1
      %p98 = scmp.eq.s32.totalorder %s18, 1
      %p99 = scmp.ne.s32.totalorder %s94, %s96
      %p100 = scmp.eq.s32.totalorder %s18, 0
      %p101 = por %p99, %p100
      %p102 = scmp.ne.s32.totalorder %s94, %s96
      %p103 = scmp.eq.s32.totalorder %s23, 1
      %p104 = por %p102, %p103
      %p105 = scmp.ne.s32.totalorder %s96, %s97
      %p106 = scmp.eq.s32.totalorder %s23, 0
      %p107 = por %p105, %p106
      %p108 = scmp.ne.s32.totalorder %s96, %s97
      %p109 = scmp.eq.s32.totalorder %s24, 1
      %p110 = por %p108, %p109
      %p112 = scmp.ne.s32.totalorder %s97, %s111
      %p113 = scmp.eq.s32.totalorder %s24, 0
      %p114 = por %p112, %p113
      %s116 = sadd.s32 %s115, 1
      %p119 = scmp.eq.s32.totalorder %s18, 1
      %p120 = scmp.ne.s32.totalorder %s115, %s117
      %p121 = scmp.eq.s32.totalorder %s18, 0
      %p122 = por %p120, %p121
      %p123 = scmp.ne.s32.totalorder %s115, %s117
      %p124 = scmp.eq.s32.totalorder %s23, 1
      %p125 = por %p123, %p124
      %p126 = scmp.ne.s32.totalorder %s117, %s118
      %p127 = scmp.eq.s32.totalorder %s23, 0
      %p128 = por %p126, %p127
      %p129 = scmp.ne.s32.totalorder %s117, %s118
      %p130 = scmp.eq.s32.totalorder %s24, 1
      %p131 = por %p129, %p130
      %p133 = scmp.ne.s32.totalorder %s118, %s132
      %p134 = scmp.eq.s32.totalorder %s24, 0
      %p135 = por %p133, %p134
      %s137 = sadd.s32 %s136, 1
      %p140 = scmp.eq.s32.totalorder %s18, 1
      %p141 = scmp.ne.s32.totalorder %s136, %s138
      %p142 = scmp.eq.s32.totalorder %s18, 0
      %p143 = por %p141, %p142
      %p144 = scmp.ne.s32.totalorder %s136, %s138
      %p145 = scmp.eq.s32.totalorder %s23, 1
      %p146 = por %p144, %p145
      %p147 = scmp.ne.s32.totalorder %s138, %s139
      %p148 = scmp.eq.s32.totalorder %s23, 0
      %p149 = por %p147, %p148
      %p150 = scmp.ne.s32.totalorder %s138, %s139
      %p151 = scmp.eq.s32.totalorder %s24, 1
      %p152 = por %p150, %p151
      %p154 = scmp.ne.s32.totalorder %s139, %s153
      %p155 = scmp.eq.s32.totalorder %s24, 0
      %p156 = por %p154, %p155
      %s158 = sadd.s32 %s157, 1
      %p161 = scmp.eq.s32.totalorder %s18, 1
      %p162 = scmp.ne.s32.totalorder %s157, %s159
      %p163 = scmp.eq.s32.totalorder %s18, 0
      %p164 = por %p162, %p163
      %p165 = scmp.ne.s32.totalorder %s157, %s159
      %p166 = scmp.eq.s32.totalorder %s23, 1
      %p167 = por %p165, %p166
      %p168 = scmp.ne.s32.totalorder %s159, %s160
      %p169 = scmp.eq.s32.totalorder %s23, 0
      %p170 = por %p168, %p169
      %p171 = scmp.ne.s32.totalorder %s159, %s160
      %p172 = scmp.eq.s32.totalorder %s24, 1
      %p173 = por %p171, %p172
      %p175 = scmp.ne.s32.totalorder %s160, %s174
      %p176 = scmp.eq.s32.totalorder %s24, 0
      %p177 = por %p175, %p176
      %s178 = ssub.s32 %s18, %s25
      %p179 = scmp.eq.s32.totalorder %s178, 0
      %s181 = sadd.s32 %s180, 1
      %s182 = scalar_select %p179, %s180, %s181
      %p185 = pneg %p179
      %p186 = scmp.eq.s32.totalorder %s18, 1
      %p187 = por %p185, %p186
      %p188 = scmp.ne.s32.totalorder %s180, %s183
      %p189 = scmp.eq.s32.totalorder %s18, 0
      %p190 = por %p188, %p189
      %p191 = scmp.ne.s32.totalorder %s180, %s183
      %p192 = scmp.eq.s32.totalorder %s23, 1
      %p193 = por %p191, %p192
      %p194 = scmp.ne.s32.totalorder %s183, %s184
      %p195 = scmp.eq.s32.totalorder %s23, 0
      %p196 = por %p194, %p195
      %p197 = scmp.ne.s32.totalorder %s183, %s184
      %p198 = scmp.eq.s32.totalorder %s24, 1
      %p199 = por %p197, %p198
      %p201 = scmp.ne.s32.totalorder %s184, %s200
      %p202 = scmp.eq.s32.totalorder %s24, 0
      %p203 = por %p201, %p202
      %p204 = scmp.le.s32.totalorder 1, %s18
      %p205 = scmp.lt.s32.totalorder %s18, 3
      %p206 = pnand %p204, %p205
      %p207 = pneg %p206
      // Predicated region
      $region9: #{transformer_block.2} parent=5 // pred_check
        _
      $region10: #{transformer_block.2} parent=5 // pred_check_branch
        %209 = sbr.rel (%p206) target = $region12
      $region11: #{transformer_block.2} parent=5 // pred_region
        %s210 = ssub.s32 %s18, 1
        // Predicated region
        $region13: #{transformer_block.2} parent=11 // pred_check
          %p211 = pneg %p65
        $region14: #{transformer_block.2} parent=11 // pred_check_branch
          %213 = sbr.rel (%p211) target = $region16
        $region15: #{transformer_block.2} parent=11 // pred_region
          %215 = vsyncadd [#allocation5], 0
          %s217 = sshll.u32 %s1, 4
          %s218 = int_to_ptr.hbm [resolvable:$true] %s217
          %s219 = sshll.u32 [#allocation4], 4
          %s220 = int_to_ptr.vmem [resolvable:$true] %s219
          %222 = dma.hbm_to_vmem [thread:$0]  %s218, 16, %s220, [#allocation5]
        $region16: #{transformer_block.2} parent=11 // pred_fallthru
          _
        // Predicated region
        $region17: #{transformer_block.2} parent=11 // pred_check
          %p223 = pneg %p86
        $region18: #{transformer_block.2} parent=11 // pred_check_branch
          %225 = sbr.rel (%p223) target = $region20
        $region19: #{transformer_block.2} parent=11 // pred_region
          %227 = vsyncadd [#allocation5], 0
          %s229 = sshll.u32 %s2, 4
          %s230 = int_to_ptr.hbm [resolvable:$true] %s229
          %s231 = sshll.u32 [#allocation6], 4
          %s232 = int_to_ptr.vmem [resolvable:$true] %s231
          %234 = dma.hbm_to_vmem [thread:$0]  %s230, 16, %s232, [#allocation5]
        $region20: #{transformer_block.2} parent=11 // pred_fallthru
          _
        // Predicated region
        $region21: #{transformer_block.2} parent=11 // pred_check
          %p235 = pneg %p107
        $region22: #{transformer_block.2} parent=11 // pred_check_branch
          %237 = sbr.rel (%p235) target = $region24
        $region23: #{transformer_block.2} parent=11 // pred_region
          %239 = vsyncadd [#allocation8], 0
          %s240 = sshll.u32 %s3, 4
          %s241 = int_to_ptr.hbm [resolvable:$true] %s240
          %s242 = sshll.u32 [#allocation7], 4
          %s243 = int_to_ptr.vmem [resolvable:$true] %s242
          %248 = dma.hbm_to_vmem [thread:$0]  %s241, 6144, %s243, [#allocation8], 384, 384, 24
        $region24: #{transformer_block.2} parent=11 // pred_fallthru
          _
        // Predicated region
        $region25: #{transformer_block.2} parent=11 // pred_check
          %p249 = pneg %p128
        $region26: #{transformer_block.2} parent=11 // pred_check_branch
          %251 = sbr.rel (%p249) target = $region28
        $region27: #{transformer_block.2} parent=11 // pred_region
          _
        $region28: #{transformer_block.2} parent=11 // pred_fallthru
          _
        // Predicated region
        $region29: #{transformer_block.2} parent=11 // pred_check
          %p252 = pneg %p149
        $region30: #{transformer_block.2} parent=11 // pred_check_branch
          %254 = sbr.rel (%p252) target = $region32
        $region31: #{transformer_block.2} parent=11 // pred_region
          %256 = vsyncadd [#allocation8], 0
          %s257 = sshll.u32 %s5, 4
          %s258 = int_to_ptr.hbm [resolvable:$true] %s257
          %s259 = sshll.u32 [#allocation9], 4
          %s260 = int_to_ptr.vmem [resolvable:$true] %s259
          %265 = dma.hbm_to_vmem [thread:$0]  %s258, 2048, %s260, [#allocation8], 128, 128, 8
        $region32: #{transformer_block.2} parent=11 // pred_fallthru
          _
        // Predicated region
        $region33: #{transformer_block.2} parent=11 // pred_check
          %p266 = pneg %p170
        $region34: #{transformer_block.2} parent=11 // pred_check_branch
          %268 = sbr.rel (%p266) target = $region36
        $region35: #{transformer_block.2} parent=11 // pred_region
          _
        $region36: #{transformer_block.2} parent=11 // pred_fallthru
          _
      $region12: #{transformer_block.2} parent=5 // pred_fallthru
        _
      %p269 = scmp.lt.s32.totalorder %s18, 2
      // Predicated region
      $region37: #{transformer_block.2} parent=5 // pred_check
        %p270 = pneg %p269
      $region38: #{transformer_block.2} parent=5 // pred_check_branch
        %272 = sbr.rel (%p270) target = $region40
      $region39: #{transformer_block.2} parent=5 // pred_region
        // Predicated region
        $region41: #{transformer_block.2} parent=39 // pred_check
          %p273 = pneg %p38
        $region42: #{transformer_block.2} parent=39 // pred_check_branch
          %275 = sbr.rel (%p273) target = $region44
        $region43: #{transformer_block.2} parent=39 // pred_region
          %s276 = sand.u32 %s28, 1
          %s277 = scalar_lea.sflag [#allocation3], %s276
          %s278 = sand.u32 %s28, 1
          %s279 = smul.addr %s278, 128
          %s280 = scalar_lea.vmem [#allocation2], %s279
          %282 = vsyncadd %s277, 0
          %s283 = smul.addr %s18, 16
          %s284 = smul.addr %s283, 8
          %s285 = scalar_lea.hbm %s0, %s284
          %s286 = sshll.u32 %s285, 4
          %s287 = int_to_ptr.hbm [resolvable:$true] %s286
          %s288 = sshll.u32 %s280, 4
          %s289 = int_to_ptr.vmem [resolvable:$true] %s288
          %294 = dma.hbm_to_vmem [thread:$0]  %s287, 2048, %s289, %s277, 128, 128, 8
        $region44: #{transformer_block.2} parent=39 // pred_fallthru
          _
      $region40: #{transformer_block.2} parent=5 // pred_fallthru
        _
      %p295 = scmp.le.s32.totalorder 1, %s18
      %p296 = scmp.lt.s32.totalorder %s18, 3
      %p297 = pnand %p295, %p296
      %p298 = pneg %p297
      // Predicated region
      $region45: #{transformer_block.2} parent=5 // pred_check
        _
      $region46: #{transformer_block.2} parent=5 // pred_check_branch
        %300 = sbr.rel (%p297) target = $region48
      $region47: #{transformer_block.2} parent=5 // pred_region
        %s301 = ssub.s32 %s18, 1
        %s302 = sand.u32 %s31, 1
        %s303 = scalar_lea.sflag [#allocation3], %s302
        %s304 = sand.u32 %s31, 1
        %s305 = smul.addr %s304, 128
        %s306 = scalar_lea.vmem [#allocation2], %s305
        // Predicated region
        $region49: #{transformer_block.2} parent=47 // pred_check
          %p307 = pneg %p44
        $region50: #{transformer_block.2} parent=47 // pred_check_branch
          %309 = sbr.rel (%p307) target = $region52
        $region51: #{transformer_block.2} parent=47 // pred_region
          %311 = dma.done %s303, 2048
        $region52: #{transformer_block.2} parent=47 // pred_fallthru
          _
        // Predicated region
        $region53: #{transformer_block.2} parent=47 // pred_check
          %p312 = pneg %p65
        $region54: #{transformer_block.2} parent=47 // pred_check_branch
          %314 = sbr.rel (%p312) target = $region56
        $region55: #{transformer_block.2} parent=47 // pred_region
          %316 = dma.done [#allocation5], 16
        $region56: #{transformer_block.2} parent=47 // pred_fallthru
          _
        // Predicated region
        $region57: #{transformer_block.2} parent=47 // pred_check
          %p317 = pneg %p86
        $region58: #{transformer_block.2} parent=47 // pred_check_branch
          %319 = sbr.rel (%p317) target = $region60
        $region59: #{transformer_block.2} parent=47 // pred_region
          %321 = dma.done [#allocation5], 16
        $region60: #{transformer_block.2} parent=47 // pred_fallthru
          _
        // Predicated region
        $region61: #{transformer_block.2} parent=47 // pred_check
          %p322 = pneg %p107
        $region62: #{transformer_block.2} parent=47 // pred_check_branch
          %324 = sbr.rel (%p322) target = $region64
        $region63: #{transformer_block.2} parent=47 // pred_region
          %326 = dma.done [#allocation8], 6144
        $region64: #{transformer_block.2} parent=47 // pred_fallthru
          _
        // Predicated region
        $region65: #{transformer_block.2} parent=47 // pred_check
          %p327 = pneg %p149
        $region66: #{transformer_block.2} parent=47 // pred_check_branch
          %329 = sbr.rel (%p327) target = $region68
        $region67: #{transformer_block.2} parent=47 // pred_region
          %331 = dma.done [#allocation8], 2048
        $region68: #{transformer_block.2} parent=47 // pred_fallthru
          _
        %s332 = sand.u32 %s31, 1
        %s333 = scalar_lea.sflag [#allocation3], %s332
        %s334 = sand.u32 %s31, 1
        %s335 = smul.addr %s334, 128
        %s336 = scalar_lea.vmem [#allocation2], %s335
        %p337 = pneg %p44
        %p338 = pneg %p41
        %p339 = pneg %p65
        %p340 = pneg %p62
        %p341 = pneg %p86
        %p342 = pneg %p83
        %p343 = pneg %p107
        %p344 = pneg %p104
        %p345 = pneg %p128
        %p346 = pneg %p125
        %p347 = pneg %p149
        %p348 = pneg %p146
        %p349 = pneg %p170
        %p350 = pneg %p167
        %p351 = pneg %p196
        %p352 = pneg %p193
        %p353 = scmp.lt.s32.totalorder %s23, 1
        %s354 = scalar_select %p353, %s23, 1
        %s355 = smul.addr %s354, 16
        %s356 = smul.addr %s355, 8
        %s357 = scalar_lea.vmem %s7, %s356
        %p358 = scmp.lt.s32.totalorder %s23, 1
        %s359 = scalar_select %p358, %s23, 1
        %s360 = smul.addr %s359, 16
        %s361 = smul.addr %s360, 8
        %s362 = scalar_lea.vmem %s7, %s361
        %v363 = vld [vmem:[%s306] sm:$0xff]
        %v364 = vld [vmem:[%s306 + $0x8] sm:$0xff]
        %v365 = vld [vmem:[%s306 + $0x10] sm:$0xff]
        %v366 = vld [vmem:[%s306 + $0x18] sm:$0xff]
        %v367 = vld [vmem:[%s306 + $0x20] sm:$0xff]
        %v368 = vld [vmem:[%s306 + $0x28] sm:$0xff]
        %v369 = vld [vmem:[%s306 + $0x30] sm:$0xff]
        %v370 = vld [vmem:[%s306 + $0x38] sm:$0xff]
        %v371 = vld [vmem:[%s306 + $0x40] sm:$0xff]
        %v372 = vld [vmem:[%s306 + $0x48] sm:$0xff]
        %v373 = vld [vmem:[%s306 + $0x50] sm:$0xff]
        %v374 = vld [vmem:[%s306 + $0x58] sm:$0xff]
        %v375 = vld [vmem:[%s306 + $0x60] sm:$0xff]
        %v376 = vld [vmem:[%s306 + $0x68] sm:$0xff]
        %v377 = vld [vmem:[%s306 + $0x70] sm:$0xff]
        %v378 = vld [vmem:[%s306 + $0x78] sm:$0xff]
        %v379 = vld [vmem:[#allocation4] sm:$0x1]
        %v380 = vld [vmem:[#allocation6] sm:$0x1]
        %381 = vadd.xlane.f32.xlu0 %v363
        %v382 = vpop.xlane.xlu0 %381
        %383 = vadd.xlane.f32.xlu0 %v364
        %v384 = vpop.xlane.xlu0 %383
        %385 = vadd.xlane.f32.xlu0 %v365
        %v386 = vpop.xlane.xlu0 %385
        %387 = vadd.xlane.f32.xlu0 %v366
        %v388 = vpop.xlane.xlu0 %387
        %389 = vadd.xlane.f32.xlu0 %v367
        %v390 = vpop.xlane.xlu0 %389
        %391 = vadd.xlane.f32.xlu0 %v368
        %v392 = vpop.xlane.xlu0 %391
        %393 = vadd.xlane.f32.xlu0 %v369
        %v394 = vpop.xlane.xlu0 %393
        %395 = vadd.xlane.f32.xlu0 %v370
        %v396 = vpop.xlane.xlu0 %395
        %397 = vadd.xlane.f32.xlu0 %v371
        %v398 = vpop.xlane.xlu0 %397
        %399 = vadd.xlane.f32.xlu0 %v372
        %v400 = vpop.xlane.xlu0 %399
        %401 = vadd.xlane.f32.xlu0 %v373
        %v402 = vpop.xlane.xlu0 %401
        %403 = vadd.xlane.f32.xlu0 %v374
        %v404 = vpop.xlane.xlu0 %403
        %405 = vadd.xlane.f32.xlu0 %v375
        %v406 = vpop.xlane.xlu0 %405
        %407 = vadd.xlane.f32.xlu0 %v376
        %v408 = vpop.xlane.xlu0 %407
        %409 = vadd.xlane.f32.xlu0 %v377
        %v410 = vpop.xlane.xlu0 %409
        %411 = vadd.xlane.f32.xlu0 %v378
        %v412 = vpop.xlane.xlu0 %411
        %v413 = vrcp.pop 128.0
        %v414 = vmul.f32 128.0, %v413
        %v415 = vsub.f32 1.0, %v414
        %v416 = vmul.f32 %v413, %v415
        %v417 = vadd.f32 %v413, %v416
        %vm418 = vweird.f32 %v413
        %v419 = vsel %vm418, %v413, %v417
        %v420 = vmul.f32 %v382, %v419
        %v421 = vmul.f32 %v384, %v419
        %v422 = vmul.f32 %v386, %v419
        %v423 = vmul.f32 %v388, %v419
        %v424 = vmul.f32 %v390, %v419
        %v425 = vmul.f32 %v392, %v419
        %v426 = vmul.f32 %v394, %v419
        %v427 = vmul.f32 %v396, %v419
        %v428 = vmul.f32 %v398, %v419
        %v429 = vmul.f32 %v400, %v419
        %v430 = vmul.f32 %v402, %v419
        %v431 = vmul.f32 %v404, %v419
        %v432 = vmul.f32 %v406, %v419
        %v433 = vmul.f32 %v408, %v419
        %v434 = vmul.f32 %v410, %v419
        %v435 = vmul.f32 %v412, %v419
        %v436 = vsub.f32 %v363, %v420
        %v437 = vsub.f32 %v364, %v421
        %v438 = vsub.f32 %v365, %v422
        %v439 = vsub.f32 %v366, %v423
        %v440 = vsub.f32 %v367, %v424
        %v441 = vsub.f32 %v368, %v425
        %v442 = vsub.f32 %v369, %v426
        %v443 = vsub.f32 %v370, %v427
        %v444 = vsub.f32 %v371, %v428
        %v445 = vsub.f32 %v372, %v429
        %v446 = vsub.f32 %v373, %v430
        %v447 = vsub.f32 %v374, %v431
        %v448 = vsub.f32 %v375, %v432
        %v449 = vsub.f32 %v376, %v433
        %v450 = vsub.f32 %v377, %v434
        %v451 = vsub.f32 %v378, %v435
        %v452 = vmul.f32 %v436, %v436
        %v453 = vmul.f32 %v437, %v437
        %v454 = vmul.f32 %v438, %v438
        %v455 = vmul.f32 %v439, %v439
        %v456 = vmul.f32 %v440, %v440
        %v457 = vmul.f32 %v441, %v441
        %v458 = vmul.f32 %v442, %v442
        %v459 = vmul.f32 %v443, %v443
        %v460 = vmul.f32 %v444, %v444
        %v461 = vmul.f32 %v445, %v445
        %v462 = vmul.f32 %v446, %v446
        %v463 = vmul.f32 %v447, %v447
        %v464 = vmul.f32 %v448, %v448
        %v465 = vmul.f32 %v449, %v449
        %v466 = vmul.f32 %v450, %v450
        %v467 = vmul.f32 %v451, %v451
        %468 = vadd.xlane.f32.xlu0 %v452
        %v469 = vpop.xlane.xlu0 %468
        %470 = vadd.xlane.f32.xlu0 %v453
        %v471 = vpop.xlane.xlu0 %470
        %472 = vadd.xlane.f32.xlu0 %v454
        %v473 = vpop.xlane.xlu0 %472
        %474 = vadd.xlane.f32.xlu0 %v455
        %v475 = vpop.xlane.xlu0 %474
        %476 = vadd.xlane.f32.xlu0 %v456
        %v477 = vpop.xlane.xlu0 %476
        %478 = vadd.xlane.f32.xlu0 %v457
        %v479 = vpop.xlane.xlu0 %478
        %480 = vadd.xlane.f32.xlu0 %v458
        %v481 = vpop.xlane.xlu0 %480
        %482 = vadd.xlane.f32.xlu0 %v459
        %v483 = vpop.xlane.xlu0 %482
        %484 = vadd.xlane.f32.xlu0 %v460
        %v485 = vpop.xlane.xlu0 %484
        %486 = vadd.xlane.f32.xlu0 %v461
        %v487 = vpop.xlane.xlu0 %486
        %488 = vadd.xlane.f32.xlu0 %v462
        %v489 = vpop.xlane.xlu0 %488
        %490 = vadd.xlane.f32.xlu0 %v463
        %v491 = vpop.xlane.xlu0 %490
        %492 = vadd.xlane.f32.xlu0 %v464
        %v493 = vpop.xlane.xlu0 %492
        %494 = vadd.xlane.f32.xlu0 %v465
        %v495 = vpop.xlane.xlu0 %494
        %496 = vadd.xlane.f32.xlu0 %v466
        %v497 = vpop.xlane.xlu0 %496
        %498 = vadd.xlane.f32.xlu0 %v467
        %v499 = vpop.xlane.xlu0 %498
        %v500 = vmul.f32 %v469, %v419
        %v501 = vmul.f32 %v471, %v419
        %v502 = vmul.f32 %v473, %v419
        %v503 = vmul.f32 %v475, %v419
        %v504 = vmul.f32 %v477, %v419
        %v505 = vmul.f32 %v479, %v419
        %v506 = vmul.f32 %v481, %v419
        %v507 = vmul.f32 %v483, %v419
        %v508 = vmul.f32 %v485, %v419
        %v509 = vmul.f32 %v487, %v419
        %v510 = vmul.f32 %v489, %v419
        %v511 = vmul.f32 %v491, %v419
        %v512 = vmul.f32 %v493, %v419
        %v513 = vmul.f32 %v495, %v419
        %v514 = vmul.f32 %v497, %v419
        %v515 = vmul.f32 %v499, %v419
        %v516 = vadd.f32 %v500, 1e-05
        %v517 = vadd.f32 %v501, 1e-05
        %v518 = vadd.f32 %v502, 1e-05
        %v519 = vadd.f32 %v503, 1e-05
        %v520 = vadd.f32 %v504, 1e-05
        %v521 = vadd.f32 %v505, 1e-05
        %v522 = vadd.f32 %v506, 1e-05
        %v523 = vadd.f32 %v507, 1e-05
        %v524 = vadd.f32 %v508, 1e-05
        %v525 = vadd.f32 %v509, 1e-05
        %v526 = vadd.f32 %v510, 1e-05
        %v527 = vadd.f32 %v511, 1e-05
        %v528 = vadd.f32 %v512, 1e-05
        %v529 = vadd.f32 %v513, 1e-05
        %v530 = vadd.f32 %v514, 1e-05
        %v531 = vadd.f32 %v515, 1e-05
        %v532 = vrsqrt.pop %v516
        %v533 = vmul.f32 %v532, %v516
        %v534 = vmul.f32 %v533, %v532
        %v535 = vmul.f32 0.5, %v534
        %v536 = vsub.f32 1.5, %v535
        %v537 = vmul.f32 %v532, %v536
        %vm538 = vweird.f32 %v516
        %vm539 = vweird.f32 %v532
        %vm540 = vmor %vm538, %vm539
        %v541 = vsel %vm540, %v532, %v537
        %v542 = vrsqrt.pop %v517
        %v543 = vmul.f32 %v542, %v517
        %v544 = vmul.f32 %v543, %v542
        %v545 = vmul.f32 0.5, %v544
        %v546 = vsub.f32 1.5, %v545
        %v547 = vmul.f32 %v542, %v546
        %vm548 = vweird.f32 %v517
        %vm549 = vweird.f32 %v542
        %vm550 = vmor %vm548, %vm549
        %v551 = vsel %vm550, %v542, %v547
        %v552 = vrsqrt.pop %v518
        %v553 = vmul.f32 %v552, %v518
        %v554 = vmul.f32 %v553, %v552
        %v555 = vmul.f32 0.5, %v554
        %v556 = vsub.f32 1.5, %v555
        %v557 = vmul.f32 %v552, %v556
        %vm558 = vweird.f32 %v518
        %vm559 = vweird.f32 %v552
        %vm560 = vmor %vm558, %vm559
        %v561 = vsel %vm560, %v552, %v557
        %v562 = vrsqrt.pop %v519
        %v563 = vmul.f32 %v562, %v519
        %v564 = vmul.f32 %v563, %v562
        %v565 = vmul.f32 0.5, %v564
        %v566 = vsub.f32 1.5, %v565
        %v567 = vmul.f32 %v562, %v566
        %vm568 = vweird.f32 %v519
        %vm569 = vweird.f32 %v562
        %vm570 = vmor %vm568, %vm569
        %v571 = vsel %vm570, %v562, %v567
        %v572 = vrsqrt.pop %v520
        %v573 = vmul.f32 %v572, %v520
        %v574 = vmul.f32 %v573, %v572
        %v575 = vmul.f32 0.5, %v574
        %v576 = vsub.f32 1.5, %v575
        %v577 = vmul.f32 %v572, %v576
        %vm578 = vweird.f32 %v520
        %vm579 = vweird.f32 %v572
        %vm580 = vmor %vm578, %vm579
        %v581 = vsel %vm580, %v572, %v577
        %v582 = vrsqrt.pop %v521
        %v583 = vmul.f32 %v582, %v521
        %v584 = vmul.f32 %v583, %v582
        %v585 = vmul.f32 0.5, %v584
        %v586 = vsub.f32 1.5, %v585
        %v587 = vmul.f32 %v582, %v586
        %vm588 = vweird.f32 %v521
        %vm589 = vweird.f32 %v582
        %vm590 = vmor %vm588, %vm589
        %v591 = vsel %vm590, %v582, %v587
        %v592 = vrsqrt.pop %v522
        %v593 = vmul.f32 %v592, %v522
        %v594 = vmul.f32 %v593, %v592
        %v595 = vmul.f32 0.5, %v594
        %v596 = vsub.f32 1.5, %v595
        %v597 = vmul.f32 %v592, %v596
        %vm598 = vweird.f32 %v522
        %vm599 = vweird.f32 %v592
        %vm600 = vmor %vm598, %vm599
        %v601 = vsel %vm600, %v592, %v597
        %v602 = vrsqrt.pop %v523
        %v603 = vmul.f32 %v602, %v523
        %v604 = vmul.f32 %v603, %v602
        %v605 = vmul.f32 0.5, %v604
        %v606 = vsub.f32 1.5, %v605
        %v607 = vmul.f32 %v602, %v606
        %vm608 = vweird.f32 %v523
        %vm609 = vweird.f32 %v602
        %vm610 = vmor %vm608, %vm609
        %v611 = vsel %vm610, %v602, %v607
        %v612 = vrsqrt.pop %v524
        %v613 = vmul.f32 %v612, %v524
        %v614 = vmul.f32 %v613, %v612
        %v615 = vmul.f32 0.5, %v614
        %v616 = vsub.f32 1.5, %v615
        %v617 = vmul.f32 %v612, %v616
        %vm618 = vweird.f32 %v524
        %vm619 = vweird.f32 %v612
        %vm620 = vmor %vm618, %vm619
        %v621 = vsel %vm620, %v612, %v617
        %v622 = vrsqrt.pop %v525
        %v623 = vmul.f32 %v622, %v525
        %v624 = vmul.f32 %v623, %v622
        %v625 = vmul.f32 0.5, %v624
        %v626 = vsub.f32 1.5, %v625
        %v627 = vmul.f32 %v622, %v626
        %vm628 = vweird.f32 %v525
        %vm629 = vweird.f32 %v622
        %vm630 = vmor %vm628, %vm629
        %v631 = vsel %vm630, %v622, %v627
        %v632 = vrsqrt.pop %v526
        %v633 = vmul.f32 %v632, %v526
        %v634 = vmul.f32 %v633, %v632
        %v635 = vmul.f32 0.5, %v634
        %v636 = vsub.f32 1.5, %v635
        %v637 = vmul.f32 %v632, %v636
        %vm638 = vweird.f32 %v526
        %vm639 = vweird.f32 %v632
        %vm640 = vmor %vm638, %vm639
        %v641 = vsel %vm640, %v632, %v637
        %v642 = vrsqrt.pop %v527
        %v643 = vmul.f32 %v642, %v527
        %v644 = vmul.f32 %v643, %v642
        %v645 = vmul.f32 0.5, %v644
        %v646 = vsub.f32 1.5, %v645
        %v647 = vmul.f32 %v642, %v646
        %vm648 = vweird.f32 %v527
        %vm649 = vweird.f32 %v642
        %vm650 = vmor %vm648, %vm649
        %v651 = vsel %vm650, %v642, %v647
        %v652 = vrsqrt.pop %v528
        %v653 = vmul.f32 %v652, %v528
        %v654 = vmul.f32 %v653, %v652
        %v655 = vmul.f32 0.5, %v654
        %v656 = vsub.f32 1.5, %v655
        %v657 = vmul.f32 %v652, %v656
        %vm658 = vweird.f32 %v528
        %vm659 = vweird.f32 %v652
        %vm660 = vmor %vm658, %vm659
        %v661 = vsel %vm660, %v652, %v657
        %v662 = vrsqrt.pop %v529
        %v663 = vmul.f32 %v662, %v529
        %v664 = vmul.f32 %v663, %v662
        %v665 = vmul.f32 0.5, %v664
        %v666 = vsub.f32 1.5, %v665
        %v667 = vmul.f32 %v662, %v666
        %vm668 = vweird.f32 %v529
        %vm669 = vweird.f32 %v662
        %vm670 = vmor %vm668, %vm669
        %v671 = vsel %vm670, %v662, %v667
        %v672 = vrsqrt.pop %v530
        %v673 = vmul.f32 %v672, %v530
        %v674 = vmul.f32 %v673, %v672
        %v675 = vmul.f32 0.5, %v674
        %v676 = vsub.f32 1.5, %v675
        %v677 = vmul.f32 %v672, %v676
        %vm678 = vweird.f32 %v530
        %vm679 = vweird.f32 %v672
        %vm680 = vmor %vm678, %vm679
        %v681 = vsel %vm680, %v672, %v677
        %v682 = vrsqrt.pop %v531
        %v683 = vmul.f32 %v682, %v531
        %v684 = vmul.f32 %v683, %v682
        %v685 = vmul.f32 0.5, %v684
        %v686 = vsub.f32 1.5, %v685
        %v687 = vmul.f32 %v682, %v686
        %vm688 = vweird.f32 %v531
        %vm689 = vweird.f32 %v682
        %vm690 = vmor %vm688, %vm689
        %v691 = vsel %vm690, %v682, %v687
        %v692 = vmul.f32 %v436, %v541
        %v693 = vmul.f32 %v437, %v551
        %v694 = vmul.f32 %v438, %v561
        %v695 = vmul.f32 %v439, %v571
        %v696 = vmul.f32 %v440, %v581
        %v697 = vmul.f32 %v441, %v591
        %v698 = vmul.f32 %v442, %v601
        %v699 = vmul.f32 %v443, %v611
        %v700 = vmul.f32 %v444, %v621
        %v701 = vmul.f32 %v445, %v631
        %v702 = vmul.f32 %v446, %v641
        %v703 = vmul.f32 %v447, %v651
        %v704 = vmul.f32 %v448, %v661
        %v705 = vmul.f32 %v449, %v671
        %v706 = vmul.f32 %v450, %v681
        %v707 = vmul.f32 %v451, %v691
        %v709 = vperm.slane %v379, 0
        %v711 = vmul.f32 %v692, %v709
        %v712 = vmul.f32 %v693, %v709
        %v713 = vmul.f32 %v694, %v709
        %v714 = vmul.f32 %v695, %v709
        %v715 = vmul.f32 %v696, %v709
        %v716 = vmul.f32 %v697, %v709
        %v717 = vmul.f32 %v698, %v709
        %v718 = vmul.f32 %v699, %v709
        %v719 = vmul.f32 %v700, %v709
        %v720 = vmul.f32 %v701, %v709
        %v721 = vmul.f32 %v702, %v709
        %v722 = vmul.f32 %v703, %v709
        %v723 = vmul.f32 %v704, %v709
        %v724 = vmul.f32 %v705, %v709
        %v725 = vmul.f32 %v706, %v709
        %v726 = vmul.f32 %v707, %v709
        %v728 = vperm.slane %v380, 0
        %v730 = vadd.f32 %v711, %v728
        %v731 = vadd.f32 %v712, %v728
        %v732 = vadd.f32 %v713, %v728
        %v733 = vadd.f32 %v714, %v728
        %v734 = vadd.f32 %v715, %v728
        %v735 = vadd.f32 %v716, %v728
        %v736 = vadd.f32 %v717, %v728
        %v737 = vadd.f32 %v718, %v728
        %v738 = vadd.f32 %v719, %v728
        %v739 = vadd.f32 %v720, %v728
        %v740 = vadd.f32 %v721, %v728
        %v741 = vadd.f32 %v722, %v728
        %v742 = vadd.f32 %v723, %v728
        %v743 = vadd.f32 %v724, %v728
        %v744 = vadd.f32 %v725, %v728
        %v745 = vadd.f32 %v726, %v728
        %v746 = vld [vmem:[#allocation7] sm:$0xff]
        %v747 = vld [vmem:[#allocation7 + $0x8] sm:$0xff]
        %v748 = vld [vmem:[#allocation7 + $0x10] sm:$0xff]
        %v749 = vld [vmem:[#allocation7 + $0x18] sm:$0xff]
        %v750 = vld [vmem:[#allocation7 + $0x20] sm:$0xff]
        %v751 = vld [vmem:[#allocation7 + $0x28] sm:$0xff]
        %v752 = vld [vmem:[#allocation7 + $0x30] sm:$0xff]
        %v753 = vld [vmem:[#allocation7 + $0x38] sm:$0xff]
        %v754 = vld [vmem:[#allocation7 + $0x40] sm:$0xff]
        %v755 = vld [vmem:[#allocation7 + $0x48] sm:$0xff]
        %v756 = vld [vmem:[#allocation7 + $0x50] sm:$0xff]
        %v757 = vld [vmem:[#allocation7 + $0x58] sm:$0xff]
        %v758 = vld [vmem:[#allocation7 + $0x60] sm:$0xff]
        %v759 = vld [vmem:[#allocation7 + $0x68] sm:$0xff]
        %v760 = vld [vmem:[#allocation7 + $0x70] sm:$0xff]
        %v761 = vld [vmem:[#allocation7 + $0x78] sm:$0xff]
        %v762 = vld [vmem:[#allocation7 + $0x80] sm:$0xff]
        %v763 = vld [vmem:[#allocation7 + $0x88] sm:$0xff]
        %v764 = vld [vmem:[#allocation7 + $0x90] sm:$0xff]
        %v765 = vld [vmem:[#allocation7 + $0x98] sm:$0xff]
        %v766 = vld [vmem:[#allocation7 + $0xa0] sm:$0xff]
        %v767 = vld [vmem:[#allocation7 + $0xa8] sm:$0xff]
        %v768 = vld [vmem:[#allocation7 + $0xb0] sm:$0xff]
        %v769 = vld [vmem:[#allocation7 + $0xb8] sm:$0xff]
        %v770 = vld [vmem:[#allocation7 + $0xc0] sm:$0xff]
        %v771 = vld [vmem:[#allocation7 + $0xc8] sm:$0xff]
        %v772 = vld [vmem:[#allocation7 + $0xd0] sm:$0xff]
        %v773 = vld [vmem:[#allocation7 + $0xd8] sm:$0xff]
        %v774 = vld [vmem:[#allocation7 + $0xe0] sm:$0xff]
        %v775 = vld [vmem:[#allocation7 + $0xe8] sm:$0xff]
        %v776 = vld [vmem:[#allocation7 + $0xf0] sm:$0xff]
        %v777 = vld [vmem:[#allocation7 + $0xf8] sm:$0xff]
        %v778 = vld [vmem:[#allocation7 + $0x100] sm:$0xff]
        %v779 = vld [vmem:[#allocation7 + $0x108] sm:$0xff]
        %v780 = vld [vmem:[#allocation7 + $0x110] sm:$0xff]
        %v781 = vld [vmem:[#allocation7 + $0x118] sm:$0xff]
        %v782 = vld [vmem:[#allocation7 + $0x120] sm:$0xff]
        %v783 = vld [vmem:[#allocation7 + $0x128] sm:$0xff]
        %v784 = vld [vmem:[#allocation7 + $0x130] sm:$0xff]
        %v785 = vld [vmem:[#allocation7 + $0x138] sm:$0xff]
        %v786 = vld [vmem:[#allocation7 + $0x140] sm:$0xff]
        %v787 = vld [vmem:[#allocation7 + $0x148] sm:$0xff]
        %v788 = vld [vmem:[#allocation7 + $0x150] sm:$0xff]
        %v789 = vld [vmem:[#allocation7 + $0x158] sm:$0xff]
        %v790 = vld [vmem:[#allocation7 + $0x160] sm:$0xff]
        %v791 = vld [vmem:[#allocation7 + $0x168] sm:$0xff]
        %v792 = vld [vmem:[#allocation7 + $0x170] sm:$0xff]
        %v793 = vld [vmem:[#allocation7 + $0x178] sm:$0xff]
        %v794 = vld [vmem:[%s4] sm:$0x7]
        %v796 = vperm.slane %v794, 0
        %v797 = vperm.slane %v794, 1
        %v798 = vperm.slane %v794, 2
        %802 = vmatpush.msra.mxu0 %v791
        %803 = vmatpush.msra.mxu0 %v788
        %804 = vmatpush.msra.mxu0 %v785
        %805 = vmatpush.msra.mxu0 %v782
        %806 = vmatpush.msra.mxu0 %v779
        %807 = vmatpush.msra.mxu0 %v776
        %808 = vmatpush.msra.mxu0 %v773
        %809 = vmatpush.msra.mxu0 %v770
        %810 = vmatpush.msra.mxu0 %v767
        %811 = vmatpush.msra.mxu0 %v764
        %812 = vmatpush.msra.mxu0 %v761
        %813 = vmatpush.msra.mxu0 %v758
        %814 = vmatpush.msra.mxu0 %v755
        %815 = vmatpush.msra.mxu0 %v752
        %816 = vmatpush.msra.mxu0 %v749
        %817 = vmatpush.msra.mxu0 %v746
        %818 = vmatmul.f32.gmra.mxu0 %v730
        %v819 = vpop.f32.mrf.mxu0
        %v820 = vadd.f32 %v796, %v819
        %821 = vmatmul.f32.gmra.mxu0 %v731
        %v822 = vpop.f32.mrf.mxu0
        %v823 = vadd.f32 %v796, %v822
        %824 = vmatmul.f32.gmra.mxu0 %v732
        %v825 = vpop.f32.mrf.mxu0
        %v826 = vadd.f32 %v796, %v825
        %827 = vmatmul.f32.gmra.mxu0 %v733
        %v828 = vpop.f32.mrf.mxu0
        %v829 = vadd.f32 %v796, %v828
        %830 = vmatmul.f32.gmra.mxu0 %v734
        %v831 = vpop.f32.mrf.mxu0
        %v832 = vadd.f32 %v796, %v831
        %833 = vmatmul.f32.gmra.mxu0 %v735
        %v834 = vpop.f32.mrf.mxu0
        %v835 = vadd.f32 %v796, %v834
        %836 = vmatmul.f32.gmra.mxu0 %v736
        %v837 = vpop.f32.mrf.mxu0
        %v838 = vadd.f32 %v796, %v837
        %839 = vmatmul.f32.gmra.mxu0 %v737
        %v840 = vpop.f32.mrf.mxu0
        %v841 = vadd.f32 %v796, %v840
        %842 = vmatmul.f32.gmra.mxu0 %v738
        %v843 = vpop.f32.mrf.mxu0
        %v844 = vadd.f32 %v796, %v843
        %845 = vmatmul.f32.gmra.mxu0 %v739
        %v846 = vpop.f32.mrf.mxu0
        %v847 = vadd.f32 %v796, %v846
        %848 = vmatmul.f32.gmra.mxu0 %v740
        %v849 = vpop.f32.mrf.mxu0
        %v850 = vadd.f32 %v796, %v849
        %851 = vmatmul.f32.gmra.mxu0 %v741
        %v852 = vpop.f32.mrf.mxu0
        %v853 = vadd.f32 %v796, %v852
        %854 = vmatmul.f32.gmra.mxu0 %v742
        %v855 = vpop.f32.mrf.mxu0
        %v856 = vadd.f32 %v796, %v855
        %857 = vmatmul.f32.gmra.mxu0 %v743
        %v858 = vpop.f32.mrf.mxu0
        %v859 = vadd.f32 %v796, %v858
        %860 = vmatmul.f32.gmra.mxu0 %v744
        %v861 = vpop.f32.mrf.mxu0
        %v862 = vadd.f32 %v796, %v861
        %863 = vmatmul.f32.gmra.mxu0 %v745
        %v864 = vpop.f32.mrf.mxu0
        %v865 = vadd.f32 %v796, %v864
        %866 = vdwg.mxu0
        %867 = vmatpush.msra.mxu0 %v792
        %868 = vmatpush.msra.mxu0 %v789
        %869 = vmatpush.msra.mxu0 %v786
        %870 = vmatpush.msra.mxu0 %v783
        %871 = vmatpush.msra.mxu0 %v780
        %872 = vmatpush.msra.mxu0 %v777
        %873 = vmatpush.msra.mxu0 %v774
        %874 = vmatpush.msra.mxu0 %v771
        %875 = vmatpush.msra.mxu0 %v768
        %876 = vmatpush.msra.mxu0 %v765
        %877 = vmatpush.msra.mxu0 %v762
        %878 = vmatpush.msra.mxu0 %v759
        %879 = vmatpush.msra.mxu0 %v756
        %880 = vmatpush.msra.mxu0 %v753
        %881 = vmatpush.msra.mxu0 %v750
        %882 = vmatpush.msra.mxu0 %v747
        %883 = vmatmul.f32.gmra.mxu0 %v730
        %v884 = vpop.f32.mrf.mxu0
        %v885 = vadd.f32 %v797, %v884
        %886 = vmatmul.f32.gmra.mxu0 %v731
        %v887 = vpop.f32.mrf.mxu0
        %v888 = vadd.f32 %v797, %v887
        %889 = vmatmul.f32.gmra.mxu0 %v732
        %v890 = vpop.f32.mrf.mxu0
        %v891 = vadd.f32 %v797, %v890
        %892 = vmatmul.f32.gmra.mxu0 %v733
        %v893 = vpop.f32.mrf.mxu0
        %v894 = vadd.f32 %v797, %v893
        %895 = vmatmul.f32.gmra.mxu0 %v734
        %v896 = vpop.f32.mrf.mxu0
        %v897 = vadd.f32 %v797, %v896
        %898 = vmatmul.f32.gmra.mxu0 %v735
        %v899 = vpop.f32.mrf.mxu0
        %v900 = vadd.f32 %v797, %v899
        %901 = vmatmul.f32.gmra.mxu0 %v736
        %v902 = vpop.f32.mrf.mxu0
        %v903 = vadd.f32 %v797, %v902
        %904 = vmatmul.f32.gmra.mxu0 %v737
        %v905 = vpop.f32.mrf.mxu0
        %v906 = vadd.f32 %v797, %v905
        %907 = vmatmul.f32.gmra.mxu0 %v738
        %v908 = vpop.f32.mrf.mxu0
        %v909 = vadd.f32 %v797, %v908
        %910 = vmatmul.f32.gmra.mxu0 %v739
        %v911 = vpop.f32.mrf.mxu0
        %v912 = vadd.f32 %v797, %v911
        %913 = vmatmul.f32.gmra.mxu0 %v740
        %v914 = vpop.f32.mrf.mxu0
        %v915 = vadd.f32 %v797, %v914
        %916 = vmatmul.f32.gmra.mxu0 %v741
        %v917 = vpop.f32.mrf.mxu0
        %v918 = vadd.f32 %v797, %v917
        %919 = vmatmul.f32.gmra.mxu0 %v742
        %v920 = vpop.f32.mrf.mxu0
        %v921 = vadd.f32 %v797, %v920
        %922 = vmatmul.f32.gmra.mxu0 %v743
        %v923 = vpop.f32.mrf.mxu0
        %v924 = vadd.f32 %v797, %v923
        %925 = vmatmul.f32.gmra.mxu0 %v744
        %v926 = vpop.f32.mrf.mxu0
        %v927 = vadd.f32 %v797, %v926
        %928 = vmatmul.f32.gmra.mxu0 %v745
        %v929 = vpop.f32.mrf.mxu0
        %v930 = vadd.f32 %v797, %v929
        %931 = vdwg.mxu0
        %932 = vmatpush.msra.mxu0 %v793
        %933 = vmatpush.msra.mxu0 %v790
        %934 = vmatpush.msra.mxu0 %v787
        %935 = vmatpush.msra.mxu0 %v784
        %936 = vmatpush.msra.mxu0 %v781
        %937 = vmatpush.msra.mxu0 %v778
        %938 = vmatpush.msra.mxu0 %v775
        %939 = vmatpush.msra.mxu0 %v772
        %940 = vmatpush.msra.mxu0 %v769
        %941 = vmatpush.msra.mxu0 %v766
        %942 = vmatpush.msra.mxu0 %v763
        %943 = vmatpush.msra.mxu0 %v760
        %944 = vmatpush.msra.mxu0 %v757
        %945 = vmatpush.msra.mxu0 %v754
        %946 = vmatpush.msra.mxu0 %v751
        %947 = vmatpush.msra.mxu0 %v748
        %948 = vmatmul.f32.gmra.mxu0 %v730
        %v949 = vpop.f32.mrf.mxu0
        %v950 = vadd.f32 %v798, %v949
        %951 = vmatmul.f32.gmra.mxu0 %v731
        %v952 = vpop.f32.mrf.mxu0
        %v953 = vadd.f32 %v798, %v952
        %954 = vmatmul.f32.gmra.mxu0 %v732
        %v955 = vpop.f32.mrf.mxu0
        %v956 = vadd.f32 %v798, %v955
        %957 = vmatmul.f32.gmra.mxu0 %v733
        %v958 = vpop.f32.mrf.mxu0
        %v959 = vadd.f32 %v798, %v958
        %960 = vmatmul.f32.gmra.mxu0 %v734
        %v961 = vpop.f32.mrf.mxu0
        %v962 = vadd.f32 %v798, %v961
        %963 = vmatmul.f32.gmra.mxu0 %v735
        %v964 = vpop.f32.mrf.mxu0
        %v965 = vadd.f32 %v798, %v964
        %966 = vmatmul.f32.gmra.mxu0 %v736
        %v967 = vpop.f32.mrf.mxu0
        %v968 = vadd.f32 %v798, %v967
        %969 = vmatmul.f32.gmra.mxu0 %v737
        %v970 = vpop.f32.mrf.mxu0
        %v971 = vadd.f32 %v798, %v970
        %972 = vmatmul.f32.gmra.mxu0 %v738
        %v973 = vpop.f32.mrf.mxu0
        %v974 = vadd.f32 %v798, %v973
        %975 = vmatmul.f32.gmra.mxu0 %v739
        %v976 = vpop.f32.mrf.mxu0
        %v977 = vadd.f32 %v798, %v976
        %978 = vmatmul.f32.gmra.mxu0 %v740
        %v979 = vpop.f32.mrf.mxu0
        %v980 = vadd.f32 %v798, %v979
        %981 = vmatmul.f32.gmra.mxu0 %v741
        %v982 = vpop.f32.mrf.mxu0
        %v983 = vadd.f32 %v798, %v982
        %984 = vmatmul.f32.gmra.mxu0 %v742
        %v985 = vpop.f32.mrf.mxu0
        %v986 = vadd.f32 %v798, %v985
        %987 = vmatmul.f32.gmra.mxu0 %v743
        %v988 = vpop.f32.mrf.mxu0
        %v989 = vadd.f32 %v798, %v988
        %990 = vmatmul.f32.gmra.mxu0 %v744
        %v991 = vpop.f32.mrf.mxu0
        %v992 = vadd.f32 %v798, %v991
        %993 = vmatmul.f32.gmra.mxu0 %v745
        %v994 = vpop.f32.mrf.mxu0
        %v995 = vadd.f32 %v798, %v994
        %996 = vdwg.mxu0
        %1013 = vrot.lane.b32.xlu0 %v820, 96
        %v1014 = vpop.permute.xlu0 %1013
        %1015 = vrot.lane.b32.xlu0 %v823, 96
        %v1016 = vpop.permute.xlu0 %1015
        %1017 = vrot.lane.b32.xlu0 %v826, 96
        %v1018 = vpop.permute.xlu0 %1017
        %1019 = vrot.lane.b32.xlu0 %v829, 96
        %v1020 = vpop.permute.xlu0 %1019
        %1021 = vrot.lane.b32.xlu0 %v832, 96
        %v1022 = vpop.permute.xlu0 %1021
        %1023 = vrot.lane.b32.xlu0 %v835, 96
        %v1024 = vpop.permute.xlu0 %1023
        %1025 = vrot.lane.b32.xlu0 %v838, 96
        %v1026 = vpop.permute.xlu0 %1025
        %1027 = vrot.lane.b32.xlu0 %v841, 96
        %v1028 = vpop.permute.xlu0 %1027
        %1029 = vrot.lane.b32.xlu0 %v844, 96
        %v1030 = vpop.permute.xlu0 %1029
        %1031 = vrot.lane.b32.xlu0 %v847, 96
        %v1032 = vpop.permute.xlu0 %1031
        %1033 = vrot.lane.b32.xlu0 %v850, 96
        %v1034 = vpop.permute.xlu0 %1033
        %1035 = vrot.lane.b32.xlu0 %v853, 96
        %v1036 = vpop.permute.xlu0 %1035
        %1037 = vrot.lane.b32.xlu0 %v856, 96
        %v1038 = vpop.permute.xlu0 %1037
        %1039 = vrot.lane.b32.xlu0 %v859, 96
        %v1040 = vpop.permute.xlu0 %1039
        %1041 = vrot.lane.b32.xlu0 %v862, 96
        %v1042 = vpop.permute.xlu0 %1041
        %1043 = vrot.lane.b32.xlu0 %v865, 96
        %v1044 = vpop.permute.xlu0 %1043
        %1061 = vrot.lane.b32.xlu0 %v820, 64
        %v1062 = vpop.permute.xlu0 %1061
        %1063 = vrot.lane.b32.xlu0 %v823, 64
        %v1064 = vpop.permute.xlu0 %1063
        %1065 = vrot.lane.b32.xlu0 %v826, 64
        %v1066 = vpop.permute.xlu0 %1065
        %1067 = vrot.lane.b32.xlu0 %v829, 64
        %v1068 = vpop.permute.xlu0 %1067
        %1069 = vrot.lane.b32.xlu0 %v832, 64
        %v1070 = vpop.permute.xlu0 %1069
        %1071 = vrot.lane.b32.xlu0 %v835, 64
        %v1072 = vpop.permute.xlu0 %1071
        %1073 = vrot.lane.b32.xlu0 %v838, 64
        %v1074 = vpop.permute.xlu0 %1073
        %1075 = vrot.lane.b32.xlu0 %v841, 64
        %v1076 = vpop.permute.xlu0 %1075
        %1077 = vrot.lane.b32.xlu0 %v844, 64
        %v1078 = vpop.permute.xlu0 %1077
        %1079 = vrot.lane.b32.xlu0 %v847, 64
        %v1080 = vpop.permute.xlu0 %1079
        %1081 = vrot.lane.b32.xlu0 %v850, 64
        %v1082 = vpop.permute.xlu0 %1081
        %1083 = vrot.lane.b32.xlu0 %v853, 64
        %v1084 = vpop.permute.xlu0 %1083
        %1085 = vrot.lane.b32.xlu0 %v856, 64
        %v1086 = vpop.permute.xlu0 %1085
        %1087 = vrot.lane.b32.xlu0 %v859, 64
        %v1088 = vpop.permute.xlu0 %1087
        %1089 = vrot.lane.b32.xlu0 %v862, 64
        %v1090 = vpop.permute.xlu0 %1089
        %1091 = vrot.lane.b32.xlu0 %v865, 64
        %v1092 = vpop.permute.xlu0 %1091
        %1109 = vrot.lane.b32.xlu0 %v820, 32
        %v1110 = vpop.permute.xlu0 %1109
        %1111 = vrot.lane.b32.xlu0 %v823, 32
        %v1112 = vpop.permute.xlu0 %1111
        %1113 = vrot.lane.b32.xlu0 %v826, 32
        %v1114 = vpop.permute.xlu0 %1113
        %1115 = vrot.lane.b32.xlu0 %v829, 32
        %v1116 = vpop.permute.xlu0 %1115
        %1117 = vrot.lane.b32.xlu0 %v832, 32
        %v1118 = vpop.permute.xlu0 %1117
        %1119 = vrot.lane.b32.xlu0 %v835, 32
        %v1120 = vpop.permute.xlu0 %1119
        %1121 = vrot.lane.b32.xlu0 %v838, 32
        %v1122 = vpop.permute.xlu0 %1121
        %1123 = vrot.lane.b32.xlu0 %v841, 32
        %v1124 = vpop.permute.xlu0 %1123
        %1125 = vrot.lane.b32.xlu0 %v844, 32
        %v1126 = vpop.permute.xlu0 %1125
        %1127 = vrot.lane.b32.xlu0 %v847, 32
        %v1128 = vpop.permute.xlu0 %1127
        %1129 = vrot.lane.b32.xlu0 %v850, 32
        %v1130 = vpop.permute.xlu0 %1129
        %1131 = vrot.lane.b32.xlu0 %v853, 32
        %v1132 = vpop.permute.xlu0 %1131
        %1133 = vrot.lane.b32.xlu0 %v856, 32
        %v1134 = vpop.permute.xlu0 %1133
        %1135 = vrot.lane.b32.xlu0 %v859, 32
        %v1136 = vpop.permute.xlu0 %1135
        %1137 = vrot.lane.b32.xlu0 %v862, 32
        %v1138 = vpop.permute.xlu0 %1137
        %1139 = vrot.lane.b32.xlu0 %v865, 32
        %v1140 = vpop.permute.xlu0 %1139
        %1173 = vrot.lane.b32.xlu0 %v885, 96
        %v1174 = vpop.permute.xlu0 %1173
        %1175 = vrot.lane.b32.xlu0 %v888, 96
        %v1176 = vpop.permute.xlu0 %1175
        %1177 = vrot.lane.b32.xlu0 %v891, 96
        %v1178 = vpop.permute.xlu0 %1177
        %1179 = vrot.lane.b32.xlu0 %v894, 96
        %v1180 = vpop.permute.xlu0 %1179
        %1181 = vrot.lane.b32.xlu0 %v897, 96
        %v1182 = vpop.permute.xlu0 %1181
        %1183 = vrot.lane.b32.xlu0 %v900, 96
        %v1184 = vpop.permute.xlu0 %1183
        %1185 = vrot.lane.b32.xlu0 %v903, 96
        %v1186 = vpop.permute.xlu0 %1185
        %1187 = vrot.lane.b32.xlu0 %v906, 96
        %v1188 = vpop.permute.xlu0 %1187
        %1189 = vrot.lane.b32.xlu0 %v909, 96
        %v1190 = vpop.permute.xlu0 %1189
        %1191 = vrot.lane.b32.xlu0 %v912, 96
        %v1192 = vpop.permute.xlu0 %1191
        %1193 = vrot.lane.b32.xlu0 %v915, 96
        %v1194 = vpop.permute.xlu0 %1193
        %1195 = vrot.lane.b32.xlu0 %v918, 96
        %v1196 = vpop.permute.xlu0 %1195
        %1197 = vrot.lane.b32.xlu0 %v921, 96
        %v1198 = vpop.permute.xlu0 %1197
        %1199 = vrot.lane.b32.xlu0 %v924, 96
        %v1200 = vpop.permute.xlu0 %1199
        %1201 = vrot.lane.b32.xlu0 %v927, 96
        %v1202 = vpop.permute.xlu0 %1201
        %1203 = vrot.lane.b32.xlu0 %v930, 96
        %v1204 = vpop.permute.xlu0 %1203
        %1205 = vrot.lane.b32.xlu0 %v885, 64
        %v1206 = vpop.permute.xlu0 %1205
        %1207 = vrot.lane.b32.xlu0 %v888, 64
        %v1208 = vpop.permute.xlu0 %1207
        %1209 = vrot.lane.b32.xlu0 %v891, 64
        %v1210 = vpop.permute.xlu0 %1209
        %1211 = vrot.lane.b32.xlu0 %v894, 64
        %v1212 = vpop.permute.xlu0 %1211
        %1213 = vrot.lane.b32.xlu0 %v897, 64
        %v1214 = vpop.permute.xlu0 %1213
        %1215 = vrot.lane.b32.xlu0 %v900, 64
        %v1216 = vpop.permute.xlu0 %1215
        %1217 = vrot.lane.b32.xlu0 %v903, 64
        %v1218 = vpop.permute.xlu0 %1217
        %1219 = vrot.lane.b32.xlu0 %v906, 64
        %v1220 = vpop.permute.xlu0 %1219
        %1221 = vrot.lane.b32.xlu0 %v909, 64
        %v1222 = vpop.permute.xlu0 %1221
        %1223 = vrot.lane.b32.xlu0 %v912, 64
        %v1224 = vpop.permute.xlu0 %1223
        %1225 = vrot.lane.b32.xlu0 %v915, 64
        %v1226 = vpop.permute.xlu0 %1225
        %1227 = vrot.lane.b32.xlu0 %v918, 64
        %v1228 = vpop.permute.xlu0 %1227
        %1229 = vrot.lane.b32.xlu0 %v921, 64
        %v1230 = vpop.permute.xlu0 %1229
        %1231 = vrot.lane.b32.xlu0 %v924, 64
        %v1232 = vpop.permute.xlu0 %1231
        %1233 = vrot.lane.b32.xlu0 %v927, 64
        %v1234 = vpop.permute.xlu0 %1233
        %1235 = vrot.lane.b32.xlu0 %v930, 64
        %v1236 = vpop.permute.xlu0 %1235
        %1237 = vrot.lane.b32.xlu0 %v885, 32
        %v1238 = vpop.permute.xlu0 %1237
        %1239 = vrot.lane.b32.xlu0 %v888, 32
        %v1240 = vpop.permute.xlu0 %1239
        %1241 = vrot.lane.b32.xlu0 %v891, 32
        %v1242 = vpop.permute.xlu0 %1241
        %1243 = vrot.lane.b32.xlu0 %v894, 32
        %v1244 = vpop.permute.xlu0 %1243
        %1245 = vrot.lane.b32.xlu0 %v897, 32
        %v1246 = vpop.permute.xlu0 %1245
        %1247 = vrot.lane.b32.xlu0 %v900, 32
        %v1248 = vpop.permute.xlu0 %1247
        %1249 = vrot.lane.b32.xlu0 %v903, 32
        %v1250 = vpop.permute.xlu0 %1249
        %1251 = vrot.lane.b32.xlu0 %v906, 32
        %v1252 = vpop.permute.xlu0 %1251
        %1253 = vrot.lane.b32.xlu0 %v909, 32
        %v1254 = vpop.permute.xlu0 %1253
        %1255 = vrot.lane.b32.xlu0 %v912, 32
        %v1256 = vpop.permute.xlu0 %1255
        %1257 = vrot.lane.b32.xlu0 %v915, 32
        %v1258 = vpop.permute.xlu0 %1257
        %1259 = vrot.lane.b32.xlu0 %v918, 32
        %v1260 = vpop.permute.xlu0 %1259
        %1261 = vrot.lane.b32.xlu0 %v921, 32
        %v1262 = vpop.permute.xlu0 %1261
        %1263 = vrot.lane.b32.xlu0 %v924, 32
        %v1264 = vpop.permute.xlu0 %1263
        %1265 = vrot.lane.b32.xlu0 %v927, 32
        %v1266 = vpop.permute.xlu0 %1265
        %1267 = vrot.lane.b32.xlu0 %v930, 32
        %v1268 = vpop.permute.xlu0 %1267
        %1285 = vrot.lane.b32.xlu0 %v950, 96
        %v1286 = vpop.permute.xlu0 %1285
        %1287 = vrot.lane.b32.xlu0 %v953, 96
        %v1288 = vpop.permute.xlu0 %1287
        %1289 = vrot.lane.b32.xlu0 %v956, 96
        %v1290 = vpop.permute.xlu0 %1289
        %1291 = vrot.lane.b32.xlu0 %v959, 96
        %v1292 = vpop.permute.xlu0 %1291
        %1293 = vrot.lane.b32.xlu0 %v962, 96
        %v1294 = vpop.permute.xlu0 %1293
        %1295 = vrot.lane.b32.xlu0 %v965, 96
        %v1296 = vpop.permute.xlu0 %1295
        %1297 = vrot.lane.b32.xlu0 %v968, 96
        %v1298 = vpop.permute.xlu0 %1297
        %1299 = vrot.lane.b32.xlu0 %v971, 96
        %v1300 = vpop.permute.xlu0 %1299
        %1301 = vrot.lane.b32.xlu0 %v974, 96
        %v1302 = vpop.permute.xlu0 %1301
        %1303 = vrot.lane.b32.xlu0 %v977, 96
        %v1304 = vpop.permute.xlu0 %1303
        %1305 = vrot.lane.b32.xlu0 %v980, 96
        %v1306 = vpop.permute.xlu0 %1305
        %1307 = vrot.lane.b32.xlu0 %v983, 96
        %v1308 = vpop.permute.xlu0 %1307
        %1309 = vrot.lane.b32.xlu0 %v986, 96
        %v1310 = vpop.permute.xlu0 %1309
        %1311 = vrot.lane.b32.xlu0 %v989, 96
        %v1312 = vpop.permute.xlu0 %1311
        %1313 = vrot.lane.b32.xlu0 %v992, 96
        %v1314 = vpop.permute.xlu0 %1313
        %1315 = vrot.lane.b32.xlu0 %v995, 96
        %v1316 = vpop.permute.xlu0 %1315
        %1333 = vrot.lane.b32.xlu0 %v950, 64
        %v1334 = vpop.permute.xlu0 %1333
        %1335 = vrot.lane.b32.xlu0 %v953, 64
        %v1336 = vpop.permute.xlu0 %1335
        %1337 = vrot.lane.b32.xlu0 %v956, 64
        %v1338 = vpop.permute.xlu0 %1337
        %1339 = vrot.lane.b32.xlu0 %v959, 64
        %v1340 = vpop.permute.xlu0 %1339
        %1341 = vrot.lane.b32.xlu0 %v962, 64
        %v1342 = vpop.permute.xlu0 %1341
        %1343 = vrot.lane.b32.xlu0 %v965, 64
        %v1344 = vpop.permute.xlu0 %1343
        %1345 = vrot.lane.b32.xlu0 %v968, 64
        %v1346 = vpop.permute.xlu0 %1345
        %1347 = vrot.lane.b32.xlu0 %v971, 64
        %v1348 = vpop.permute.xlu0 %1347
        %1349 = vrot.lane.b32.xlu0 %v974, 64
        %v1350 = vpop.permute.xlu0 %1349
        %1351 = vrot.lane.b32.xlu0 %v977, 64
        %v1352 = vpop.permute.xlu0 %1351
        %1353 = vrot.lane.b32.xlu0 %v980, 64
        %v1354 = vpop.permute.xlu0 %1353
        %1355 = vrot.lane.b32.xlu0 %v983, 64
        %v1356 = vpop.permute.xlu0 %1355
        %1357 = vrot.lane.b32.xlu0 %v986, 64
        %v1358 = vpop.permute.xlu0 %1357
        %1359 = vrot.lane.b32.xlu0 %v989, 64
        %v1360 = vpop.permute.xlu0 %1359
        %1361 = vrot.lane.b32.xlu0 %v992, 64
        %v1362 = vpop.permute.xlu0 %1361
        %1363 = vrot.lane.b32.xlu0 %v995, 64
        %v1364 = vpop.permute.xlu0 %1363
        %1381 = vrot.lane.b32.xlu0 %v950, 32
        %v1382 = vpop.permute.xlu0 %1381
        %1383 = vrot.lane.b32.xlu0 %v953, 32
        %v1384 = vpop.permute.xlu0 %1383
        %1385 = vrot.lane.b32.xlu0 %v956, 32
        %v1386 = vpop.permute.xlu0 %1385
        %1387 = vrot.lane.b32.xlu0 %v959, 32
        %v1388 = vpop.permute.xlu0 %1387
        %1389 = vrot.lane.b32.xlu0 %v962, 32
        %v1390 = vpop.permute.xlu0 %1389
        %1391 = vrot.lane.b32.xlu0 %v965, 32
        %v1392 = vpop.permute.xlu0 %1391
        %1393 = vrot.lane.b32.xlu0 %v968, 32
        %v1394 = vpop.permute.xlu0 %1393
        %1395 = vrot.lane.b32.xlu0 %v971, 32
        %v1396 = vpop.permute.xlu0 %1395
        %1397 = vrot.lane.b32.xlu0 %v974, 32
        %v1398 = vpop.permute.xlu0 %1397
        %1399 = vrot.lane.b32.xlu0 %v977, 32
        %v1400 = vpop.permute.xlu0 %1399
        %1401 = vrot.lane.b32.xlu0 %v980, 32
        %v1402 = vpop.permute.xlu0 %1401
        %1403 = vrot.lane.b32.xlu0 %v983, 32
        %v1404 = vpop.permute.xlu0 %1403
        %1405 = vrot.lane.b32.xlu0 %v986, 32
        %v1406 = vpop.permute.xlu0 %1405
        %1407 = vrot.lane.b32.xlu0 %v989, 32
        %v1408 = vpop.permute.xlu0 %1407
        %1409 = vrot.lane.b32.xlu0 %v992, 32
        %v1410 = vpop.permute.xlu0 %1409
        %1411 = vrot.lane.b32.xlu0 %v995, 32
        %v1412 = vpop.permute.xlu0 %1411
        %v1429 = vmul.f32 %v820, 0.17677669
        %v1430 = vmul.f32 %v823, 0.17677669
        %v1431 = vmul.f32 %v826, 0.17677669
        %v1432 = vmul.f32 %v829, 0.17677669
        %v1433 = vmul.f32 %v832, 0.17677669
        %v1434 = vmul.f32 %v835, 0.17677669
        %v1435 = vmul.f32 %v838, 0.17677669
        %v1436 = vmul.f32 %v841, 0.17677669
        %v1437 = vmul.f32 %v844, 0.17677669
        %v1438 = vmul.f32 %v847, 0.17677669
        %v1439 = vmul.f32 %v850, 0.17677669
        %v1440 = vmul.f32 %v853, 0.17677669
        %v1441 = vmul.f32 %v856, 0.17677669
        %v1442 = vmul.f32 %v859, 0.17677669
        %v1443 = vmul.f32 %v862, 0.17677669
        %v1444 = vmul.f32 %v865, 0.17677669
        %v1445 = vmul.f32 %v1014, 0.17677669
        %v1446 = vmul.f32 %v1016, 0.17677669
        %v1447 = vmul.f32 %v1018, 0.17677669
        %v1448 = vmul.f32 %v1020, 0.17677669
        %v1449 = vmul.f32 %v1022, 0.17677669
        %v1450 = vmul.f32 %v1024, 0.17677669
        %v1451 = vmul.f32 %v1026, 0.17677669
        %v1452 = vmul.f32 %v1028, 0.17677669
        %v1453 = vmul.f32 %v1030, 0.17677669
        %v1454 = vmul.f32 %v1032, 0.17677669
        %v1455 = vmul.f32 %v1034, 0.17677669
        %v1456 = vmul.f32 %v1036, 0.17677669
        %v1457 = vmul.f32 %v1038, 0.17677669
        %v1458 = vmul.f32 %v1040, 0.17677669
        %v1459 = vmul.f32 %v1042, 0.17677669
        %v1460 = vmul.f32 %v1044, 0.17677669
        %v1461 = vmul.f32 %v1062, 0.17677669
        %v1462 = vmul.f32 %v1064, 0.17677669
        %v1463 = vmul.f32 %v1066, 0.17677669
        %v1464 = vmul.f32 %v1068, 0.17677669
        %v1465 = vmul.f32 %v1070, 0.17677669
        %v1466 = vmul.f32 %v1072, 0.17677669
        %v1467 = vmul.f32 %v1074, 0.17677669
        %v1468 = vmul.f32 %v1076, 0.17677669
        %v1469 = vmul.f32 %v1078, 0.17677669
        %v1470 = vmul.f32 %v1080, 0.17677669
        %v1471 = vmul.f32 %v1082, 0.17677669
        %v1472 = vmul.f32 %v1084, 0.17677669
        %v1473 = vmul.f32 %v1086, 0.17677669
        %v1474 = vmul.f32 %v1088, 0.17677669
        %v1475 = vmul.f32 %v1090, 0.17677669
        %v1476 = vmul.f32 %v1092, 0.17677669
        %v1477 = vmul.f32 %v1110, 0.17677669
        %v1478 = vmul.f32 %v1112, 0.17677669
        %v1479 = vmul.f32 %v1114, 0.17677669
        %v1480 = vmul.f32 %v1116, 0.17677669
        %v1481 = vmul.f32 %v1118, 0.17677669
        %v1482 = vmul.f32 %v1120, 0.17677669
        %v1483 = vmul.f32 %v1122, 0.17677669
        %v1484 = vmul.f32 %v1124, 0.17677669
        %v1485 = vmul.f32 %v1126, 0.17677669
        %v1486 = vmul.f32 %v1128, 0.17677669
        %v1487 = vmul.f32 %v1130, 0.17677669
        %v1488 = vmul.f32 %v1132, 0.17677669
        %v1489 = vmul.f32 %v1134, 0.17677669
        %v1490 = vmul.f32 %v1136, 0.17677669
        %v1491 = vmul.f32 %v1138, 0.17677669
        %v1492 = vmul.f32 %v1140, 0.17677669
        %vm1493 = vcmask 261120
        %v1495 = vsel %vm1493, %v1429, 0
        %v1498 = vsel %vm1493, %v1430, 0
        %v1501 = vsel %vm1493, %v1431, 0
        %v1504 = vsel %vm1493, %v1432, 0
        %v1507 = vsel %vm1493, %v1433, 0
        %v1510 = vsel %vm1493, %v1434, 0
        %v1513 = vsel %vm1493, %v1435, 0
        %v1516 = vsel %vm1493, %v1436, 0
        %v1519 = vsel %vm1493, %v1437, 0
        %v1522 = vsel %vm1493, %v1438, 0
        %v1525 = vsel %vm1493, %v1439, 0
        %v1528 = vsel %vm1493, %v1440, 0
        %v1531 = vsel %vm1493, %v1441, 0
        %v1534 = vsel %vm1493, %v1442, 0
        %v1537 = vsel %vm1493, %v1443, 0
        %v1540 = vsel %vm1493, %v1444, 0
        %v1542 = vsel %vm1493, %v885, 0
        %v1544 = vsel %vm1493, %v888, 0
        %v1546 = vsel %vm1493, %v891, 0
        %v1548 = vsel %vm1493, %v894, 0
        %v1550 = vsel %vm1493, %v897, 0
        %v1552 = vsel %vm1493, %v900, 0
        %v1554 = vsel %vm1493, %v903, 0
        %v1556 = vsel %vm1493, %v906, 0
        %v1558 = vsel %vm1493, %v909, 0
        %v1560 = vsel %vm1493, %v912, 0
        %v1562 = vsel %vm1493, %v915, 0
        %v1564 = vsel %vm1493, %v918, 0
        %v1566 = vsel %vm1493, %v921, 0
        %v1568 = vsel %vm1493, %v924, 0
        %v1570 = vsel %vm1493, %v927, 0
        %v1572 = vsel %vm1493, %v930, 0
        %1574 = vmatpush.xpose.msra.mxu0 %v1572
        %1575 = vmatpush.xpose.msra.mxu0 %v1570
        %1576 = vmatpush.xpose.msra.mxu0 %v1568
        %1577 = vmatpush.xpose.msra.mxu0 %v1566
        %1578 = vmatpush.xpose.msra.mxu0 %v1564
        %1579 = vmatpush.xpose.msra.mxu0 %v1562
        %1580 = vmatpush.xpose.msra.mxu0 %v1560
        %1581 = vmatpush.xpose.msra.mxu0 %v1558
        %1582 = vmatpush.xpose.msra.mxu0 %v1556
        %1583 = vmatpush.xpose.msra.mxu0 %v1554
        %1584 = vmatpush.xpose.msra.mxu0 %v1552
        %1585 = vmatpush.xpose.msra.mxu0 %v1550
        %1586 = vmatpush.xpose.msra.mxu0 %v1548
        %1587 = vmatpush.xpose.msra.mxu0 %v1546
        %1588 = vmatpush.xpose.msra.mxu0 %v1544
        %1589 = vmatpush.xpose.msra.mxu0 %v1542
        %1590 = vmatmul.f32.gmra.mxu0 %v1495
        %v1591 = vpop.f32.mrf.mxu0
        %v1592 = vadd.f32 0.0, %v1591
        %1593 = vmatmul.f32.gmra.mxu0 %v1498
        %v1594 = vpop.f32.mrf.mxu0
        %v1595 = vadd.f32 0.0, %v1594
        %1596 = vmatmul.f32.gmra.mxu0 %v1501
        %v1597 = vpop.f32.mrf.mxu0
        %v1598 = vadd.f32 0.0, %v1597
        %1599 = vmatmul.f32.gmra.mxu0 %v1504
        %v1600 = vpop.f32.mrf.mxu0
        %v1601 = vadd.f32 0.0, %v1600
        %1602 = vmatmul.f32.gmra.mxu0 %v1507
        %v1603 = vpop.f32.mrf.mxu0
        %v1604 = vadd.f32 0.0, %v1603
        %1605 = vmatmul.f32.gmra.mxu0 %v1510
        %v1606 = vpop.f32.mrf.mxu0
        %v1607 = vadd.f32 0.0, %v1606
        %1608 = vmatmul.f32.gmra.mxu0 %v1513
        %v1609 = vpop.f32.mrf.mxu0
        %v1610 = vadd.f32 0.0, %v1609
        %1611 = vmatmul.f32.gmra.mxu0 %v1516
        %v1612 = vpop.f32.mrf.mxu0
        %v1613 = vadd.f32 0.0, %v1612
        %1614 = vmatmul.f32.gmra.mxu0 %v1519
        %v1615 = vpop.f32.mrf.mxu0
        %v1616 = vadd.f32 0.0, %v1615
        %1617 = vmatmul.f32.gmra.mxu0 %v1522
        %v1618 = vpop.f32.mrf.mxu0
        %v1619 = vadd.f32 0.0, %v1618
        %1620 = vmatmul.f32.gmra.mxu0 %v1525
        %v1621 = vpop.f32.mrf.mxu0
        %v1622 = vadd.f32 0.0, %v1621
        %1623 = vmatmul.f32.gmra.mxu0 %v1528
        %v1624 = vpop.f32.mrf.mxu0
        %v1625 = vadd.f32 0.0, %v1624
        %1626 = vmatmul.f32.gmra.mxu0 %v1531
        %v1627 = vpop.f32.mrf.mxu0
        %v1628 = vadd.f32 0.0, %v1627
        %1629 = vmatmul.f32.gmra.mxu0 %v1534
        %v1630 = vpop.f32.mrf.mxu0
        %v1631 = vadd.f32 0.0, %v1630
        %1632 = vmatmul.f32.gmra.mxu0 %v1537
        %v1633 = vpop.f32.mrf.mxu0
        %v1634 = vadd.f32 0.0, %v1633
        %1635 = vmatmul.f32.gmra.mxu0 %v1540
        %v1636 = vpop.f32.mrf.mxu0
        %v1637 = vadd.f32 0.0, %v1636
        %1638 = vdwg.mxu0
        %v1640 = vsel %vm1493, %v1445, 0
        %v1643 = vsel %vm1493, %v1446, 0
        %v1646 = vsel %vm1493, %v1447, 0
        %v1649 = vsel %vm1493, %v1448, 0
        %v1652 = vsel %vm1493, %v1449, 0
        %v1655 = vsel %vm1493, %v1450, 0
        %v1658 = vsel %vm1493, %v1451, 0
        %v1661 = vsel %vm1493, %v1452, 0
        %v1664 = vsel %vm1493, %v1453, 0
        %v1667 = vsel %vm1493, %v1454, 0
        %v1670 = vsel %vm1493, %v1455, 0
        %v1673 = vsel %vm1493, %v1456, 0
        %v1676 = vsel %vm1493, %v1457, 0
        %v1679 = vsel %vm1493, %v1458, 0
        %v1682 = vsel %vm1493, %v1459, 0
        %v1685 = vsel %vm1493, %v1460, 0
        %v1687 = vsel %vm1493, %v1174, 0
        %v1689 = vsel %vm1493, %v1176, 0
        %v1691 = vsel %vm1493, %v1178, 0
        %v1693 = vsel %vm1493, %v1180, 0
        %v1695 = vsel %vm1493, %v1182, 0
        %v1697 = vsel %vm1493, %v1184, 0
        %v1699 = vsel %vm1493, %v1186, 0
        %v1701 = vsel %vm1493, %v1188, 0
        %v1703 = vsel %vm1493, %v1190, 0
        %v1705 = vsel %vm1493, %v1192, 0
        %v1707 = vsel %vm1493, %v1194, 0
        %v1709 = vsel %vm1493, %v1196, 0
        %v1711 = vsel %vm1493, %v1198, 0
        %v1713 = vsel %vm1493, %v1200, 0
        %v1715 = vsel %vm1493, %v1202, 0
        %v1717 = vsel %vm1493, %v1204, 0
        %1719 = vmatpush.xpose.msra.mxu0 %v1717
        %1720 = vmatpush.xpose.msra.mxu0 %v1715
        %1721 = vmatpush.xpose.msra.mxu0 %v1713
        %1722 = vmatpush.xpose.msra.mxu0 %v1711
        %1723 = vmatpush.xpose.msra.mxu0 %v1709
        %1724 = vmatpush.xpose.msra.mxu0 %v1707
        %1725 = vmatpush.xpose.msra.mxu0 %v1705
        %1726 = vmatpush.xpose.msra.mxu0 %v1703
        %1727 = vmatpush.xpose.msra.mxu0 %v1701
        %1728 = vmatpush.xpose.msra.mxu0 %v1699
        %1729 = vmatpush.xpose.msra.mxu0 %v1697
        %1730 = vmatpush.xpose.msra.mxu0 %v1695
        %1731 = vmatpush.xpose.msra.mxu0 %v1693
        %1732 = vmatpush.xpose.msra.mxu0 %v1691
        %1733 = vmatpush.xpose.msra.mxu0 %v1689
        %1734 = vmatpush.xpose.msra.mxu0 %v1687
        %1735 = vmatmul.f32.gmra.mxu0 %v1640
        %v1736 = vpop.f32.mrf.mxu0
        %v1737 = vadd.f32 0.0, %v1736
        %1738 = vmatmul.f32.gmra.mxu0 %v1643
        %v1739 = vpop.f32.mrf.mxu0
        %v1740 = vadd.f32 0.0, %v1739
        %1741 = vmatmul.f32.gmra.mxu0 %v1646
        %v1742 = vpop.f32.mrf.mxu0
        %v1743 = vadd.f32 0.0, %v1742
        %1744 = vmatmul.f32.gmra.mxu0 %v1649
        %v1745 = vpop.f32.mrf.mxu0
        %v1746 = vadd.f32 0.0, %v1745
        %1747 = vmatmul.f32.gmra.mxu0 %v1652
        %v1748 = vpop.f32.mrf.mxu0
        %v1749 = vadd.f32 0.0, %v1748
        %1750 = vmatmul.f32.gmra.mxu0 %v1655
        %v1751 = vpop.f32.mrf.mxu0
        %v1752 = vadd.f32 0.0, %v1751
        %1753 = vmatmul.f32.gmra.mxu0 %v1658
        %v1754 = vpop.f32.mrf.mxu0
        %v1755 = vadd.f32 0.0, %v1754
        %1756 = vmatmul.f32.gmra.mxu0 %v1661
        %v1757 = vpop.f32.mrf.mxu0
        %v1758 = vadd.f32 0.0, %v1757
        %1759 = vmatmul.f32.gmra.mxu0 %v1664
        %v1760 = vpop.f32.mrf.mxu0
        %v1761 = vadd.f32 0.0, %v1760
        %1762 = vmatmul.f32.gmra.mxu0 %v1667
        %v1763 = vpop.f32.mrf.mxu0
        %v1764 = vadd.f32 0.0, %v1763
        %1765 = vmatmul.f32.gmra.mxu0 %v1670
        %v1766 = vpop.f32.mrf.mxu0
        %v1767 = vadd.f32 0.0, %v1766
        %1768 = vmatmul.f32.gmra.mxu0 %v1673
        %v1769 = vpop.f32.mrf.mxu0
        %v1770 = vadd.f32 0.0, %v1769
        %1771 = vmatmul.f32.gmra.mxu0 %v1676
        %v1772 = vpop.f32.mrf.mxu0
        %v1773 = vadd.f32 0.0, %v1772
        %1774 = vmatmul.f32.gmra.mxu0 %v1679
        %v1775 = vpop.f32.mrf.mxu0
        %v1776 = vadd.f32 0.0, %v1775
        %1777 = vmatmul.f32.gmra.mxu0 %v1682
        %v1778 = vpop.f32.mrf.mxu0
        %v1779 = vadd.f32 0.0, %v1778
        %1780 = vmatmul.f32.gmra.mxu0 %v1685
        %v1781 = vpop.f32.mrf.mxu0
        %v1782 = vadd.f32 0.0, %v1781
        %1783 = vdwg.mxu0
        %v1785 = vsel %vm1493, %v1461, 0
        %v1788 = vsel %vm1493, %v1462, 0
        %v1791 = vsel %vm1493, %v1463, 0
        %v1794 = vsel %vm1493, %v1464, 0
        %v1797 = vsel %vm1493, %v1465, 0
        %v1800 = vsel %vm1493, %v1466, 0
        %v1803 = vsel %vm1493, %v1467, 0
        %v1806 = vsel %vm1493, %v1468, 0
        %v1809 = vsel %vm1493, %v1469, 0
        %v1812 = vsel %vm1493, %v1470, 0
        %v1815 = vsel %vm1493, %v1471, 0
        %v1818 = vsel %vm1493, %v1472, 0
        %v1821 = vsel %vm1493, %v1473, 0
        %v1824 = vsel %vm1493, %v1474, 0
        %v1827 = vsel %vm1493, %v1475, 0
        %v1830 = vsel %vm1493, %v1476, 0
        %v1832 = vsel %vm1493, %v1206, 0
        %v1834 = vsel %vm1493, %v1208, 0
        %v1836 = vsel %vm1493, %v1210, 0
        %v1838 = vsel %vm1493, %v1212, 0
        %v1840 = vsel %vm1493, %v1214, 0
        %v1842 = vsel %vm1493, %v1216, 0
        %v1844 = vsel %vm1493, %v1218, 0
        %v1846 = vsel %vm1493, %v1220, 0
        %v1848 = vsel %vm1493, %v1222, 0
        %v1850 = vsel %vm1493, %v1224, 0
        %v1852 = vsel %vm1493, %v1226, 0
        %v1854 = vsel %vm1493, %v1228, 0
        %v1856 = vsel %vm1493, %v1230, 0
        %v1858 = vsel %vm1493, %v1232, 0
        %v1860 = vsel %vm1493, %v1234, 0
        %v1862 = vsel %vm1493, %v1236, 0
        %1864 = vmatpush.xpose.msra.mxu0 %v1862
        %1865 = vmatpush.xpose.msra.mxu0 %v1860
        %1866 = vmatpush.xpose.msra.mxu0 %v1858
        %1867 = vmatpush.xpose.msra.mxu0 %v1856
        %1868 = vmatpush.xpose.msra.mxu0 %v1854
        %1869 = vmatpush.xpose.msra.mxu0 %v1852
        %1870 = vmatpush.xpose.msra.mxu0 %v1850
        %1871 = vmatpush.xpose.msra.mxu0 %v1848
        %1872 = vmatpush.xpose.msra.mxu0 %v1846
        %1873 = vmatpush.xpose.msra.mxu0 %v1844
        %1874 = vmatpush.xpose.msra.mxu0 %v1842
        %1875 = vmatpush.xpose.msra.mxu0 %v1840
        %1876 = vmatpush.xpose.msra.mxu0 %v1838
        %1877 = vmatpush.xpose.msra.mxu0 %v1836
        %1878 = vmatpush.xpose.msra.mxu0 %v1834
        %1879 = vmatpush.xpose.msra.mxu0 %v1832
        %1880 = vmatmul.f32.gmra.mxu0 %v1785
        %v1881 = vpop.f32.mrf.mxu0
        %v1882 = vadd.f32 0.0, %v1881
        %1883 = vmatmul.f32.gmra.mxu0 %v1788
        %v1884 = vpop.f32.mrf.mxu0
        %v1885 = vadd.f32 0.0, %v1884
        %1886 = vmatmul.f32.gmra.mxu0 %v1791
        %v1887 = vpop.f32.mrf.mxu0
        %v1888 = vadd.f32 0.0, %v1887
        %1889 = vmatmul.f32.gmra.mxu0 %v1794
        %v1890 = vpop.f32.mrf.mxu0
        %v1891 = vadd.f32 0.0, %v1890
        %1892 = vmatmul.f32.gmra.mxu0 %v1797
        %v1893 = vpop.f32.mrf.mxu0
        %v1894 = vadd.f32 0.0, %v1893
        %1895 = vmatmul.f32.gmra.mxu0 %v1800
        %v1896 = vpop.f32.mrf.mxu0
        %v1897 = vadd.f32 0.0, %v1896
        %1898 = vmatmul.f32.gmra.mxu0 %v1803
        %v1899 = vpop.f32.mrf.mxu0
        %v1900 = vadd.f32 0.0, %v1899
        %1901 = vmatmul.f32.gmra.mxu0 %v1806
        %v1902 = vpop.f32.mrf.mxu0
        %v1903 = vadd.f32 0.0, %v1902
        %1904 = vmatmul.f32.gmra.mxu0 %v1809
        %v1905 = vpop.f32.mrf.mxu0
        %v1906 = vadd.f32 0.0, %v1905
        %1907 = vmatmul.f32.gmra.mxu0 %v1812
        %v1908 = vpop.f32.mrf.mxu0
        %v1909 = vadd.f32 0.0, %v1908
        %1910 = vmatmul.f32.gmra.mxu0 %v1815
        %v1911 = vpop.f32.mrf.mxu0
        %v1912 = vadd.f32 0.0, %v1911
        %1913 = vmatmul.f32.gmra.mxu0 %v1818
        %v1914 = vpop.f32.mrf.mxu0
        %v1915 = vadd.f32 0.0, %v1914
        %1916 = vmatmul.f32.gmra.mxu0 %v1821
        %v1917 = vpop.f32.mrf.mxu0
        %v1918 = vadd.f32 0.0, %v1917
        %1919 = vmatmul.f32.gmra.mxu0 %v1824
        %v1920 = vpop.f32.mrf.mxu0
        %v1921 = vadd.f32 0.0, %v1920
        %1922 = vmatmul.f32.gmra.mxu0 %v1827
        %v1923 = vpop.f32.mrf.mxu0
        %v1924 = vadd.f32 0.0, %v1923
        %1925 = vmatmul.f32.gmra.mxu0 %v1830
        %v1926 = vpop.f32.mrf.mxu0
        %v1927 = vadd.f32 0.0, %v1926
        %1928 = vdwg.mxu0
        %v1930 = vsel %vm1493, %v1477, 0
        %v1933 = vsel %vm1493, %v1478, 0
        %v1936 = vsel %vm1493, %v1479, 0
        %v1939 = vsel %vm1493, %v1480, 0
        %v1942 = vsel %vm1493, %v1481, 0
        %v1945 = vsel %vm1493, %v1482, 0
        %v1948 = vsel %vm1493, %v1483, 0
        %v1951 = vsel %vm1493, %v1484, 0
        %v1954 = vsel %vm1493, %v1485, 0
        %v1957 = vsel %vm1493, %v1486, 0
        %v1960 = vsel %vm1493, %v1487, 0
        %v1963 = vsel %vm1493, %v1488, 0
        %v1966 = vsel %vm1493, %v1489, 0
        %v1969 = vsel %vm1493, %v1490, 0
        %v1972 = vsel %vm1493, %v1491, 0
        %v1975 = vsel %vm1493, %v1492, 0
        %v1977 = vsel %vm1493, %v1238, 0
        %v1979 = vsel %vm1493, %v1240, 0
        %v1981 = vsel %vm1493, %v1242, 0
        %v1983 = vsel %vm1493, %v1244, 0
        %v1985 = vsel %vm1493, %v1246, 0
        %v1987 = vsel %vm1493, %v1248, 0
        %v1989 = vsel %vm1493, %v1250, 0
        %v1991 = vsel %vm1493, %v1252, 0
        %v1993 = vsel %vm1493, %v1254, 0
        %v1995 = vsel %vm1493, %v1256, 0
        %v1997 = vsel %vm1493, %v1258, 0
        %v1999 = vsel %vm1493, %v1260, 0
        %v2001 = vsel %vm1493, %v1262, 0
        %v2003 = vsel %vm1493, %v1264, 0
        %v2005 = vsel %vm1493, %v1266, 0
        %v2007 = vsel %vm1493, %v1268, 0
        %2009 = vmatpush.xpose.msra.mxu0 %v2007
        %2010 = vmatpush.xpose.msra.mxu0 %v2005
        %2011 = vmatpush.xpose.msra.mxu0 %v2003
        %2012 = vmatpush.xpose.msra.mxu0 %v2001
        %2013 = vmatpush.xpose.msra.mxu0 %v1999
        %2014 = vmatpush.xpose.msra.mxu0 %v1997
        %2015 = vmatpush.xpose.msra.mxu0 %v1995
        %2016 = vmatpush.xpose.msra.mxu0 %v1993
        %2017 = vmatpush.xpose.msra.mxu0 %v1991
        %2018 = vmatpush.xpose.msra.mxu0 %v1989
        %2019 = vmatpush.xpose.msra.mxu0 %v1987
        %2020 = vmatpush.xpose.msra.mxu0 %v1985
        %2021 = vmatpush.xpose.msra.mxu0 %v1983
        %2022 = vmatpush.xpose.msra.mxu0 %v1981
        %2023 = vmatpush.xpose.msra.mxu0 %v1979
        %2024 = vmatpush.xpose.msra.mxu0 %v1977
        %2025 = vmatmul.f32.gmra.mxu0 %v1930
        %v2026 = vpop.f32.mrf.mxu0
        %v2027 = vadd.f32 0.0, %v2026
        %2028 = vmatmul.f32.gmra.mxu0 %v1933
        %v2029 = vpop.f32.mrf.mxu0
        %v2030 = vadd.f32 0.0, %v2029
        %2031 = vmatmul.f32.gmra.mxu0 %v1936
        %v2032 = vpop.f32.mrf.mxu0
        %v2033 = vadd.f32 0.0, %v2032
        %2034 = vmatmul.f32.gmra.mxu0 %v1939
        %v2035 = vpop.f32.mrf.mxu0
        %v2036 = vadd.f32 0.0, %v2035
        %2037 = vmatmul.f32.gmra.mxu0 %v1942
        %v2038 = vpop.f32.mrf.mxu0
        %v2039 = vadd.f32 0.0, %v2038
        %2040 = vmatmul.f32.gmra.mxu0 %v1945
        %v2041 = vpop.f32.mrf.mxu0
        %v2042 = vadd.f32 0.0, %v2041
        %2043 = vmatmul.f32.gmra.mxu0 %v1948
        %v2044 = vpop.f32.mrf.mxu0
        %v2045 = vadd.f32 0.0, %v2044
        %2046 = vmatmul.f32.gmra.mxu0 %v1951
        %v2047 = vpop.f32.mrf.mxu0
        %v2048 = vadd.f32 0.0, %v2047
        %2049 = vmatmul.f32.gmra.mxu0 %v1954
        %v2050 = vpop.f32.mrf.mxu0
        %v2051 = vadd.f32 0.0, %v2050
        %2052 = vmatmul.f32.gmra.mxu0 %v1957
        %v2053 = vpop.f32.mrf.mxu0
        %v2054 = vadd.f32 0.0, %v2053
        %2055 = vmatmul.f32.gmra.mxu0 %v1960
        %v2056 = vpop.f32.mrf.mxu0
        %v2057 = vadd.f32 0.0, %v2056
        %2058 = vmatmul.f32.gmra.mxu0 %v1963
        %v2059 = vpop.f32.mrf.mxu0
        %v2060 = vadd.f32 0.0, %v2059
        %2061 = vmatmul.f32.gmra.mxu0 %v1966
        %v2062 = vpop.f32.mrf.mxu0
        %v2063 = vadd.f32 0.0, %v2062
        %2064 = vmatmul.f32.gmra.mxu0 %v1969
        %v2065 = vpop.f32.mrf.mxu0
        %v2066 = vadd.f32 0.0, %v2065
        %2067 = vmatmul.f32.gmra.mxu0 %v1972
        %v2068 = vpop.f32.mrf.mxu0
        %v2069 = vadd.f32 0.0, %v2068
        %2070 = vmatmul.f32.gmra.mxu0 %v1975
        %v2071 = vpop.f32.mrf.mxu0
        %v2072 = vadd.f32 0.0, %v2071
        %2073 = vdwg.mxu0
        %2074 = vmax.xlane.f32.xlu0 %v1592
        %v2075 = vpop.xlane.xlu0 %2074
        %2076 = vmax.xlane.f32.xlu0 %v1595
        %v2077 = vpop.xlane.xlu0 %2076
        %2078 = vmax.xlane.f32.xlu0 %v1598
        %v2079 = vpop.xlane.xlu0 %2078
        %2080 = vmax.xlane.f32.xlu0 %v1601
        %v2081 = vpop.xlane.xlu0 %2080
        %2082 = vmax.xlane.f32.xlu0 %v1604
        %v2083 = vpop.xlane.xlu0 %2082
        %2084 = vmax.xlane.f32.xlu0 %v1607
        %v2085 = vpop.xlane.xlu0 %2084
        %2086 = vmax.xlane.f32.xlu0 %v1610
        %v2087 = vpop.xlane.xlu0 %2086
        %2088 = vmax.xlane.f32.xlu0 %v1613
        %v2089 = vpop.xlane.xlu0 %2088
        %2090 = vmax.xlane.f32.xlu0 %v1616
        %v2091 = vpop.xlane.xlu0 %2090
        %2092 = vmax.xlane.f32.xlu0 %v1619
        %v2093 = vpop.xlane.xlu0 %2092
        %2094 = vmax.xlane.f32.xlu0 %v1622
        %v2095 = vpop.xlane.xlu0 %2094
        %2096 = vmax.xlane.f32.xlu0 %v1625
        %v2097 = vpop.xlane.xlu0 %2096
        %2098 = vmax.xlane.f32.xlu0 %v1628
        %v2099 = vpop.xlane.xlu0 %2098
        %2100 = vmax.xlane.f32.xlu0 %v1631
        %v2101 = vpop.xlane.xlu0 %2100
        %2102 = vmax.xlane.f32.xlu0 %v1634
        %v2103 = vpop.xlane.xlu0 %2102
        %2104 = vmax.xlane.f32.xlu0 %v1637
        %v2105 = vpop.xlane.xlu0 %2104
        %2106 = vmax.xlane.f32.xlu0 %v1737
        %v2107 = vpop.xlane.xlu0 %2106
        %2108 = vmax.xlane.f32.xlu0 %v1740
        %v2109 = vpop.xlane.xlu0 %2108
        %2110 = vmax.xlane.f32.xlu0 %v1743
        %v2111 = vpop.xlane.xlu0 %2110
        %2112 = vmax.xlane.f32.xlu0 %v1746
        %v2113 = vpop.xlane.xlu0 %2112
        %2114 = vmax.xlane.f32.xlu0 %v1749
        %v2115 = vpop.xlane.xlu0 %2114
        %2116 = vmax.xlane.f32.xlu0 %v1752
        %v2117 = vpop.xlane.xlu0 %2116
        %2118 = vmax.xlane.f32.xlu0 %v1755
        %v2119 = vpop.xlane.xlu0 %2118
        %2120 = vmax.xlane.f32.xlu0 %v1758
        %v2121 = vpop.xlane.xlu0 %2120
        %2122 = vmax.xlane.f32.xlu0 %v1761
        %v2123 = vpop.xlane.xlu0 %2122
        %2124 = vmax.xlane.f32.xlu0 %v1764
        %v2125 = vpop.xlane.xlu0 %2124
        %2126 = vmax.xlane.f32.xlu0 %v1767
        %v2127 = vpop.xlane.xlu0 %2126
        %2128 = vmax.xlane.f32.xlu0 %v1770
        %v2129 = vpop.xlane.xlu0 %2128
        %2130 = vmax.xlane.f32.xlu0 %v1773
        %v2131 = vpop.xlane.xlu0 %2130
        %2132 = vmax.xlane.f32.xlu0 %v1776
        %v2133 = vpop.xlane.xlu0 %2132
        %2134 = vmax.xlane.f32.xlu0 %v1779
        %v2135 = vpop.xlane.xlu0 %2134
        %2136 = vmax.xlane.f32.xlu0 %v1782
        %v2137 = vpop.xlane.xlu0 %2136
        %2138 = vmax.xlane.f32.xlu0 %v1882
        %v2139 = vpop.xlane.xlu0 %2138
        %2140 = vmax.xlane.f32.xlu0 %v1885
        %v2141 = vpop.xlane.xlu0 %2140
        %2142 = vmax.xlane.f32.xlu0 %v1888
        %v2143 = vpop.xlane.xlu0 %2142
        %2144 = vmax.xlane.f32.xlu0 %v1891
        %v2145 = vpop.xlane.xlu0 %2144
        %2146 = vmax.xlane.f32.xlu0 %v1894
        %v2147 = vpop.xlane.xlu0 %2146
        %2148 = vmax.xlane.f32.xlu0 %v1897
        %v2149 = vpop.xlane.xlu0 %2148
        %2150 = vmax.xlane.f32.xlu0 %v1900
        %v2151 = vpop.xlane.xlu0 %2150
        %2152 = vmax.xlane.f32.xlu0 %v1903
        %v2153 = vpop.xlane.xlu0 %2152
        %2154 = vmax.xlane.f32.xlu0 %v1906
        %v2155 = vpop.xlane.xlu0 %2154
        %2156 = vmax.xlane.f32.xlu0 %v1909
        %v2157 = vpop.xlane.xlu0 %2156
        %2158 = vmax.xlane.f32.xlu0 %v1912
        %v2159 = vpop.xlane.xlu0 %2158
        %2160 = vmax.xlane.f32.xlu0 %v1915
        %v2161 = vpop.xlane.xlu0 %2160
        %2162 = vmax.xlane.f32.xlu0 %v1918
        %v2163 = vpop.xlane.xlu0 %2162
        %2164 = vmax.xlane.f32.xlu0 %v1921
        %v2165 = vpop.xlane.xlu0 %2164
        %2166 = vmax.xlane.f32.xlu0 %v1924
        %v2167 = vpop.xlane.xlu0 %2166
        %2168 = vmax.xlane.f32.xlu0 %v1927
        %v2169 = vpop.xlane.xlu0 %2168
        %2170 = vmax.xlane.f32.xlu0 %v2027
        %v2171 = vpop.xlane.xlu0 %2170
        %2172 = vmax.xlane.f32.xlu0 %v2030
        %v2173 = vpop.xlane.xlu0 %2172
        %2174 = vmax.xlane.f32.xlu0 %v2033
        %v2175 = vpop.xlane.xlu0 %2174
        %2176 = vmax.xlane.f32.xlu0 %v2036
        %v2177 = vpop.xlane.xlu0 %2176
        %2178 = vmax.xlane.f32.xlu0 %v2039
        %v2179 = vpop.xlane.xlu0 %2178
        %2180 = vmax.xlane.f32.xlu0 %v2042
        %v2181 = vpop.xlane.xlu0 %2180
        %2182 = vmax.xlane.f32.xlu0 %v2045
        %v2183 = vpop.xlane.xlu0 %2182
        %2184 = vmax.xlane.f32.xlu0 %v2048
        %v2185 = vpop.xlane.xlu0 %2184
        %2186 = vmax.xlane.f32.xlu0 %v2051
        %v2187 = vpop.xlane.xlu0 %2186
        %2188 = vmax.xlane.f32.xlu0 %v2054
        %v2189 = vpop.xlane.xlu0 %2188
        %2190 = vmax.xlane.f32.xlu0 %v2057
        %v2191 = vpop.xlane.xlu0 %2190
        %2192 = vmax.xlane.f32.xlu0 %v2060
        %v2193 = vpop.xlane.xlu0 %2192
        %2194 = vmax.xlane.f32.xlu0 %v2063
        %v2195 = vpop.xlane.xlu0 %2194
        %2196 = vmax.xlane.f32.xlu0 %v2066
        %v2197 = vpop.xlane.xlu0 %2196
        %2198 = vmax.xlane.f32.xlu0 %v2069
        %v2199 = vpop.xlane.xlu0 %2198
        %2200 = vmax.xlane.f32.xlu0 %v2072
        %v2201 = vpop.xlane.xlu0 %2200
        %v2202 = vsub.f32 %v1592, %v2075
        %v2203 = vsub.f32 %v1595, %v2077
        %v2204 = vsub.f32 %v1598, %v2079
        %v2205 = vsub.f32 %v1601, %v2081
        %v2206 = vsub.f32 %v1604, %v2083
        %v2207 = vsub.f32 %v1607, %v2085
        %v2208 = vsub.f32 %v1610, %v2087
        %v2209 = vsub.f32 %v1613, %v2089
        %v2210 = vsub.f32 %v1616, %v2091
        %v2211 = vsub.f32 %v1619, %v2093
        %v2212 = vsub.f32 %v1622, %v2095
        %v2213 = vsub.f32 %v1625, %v2097
        %v2214 = vsub.f32 %v1628, %v2099
        %v2215 = vsub.f32 %v1631, %v2101
        %v2216 = vsub.f32 %v1634, %v2103
        %v2217 = vsub.f32 %v1637, %v2105
        %v2218 = vsub.f32 %v1737, %v2107
        %v2219 = vsub.f32 %v1740, %v2109
        %v2220 = vsub.f32 %v1743, %v2111
        %v2221 = vsub.f32 %v1746, %v2113
        %v2222 = vsub.f32 %v1749, %v2115
        %v2223 = vsub.f32 %v1752, %v2117
        %v2224 = vsub.f32 %v1755, %v2119
        %v2225 = vsub.f32 %v1758, %v2121
        %v2226 = vsub.f32 %v1761, %v2123
        %v2227 = vsub.f32 %v1764, %v2125
        %v2228 = vsub.f32 %v1767, %v2127
        %v2229 = vsub.f32 %v1770, %v2129
        %v2230 = vsub.f32 %v1773, %v2131
        %v2231 = vsub.f32 %v1776, %v2133
        %v2232 = vsub.f32 %v1779, %v2135
        %v2233 = vsub.f32 %v1782, %v2137
        %v2234 = vsub.f32 %v1882, %v2139
        %v2235 = vsub.f32 %v1885, %v2141
        %v2236 = vsub.f32 %v1888, %v2143
        %v2237 = vsub.f32 %v1891, %v2145
        %v2238 = vsub.f32 %v1894, %v2147
        %v2239 = vsub.f32 %v1897, %v2149
        %v2240 = vsub.f32 %v1900, %v2151
        %v2241 = vsub.f32 %v1903, %v2153
        %v2242 = vsub.f32 %v1906, %v2155
        %v2243 = vsub.f32 %v1909, %v2157
        %v2244 = vsub.f32 %v1912, %v2159
        %v2245 = vsub.f32 %v1915, %v2161
        %v2246 = vsub.f32 %v1918, %v2163
        %v2247 = vsub.f32 %v1921, %v2165
        %v2248 = vsub.f32 %v1924, %v2167
        %v2249 = vsub.f32 %v1927, %v2169
        %v2250 = vsub.f32 %v2027, %v2171
        %v2251 = vsub.f32 %v2030, %v2173
        %v2252 = vsub.f32 %v2033, %v2175
        %v2253 = vsub.f32 %v2036, %v2177
        %v2254 = vsub.f32 %v2039, %v2179
        %v2255 = vsub.f32 %v2042, %v2181
        %v2256 = vsub.f32 %v2045, %v2183
        %v2257 = vsub.f32 %v2048, %v2185
        %v2258 = vsub.f32 %v2051, %v2187
        %v2259 = vsub.f32 %v2054, %v2189
        %v2260 = vsub.f32 %v2057, %v2191
        %v2261 = vsub.f32 %v2060, %v2193
        %v2262 = vsub.f32 %v2063, %v2195
        %v2263 = vsub.f32 %v2066, %v2197
        %v2264 = vsub.f32 %v2069, %v2199
        %v2265 = vsub.f32 %v2072, %v2201
        %v2266 = vmul.f32 %v2202, 1.442695
        %v2267 = vpow.pop %v2266
        %v2268 = vmul.f32 %v2203, 1.442695
        %v2269 = vpow.pop %v2268
        %v2270 = vmul.f32 %v2204, 1.442695
        %v2271 = vpow.pop %v2270
        %v2272 = vmul.f32 %v2205, 1.442695
        %v2273 = vpow.pop %v2272
        %v2274 = vmul.f32 %v2206, 1.442695
        %v2275 = vpow.pop %v2274
        %v2276 = vmul.f32 %v2207, 1.442695
        %v2277 = vpow.pop %v2276
        %v2278 = vmul.f32 %v2208, 1.442695
        %v2279 = vpow.pop %v2278
        %v2280 = vmul.f32 %v2209, 1.442695
        %v2281 = vpow.pop %v2280
        %v2282 = vmul.f32 %v2210, 1.442695
        %v2283 = vpow.pop %v2282
        %v2284 = vmul.f32 %v2211, 1.442695
        %v2285 = vpow.pop %v2284
        %v2286 = vmul.f32 %v2212, 1.442695
        %v2287 = vpow.pop %v2286
        %v2288 = vmul.f32 %v2213, 1.442695
        %v2289 = vpow.pop %v2288
        %v2290 = vmul.f32 %v2214, 1.442695
        %v2291 = vpow.pop %v2290
        %v2292 = vmul.f32 %v2215, 1.442695
        %v2293 = vpow.pop %v2292
        %v2294 = vmul.f32 %v2216, 1.442695
        %v2295 = vpow.pop %v2294
        %v2296 = vmul.f32 %v2217, 1.442695
        %v2297 = vpow.pop %v2296
        %v2298 = vmul.f32 %v2218, 1.442695
        %v2299 = vpow.pop %v2298
        %v2300 = vmul.f32 %v2219, 1.442695
        %v2301 = vpow.pop %v2300
        %v2302 = vmul.f32 %v2220, 1.442695
        %v2303 = vpow.pop %v2302
        %v2304 = vmul.f32 %v2221, 1.442695
        %v2305 = vpow.pop %v2304
        %v2306 = vmul.f32 %v2222, 1.442695
        %v2307 = vpow.pop %v2306
        %v2308 = vmul.f32 %v2223, 1.442695
        %v2309 = vpow.pop %v2308
        %v2310 = vmul.f32 %v2224, 1.442695
        %v2311 = vpow.pop %v2310
        %v2312 = vmul.f32 %v2225, 1.442695
        %v2313 = vpow.pop %v2312
        %v2314 = vmul.f32 %v2226, 1.442695
        %v2315 = vpow.pop %v2314
        %v2316 = vmul.f32 %v2227, 1.442695
        %v2317 = vpow.pop %v2316
        %v2318 = vmul.f32 %v2228, 1.442695
        %v2319 = vpow.pop %v2318
        %v2320 = vmul.f32 %v2229, 1.442695
        %v2321 = vpow.pop %v2320
        %v2322 = vmul.f32 %v2230, 1.442695
        %v2323 = vpow.pop %v2322
        %v2324 = vmul.f32 %v2231, 1.442695
        %v2325 = vpow.pop %v2324
        %v2326 = vmul.f32 %v2232, 1.442695
        %v2327 = vpow.pop %v2326
        %v2328 = vmul.f32 %v2233, 1.442695
        %v2329 = vpow.pop %v2328
        %v2330 = vmul.f32 %v2234, 1.442695
        %v2331 = vpow.pop %v2330
        %v2332 = vmul.f32 %v2235, 1.442695
        %v2333 = vpow.pop %v2332
        %v2334 = vmul.f32 %v2236, 1.442695
        %v2335 = vpow.pop %v2334
        %v2336 = vmul.f32 %v2237, 1.442695
        %v2337 = vpow.pop %v2336
        %v2338 = vmul.f32 %v2238, 1.442695
        %v2339 = vpow.pop %v2338
        %v2340 = vmul.f32 %v2239, 1.442695
        %v2341 = vpow.pop %v2340
        %v2342 = vmul.f32 %v2240, 1.442695
        %v2343 = vpow.pop %v2342
        %v2344 = vmul.f32 %v2241, 1.442695
        %v2345 = vpow.pop %v2344
        %v2346 = vmul.f32 %v2242, 1.442695
        %v2347 = vpow.pop %v2346
        %v2348 = vmul.f32 %v2243, 1.442695
        %v2349 = vpow.pop %v2348
        %v2350 = vmul.f32 %v2244, 1.442695
        %v2351 = vpow.pop %v2350
        %v2352 = vmul.f32 %v2245, 1.442695
        %v2353 = vpow.pop %v2352
        %v2354 = vmul.f32 %v2246, 1.442695
        %v2355 = vpow.pop %v2354
        %v2356 = vmul.f32 %v2247, 1.442695
        %v2357 = vpow.pop %v2356
        %v2358 = vmul.f32 %v2248, 1.442695
        %v2359 = vpow.pop %v2358
        %v2360 = vmul.f32 %v2249, 1.442695
        %v2361 = vpow.pop %v2360
        %v2362 = vmul.f32 %v2250, 1.442695
        %v2363 = vpow.pop %v2362
        %v2364 = vmul.f32 %v2251, 1.442695
        %v2365 = vpow.pop %v2364
        %v2366 = vmul.f32 %v2252, 1.442695
        %v2367 = vpow.pop %v2366
        %v2368 = vmul.f32 %v2253, 1.442695
        %v2369 = vpow.pop %v2368
        %v2370 = vmul.f32 %v2254, 1.442695
        %v2371 = vpow.pop %v2370
        %v2372 = vmul.f32 %v2255, 1.442695
        %v2373 = vpow.pop %v2372
        %v2374 = vmul.f32 %v2256, 1.442695
        %v2375 = vpow.pop %v2374
        %v2376 = vmul.f32 %v2257, 1.442695
        %v2377 = vpow.pop %v2376
        %v2378 = vmul.f32 %v2258, 1.442695
        %v2379 = vpow.pop %v2378
        %v2380 = vmul.f32 %v2259, 1.442695
        %v2381 = vpow.pop %v2380
        %v2382 = vmul.f32 %v2260, 1.442695
        %v2383 = vpow.pop %v2382
        %v2384 = vmul.f32 %v2261, 1.442695
        %v2385 = vpow.pop %v2384
        %v2386 = vmul.f32 %v2262, 1.442695
        %v2387 = vpow.pop %v2386
        %v2388 = vmul.f32 %v2263, 1.442695
        %v2389 = vpow.pop %v2388
        %v2390 = vmul.f32 %v2264, 1.442695
        %v2391 = vpow.pop %v2390
        %v2392 = vmul.f32 %v2265, 1.442695
        %v2393 = vpow.pop %v2392
        %2394 = vadd.xlane.f32.xlu0 %v2267
        %v2395 = vpop.xlane.xlu0 %2394
        %2396 = vadd.xlane.f32.xlu0 %v2269
        %v2397 = vpop.xlane.xlu0 %2396
        %2398 = vadd.xlane.f32.xlu0 %v2271
        %v2399 = vpop.xlane.xlu0 %2398
        %2400 = vadd.xlane.f32.xlu0 %v2273
        %v2401 = vpop.xlane.xlu0 %2400
        %2402 = vadd.xlane.f32.xlu0 %v2275
        %v2403 = vpop.xlane.xlu0 %2402
        %2404 = vadd.xlane.f32.xlu0 %v2277
        %v2405 = vpop.xlane.xlu0 %2404
        %2406 = vadd.xlane.f32.xlu0 %v2279
        %v2407 = vpop.xlane.xlu0 %2406
        %2408 = vadd.xlane.f32.xlu0 %v2281
        %v2409 = vpop.xlane.xlu0 %2408
        %2410 = vadd.xlane.f32.xlu0 %v2283
        %v2411 = vpop.xlane.xlu0 %2410
        %2412 = vadd.xlane.f32.xlu0 %v2285
        %v2413 = vpop.xlane.xlu0 %2412
        %2414 = vadd.xlane.f32.xlu0 %v2287
        %v2415 = vpop.xlane.xlu0 %2414
        %2416 = vadd.xlane.f32.xlu0 %v2289
        %v2417 = vpop.xlane.xlu0 %2416
        %2418 = vadd.xlane.f32.xlu0 %v2291
        %v2419 = vpop.xlane.xlu0 %2418
        %2420 = vadd.xlane.f32.xlu0 %v2293
        %v2421 = vpop.xlane.xlu0 %2420
        %2422 = vadd.xlane.f32.xlu0 %v2295
        %v2423 = vpop.xlane.xlu0 %2422
        %2424 = vadd.xlane.f32.xlu0 %v2297
        %v2425 = vpop.xlane.xlu0 %2424
        %2426 = vadd.xlane.f32.xlu0 %v2299
        %v2427 = vpop.xlane.xlu0 %2426
        %2428 = vadd.xlane.f32.xlu0 %v2301
        %v2429 = vpop.xlane.xlu0 %2428
        %2430 = vadd.xlane.f32.xlu0 %v2303
        %v2431 = vpop.xlane.xlu0 %2430
        %2432 = vadd.xlane.f32.xlu0 %v2305
        %v2433 = vpop.xlane.xlu0 %2432
        %2434 = vadd.xlane.f32.xlu0 %v2307
        %v2435 = vpop.xlane.xlu0 %2434
        %2436 = vadd.xlane.f32.xlu0 %v2309
        %v2437 = vpop.xlane.xlu0 %2436
        %2438 = vadd.xlane.f32.xlu0 %v2311
        %v2439 = vpop.xlane.xlu0 %2438
        %2440 = vadd.xlane.f32.xlu0 %v2313
        %v2441 = vpop.xlane.xlu0 %2440
        %2442 = vadd.xlane.f32.xlu0 %v2315
        %v2443 = vpop.xlane.xlu0 %2442
        %2444 = vadd.xlane.f32.xlu0 %v2317
        %v2445 = vpop.xlane.xlu0 %2444
        %2446 = vadd.xlane.f32.xlu0 %v2319
        %v2447 = vpop.xlane.xlu0 %2446
        %2448 = vadd.xlane.f32.xlu0 %v2321
        %v2449 = vpop.xlane.xlu0 %2448
        %2450 = vadd.xlane.f32.xlu0 %v2323
        %v2451 = vpop.xlane.xlu0 %2450
        %2452 = vadd.xlane.f32.xlu0 %v2325
        %v2453 = vpop.xlane.xlu0 %2452
        %2454 = vadd.xlane.f32.xlu0 %v2327
        %v2455 = vpop.xlane.xlu0 %2454
        %2456 = vadd.xlane.f32.xlu0 %v2329
        %v2457 = vpop.xlane.xlu0 %2456
        %2458 = vadd.xlane.f32.xlu0 %v2331
        %v2459 = vpop.xlane.xlu0 %2458
        %2460 = vadd.xlane.f32.xlu0 %v2333
        %v2461 = vpop.xlane.xlu0 %2460
        %2462 = vadd.xlane.f32.xlu0 %v2335
        %v2463 = vpop.xlane.xlu0 %2462
        %2464 = vadd.xlane.f32.xlu0 %v2337
        %v2465 = vpop.xlane.xlu0 %2464
        %2466 = vadd.xlane.f32.xlu0 %v2339
        %v2467 = vpop.xlane.xlu0 %2466
        %2468 = vadd.xlane.f32.xlu0 %v2341
        %v2469 = vpop.xlane.xlu0 %2468
        %2470 = vadd.xlane.f32.xlu0 %v2343
        %v2471 = vpop.xlane.xlu0 %2470
        %2472 = vadd.xlane.f32.xlu0 %v2345
        %v2473 = vpop.xlane.xlu0 %2472
        %2474 = vadd.xlane.f32.xlu0 %v2347
        %v2475 = vpop.xlane.xlu0 %2474
        %2476 = vadd.xlane.f32.xlu0 %v2349
        %v2477 = vpop.xlane.xlu0 %2476
        %2478 = vadd.xlane.f32.xlu0 %v2351
        %v2479 = vpop.xlane.xlu0 %2478
        %2480 = vadd.xlane.f32.xlu0 %v2353
        %v2481 = vpop.xlane.xlu0 %2480
        %2482 = vadd.xlane.f32.xlu0 %v2355
        %v2483 = vpop.xlane.xlu0 %2482
        %2484 = vadd.xlane.f32.xlu0 %v2357
        %v2485 = vpop.xlane.xlu0 %2484
        %2486 = vadd.xlane.f32.xlu0 %v2359
        %v2487 = vpop.xlane.xlu0 %2486
        %2488 = vadd.xlane.f32.xlu0 %v2361
        %v2489 = vpop.xlane.xlu0 %2488
        %2490 = vadd.xlane.f32.xlu0 %v2363
        %v2491 = vpop.xlane.xlu0 %2490
        %2492 = vadd.xlane.f32.xlu0 %v2365
        %v2493 = vpop.xlane.xlu0 %2492
        %2494 = vadd.xlane.f32.xlu0 %v2367
        %v2495 = vpop.xlane.xlu0 %2494
        %2496 = vadd.xlane.f32.xlu0 %v2369
        %v2497 = vpop.xlane.xlu0 %2496
        %2498 = vadd.xlane.f32.xlu0 %v2371
        %v2499 = vpop.xlane.xlu0 %2498
        %2500 = vadd.xlane.f32.xlu0 %v2373
        %v2501 = vpop.xlane.xlu0 %2500
        %2502 = vadd.xlane.f32.xlu0 %v2375
        %v2503 = vpop.xlane.xlu0 %2502
        %2504 = vadd.xlane.f32.xlu0 %v2377
        %v2505 = vpop.xlane.xlu0 %2504
        %2506 = vadd.xlane.f32.xlu0 %v2379
        %v2507 = vpop.xlane.xlu0 %2506
        %2508 = vadd.xlane.f32.xlu0 %v2381
        %v2509 = vpop.xlane.xlu0 %2508
        %2510 = vadd.xlane.f32.xlu0 %v2383
        %v2511 = vpop.xlane.xlu0 %2510
        %2512 = vadd.xlane.f32.xlu0 %v2385
        %v2513 = vpop.xlane.xlu0 %2512
        %2514 = vadd.xlane.f32.xlu0 %v2387
        %v2515 = vpop.xlane.xlu0 %2514
        %2516 = vadd.xlane.f32.xlu0 %v2389
        %v2517 = vpop.xlane.xlu0 %2516
        %2518 = vadd.xlane.f32.xlu0 %v2391
        %v2519 = vpop.xlane.xlu0 %2518
        %2520 = vadd.xlane.f32.xlu0 %v2393
        %v2521 = vpop.xlane.xlu0 %2520
        %v2522 = vrcp.pop %v2395
        %v2523 = vrcp.pop %v2397
        %v2524 = vrcp.pop %v2399
        %v2525 = vrcp.pop %v2401
        %v2526 = vrcp.pop %v2403
        %v2527 = vrcp.pop %v2405
        %v2528 = vrcp.pop %v2407
        %v2529 = vrcp.pop %v2409
        %v2530 = vrcp.pop %v2411
        %v2531 = vrcp.pop %v2413
        %v2532 = vrcp.pop %v2415
        %v2533 = vrcp.pop %v2417
        %v2534 = vrcp.pop %v2419
        %v2535 = vrcp.pop %v2421
        %v2536 = vrcp.pop %v2423
        %v2537 = vrcp.pop %v2425
        %v2538 = vrcp.pop %v2427
        %v2539 = vrcp.pop %v2429
        %v2540 = vrcp.pop %v2431
        %v2541 = vrcp.pop %v2433
        %v2542 = vrcp.pop %v2435
        %v2543 = vrcp.pop %v2437
        %v2544 = vrcp.pop %v2439
        %v2545 = vrcp.pop %v2441
        %v2546 = vrcp.pop %v2443
        %v2547 = vrcp.pop %v2445
        %v2548 = vrcp.pop %v2447
        %v2549 = vrcp.pop %v2449
        %v2550 = vrcp.pop %v2451
        %v2551 = vrcp.pop %v2453
        %v2552 = vrcp.pop %v2455
        %v2553 = vrcp.pop %v2457
        %v2554 = vrcp.pop %v2459
        %v2555 = vrcp.pop %v2461
        %v2556 = vrcp.pop %v2463
        %v2557 = vrcp.pop %v2465
        %v2558 = vrcp.pop %v2467
        %v2559 = vrcp.pop %v2469
        %v2560 = vrcp.pop %v2471
        %v2561 = vrcp.pop %v2473
        %v2562 = vrcp.pop %v2475
        %v2563 = vrcp.pop %v2477
        %v2564 = vrcp.pop %v2479
        %v2565 = vrcp.pop %v2481
        %v2566 = vrcp.pop %v2483
        %v2567 = vrcp.pop %v2485
        %v2568 = vrcp.pop %v2487
        %v2569 = vrcp.pop %v2489
        %v2570 = vrcp.pop %v2491
        %v2571 = vrcp.pop %v2493
        %v2572 = vrcp.pop %v2495
        %v2573 = vrcp.pop %v2497
        %v2574 = vrcp.pop %v2499
        %v2575 = vrcp.pop %v2501
        %v2576 = vrcp.pop %v2503
        %v2577 = vrcp.pop %v2505
        %v2578 = vrcp.pop %v2507
        %v2579 = vrcp.pop %v2509
        %v2580 = vrcp.pop %v2511
        %v2581 = vrcp.pop %v2513
        %v2582 = vrcp.pop %v2515
        %v2583 = vrcp.pop %v2517
        %v2584 = vrcp.pop %v2519
        %v2585 = vrcp.pop %v2521
        %v2586 = vmul.f32 %v2267, %v2522
        %v2587 = vmul.f32 %v2269, %v2523
        %v2588 = vmul.f32 %v2271, %v2524
        %v2589 = vmul.f32 %v2273, %v2525
        %v2590 = vmul.f32 %v2275, %v2526
        %v2591 = vmul.f32 %v2277, %v2527
        %v2592 = vmul.f32 %v2279, %v2528
        %v2593 = vmul.f32 %v2281, %v2529
        %v2594 = vmul.f32 %v2283, %v2530
        %v2595 = vmul.f32 %v2285, %v2531
        %v2596 = vmul.f32 %v2287, %v2532
        %v2597 = vmul.f32 %v2289, %v2533
        %v2598 = vmul.f32 %v2291, %v2534
        %v2599 = vmul.f32 %v2293, %v2535
        %v2600 = vmul.f32 %v2295, %v2536
        %v2601 = vmul.f32 %v2297, %v2537
        %v2602 = vmul.f32 %v2299, %v2538
        %v2603 = vmul.f32 %v2301, %v2539
        %v2604 = vmul.f32 %v2303, %v2540
        %v2605 = vmul.f32 %v2305, %v2541
        %v2606 = vmul.f32 %v2307, %v2542
        %v2607 = vmul.f32 %v2309, %v2543
        %v2608 = vmul.f32 %v2311, %v2544
        %v2609 = vmul.f32 %v2313, %v2545
        %v2610 = vmul.f32 %v2315, %v2546
        %v2611 = vmul.f32 %v2317, %v2547
        %v2612 = vmul.f32 %v2319, %v2548
        %v2613 = vmul.f32 %v2321, %v2549
        %v2614 = vmul.f32 %v2323, %v2550
        %v2615 = vmul.f32 %v2325, %v2551
        %v2616 = vmul.f32 %v2327, %v2552
        %v2617 = vmul.f32 %v2329, %v2553
        %v2618 = vmul.f32 %v2331, %v2554
        %v2619 = vmul.f32 %v2333, %v2555
        %v2620 = vmul.f32 %v2335, %v2556
        %v2621 = vmul.f32 %v2337, %v2557
        %v2622 = vmul.f32 %v2339, %v2558
        %v2623 = vmul.f32 %v2341, %v2559
        %v2624 = vmul.f32 %v2343, %v2560
        %v2625 = vmul.f32 %v2345, %v2561
        %v2626 = vmul.f32 %v2347, %v2562
        %v2627 = vmul.f32 %v2349, %v2563
        %v2628 = vmul.f32 %v2351, %v2564
        %v2629 = vmul.f32 %v2353, %v2565
        %v2630 = vmul.f32 %v2355, %v2566
        %v2631 = vmul.f32 %v2357, %v2567
        %v2632 = vmul.f32 %v2359, %v2568
        %v2633 = vmul.f32 %v2361, %v2569
        %v2634 = vmul.f32 %v2363, %v2570
        %v2635 = vmul.f32 %v2365, %v2571
        %v2636 = vmul.f32 %v2367, %v2572
        %v2637 = vmul.f32 %v2369, %v2573
        %v2638 = vmul.f32 %v2371, %v2574
        %v2639 = vmul.f32 %v2373, %v2575
        %v2640 = vmul.f32 %v2375, %v2576
        %v2641 = vmul.f32 %v2377, %v2577
        %v2642 = vmul.f32 %v2379, %v2578
        %v2643 = vmul.f32 %v2381, %v2579
        %v2644 = vmul.f32 %v2383, %v2580
        %v2645 = vmul.f32 %v2385, %v2581
        %v2646 = vmul.f32 %v2387, %v2582
        %v2647 = vmul.f32 %v2389, %v2583
        %v2648 = vmul.f32 %v2391, %v2584
        %v2649 = vmul.f32 %v2393, %v2585
        %2650 = vmatpush.msra.mxu0 %v995
        %2651 = vmatpush.msra.mxu0 %v992
        %2652 = vmatpush.msra.mxu0 %v989
        %2653 = vmatpush.msra.mxu0 %v986
        %2654 = vmatpush.msra.mxu0 %v983
        %2655 = vmatpush.msra.mxu0 %v980
        %2656 = vmatpush.msra.mxu0 %v977
        %2657 = vmatpush.msra.mxu0 %v974
        %2658 = vmatpush.msra.mxu0 %v971
        %2659 = vmatpush.msra.mxu0 %v968
        %2660 = vmatpush.msra.mxu0 %v965
        %2661 = vmatpush.msra.mxu0 %v962
        %2662 = vmatpush.msra.mxu0 %v959
        %2663 = vmatpush.msra.mxu0 %v956
        %2664 = vmatpush.msra.mxu0 %v953
        %2665 = vmatpush.msra.mxu0 %v950
        %2666 = vmatmul.f32.gmra.mxu0 %v2586
        %v2667 = vpop.f32.mrf.mxu0
        %v2668 = vadd.f32 0.0, %v2667
        %2669 = vmatmul.f32.gmra.mxu0 %v2587
        %v2670 = vpop.f32.mrf.mxu0
        %v2671 = vadd.f32 0.0, %v2670
        %2672 = vmatmul.f32.gmra.mxu0 %v2588
        %v2673 = vpop.f32.mrf.mxu0
        %v2674 = vadd.f32 0.0, %v2673
        %2675 = vmatmul.f32.gmra.mxu0 %v2589
        %v2676 = vpop.f32.mrf.mxu0
        %v2677 = vadd.f32 0.0, %v2676
        %2678 = vmatmul.f32.gmra.mxu0 %v2590
        %v2679 = vpop.f32.mrf.mxu0
        %v2680 = vadd.f32 0.0, %v2679
        %2681 = vmatmul.f32.gmra.mxu0 %v2591
        %v2682 = vpop.f32.mrf.mxu0
        %v2683 = vadd.f32 0.0, %v2682
        %2684 = vmatmul.f32.gmra.mxu0 %v2592
        %v2685 = vpop.f32.mrf.mxu0
        %v2686 = vadd.f32 0.0, %v2685
        %2687 = vmatmul.f32.gmra.mxu0 %v2593
        %v2688 = vpop.f32.mrf.mxu0
        %v2689 = vadd.f32 0.0, %v2688
        %2690 = vmatmul.f32.gmra.mxu0 %v2594
        %v2691 = vpop.f32.mrf.mxu0
        %v2692 = vadd.f32 0.0, %v2691
        %2693 = vmatmul.f32.gmra.mxu0 %v2595
        %v2694 = vpop.f32.mrf.mxu0
        %v2695 = vadd.f32 0.0, %v2694
        %2696 = vmatmul.f32.gmra.mxu0 %v2596
        %v2697 = vpop.f32.mrf.mxu0
        %v2698 = vadd.f32 0.0, %v2697
        %2699 = vmatmul.f32.gmra.mxu0 %v2597
        %v2700 = vpop.f32.mrf.mxu0
        %v2701 = vadd.f32 0.0, %v2700
        %2702 = vmatmul.f32.gmra.mxu0 %v2598
        %v2703 = vpop.f32.mrf.mxu0
        %v2704 = vadd.f32 0.0, %v2703
        %2705 = vmatmul.f32.gmra.mxu0 %v2599
        %v2706 = vpop.f32.mrf.mxu0
        %v2707 = vadd.f32 0.0, %v2706
        %2708 = vmatmul.f32.gmra.mxu0 %v2600
        %v2709 = vpop.f32.mrf.mxu0
        %v2710 = vadd.f32 0.0, %v2709
        %2711 = vmatmul.f32.gmra.mxu0 %v2601
        %v2712 = vpop.f32.mrf.mxu0
        %v2713 = vadd.f32 0.0, %v2712
        %2714 = vdwg.mxu0
        %2715 = vmatpush.msra.mxu0 %v1316
        %2716 = vmatpush.msra.mxu0 %v1314
        %2717 = vmatpush.msra.mxu0 %v1312
        %2718 = vmatpush.msra.mxu0 %v1310
        %2719 = vmatpush.msra.mxu0 %v1308
        %2720 = vmatpush.msra.mxu0 %v1306
        %2721 = vmatpush.msra.mxu0 %v1304
        %2722 = vmatpush.msra.mxu0 %v1302
        %2723 = vmatpush.msra.mxu0 %v1300
        %2724 = vmatpush.msra.mxu0 %v1298
        %2725 = vmatpush.msra.mxu0 %v1296
        %2726 = vmatpush.msra.mxu0 %v1294
        %2727 = vmatpush.msra.mxu0 %v1292
        %2728 = vmatpush.msra.mxu0 %v1290
        %2729 = vmatpush.msra.mxu0 %v1288
        %2730 = vmatpush.msra.mxu0 %v1286
        %2731 = vmatmul.f32.gmra.mxu0 %v2602
        %v2732 = vpop.f32.mrf.mxu0
        %v2733 = vadd.f32 0.0, %v2732
        %2734 = vmatmul.f32.gmra.mxu0 %v2603
        %v2735 = vpop.f32.mrf.mxu0
        %v2736 = vadd.f32 0.0, %v2735
        %2737 = vmatmul.f32.gmra.mxu0 %v2604
        %v2738 = vpop.f32.mrf.mxu0
        %v2739 = vadd.f32 0.0, %v2738
        %2740 = vmatmul.f32.gmra.mxu0 %v2605
        %v2741 = vpop.f32.mrf.mxu0
        %v2742 = vadd.f32 0.0, %v2741
        %2743 = vmatmul.f32.gmra.mxu0 %v2606
        %v2744 = vpop.f32.mrf.mxu0
        %v2745 = vadd.f32 0.0, %v2744
        %2746 = vmatmul.f32.gmra.mxu0 %v2607
        %v2747 = vpop.f32.mrf.mxu0
        %v2748 = vadd.f32 0.0, %v2747
        %2749 = vmatmul.f32.gmra.mxu0 %v2608
        %v2750 = vpop.f32.mrf.mxu0
        %v2751 = vadd.f32 0.0, %v2750
        %2752 = vmatmul.f32.gmra.mxu0 %v2609
        %v2753 = vpop.f32.mrf.mxu0
        %v2754 = vadd.f32 0.0, %v2753
        %2755 = vmatmul.f32.gmra.mxu0 %v2610
        %v2756 = vpop.f32.mrf.mxu0
        %v2757 = vadd.f32 0.0, %v2756
        %2758 = vmatmul.f32.gmra.mxu0 %v2611
        %v2759 = vpop.f32.mrf.mxu0
        %v2760 = vadd.f32 0.0, %v2759
        %2761 = vmatmul.f32.gmra.mxu0 %v2612
        %v2762 = vpop.f32.mrf.mxu0
        %v2763 = vadd.f32 0.0, %v2762
        %2764 = vmatmul.f32.gmra.mxu0 %v2613
        %v2765 = vpop.f32.mrf.mxu0
        %v2766 = vadd.f32 0.0, %v2765
        %2767 = vmatmul.f32.gmra.mxu0 %v2614
        %v2768 = vpop.f32.mrf.mxu0
        %v2769 = vadd.f32 0.0, %v2768
        %2770 = vmatmul.f32.gmra.mxu0 %v2615
        %v2771 = vpop.f32.mrf.mxu0
        %v2772 = vadd.f32 0.0, %v2771
        %2773 = vmatmul.f32.gmra.mxu0 %v2616
        %v2774 = vpop.f32.mrf.mxu0
        %v2775 = vadd.f32 0.0, %v2774
        %2776 = vmatmul.f32.gmra.mxu0 %v2617
        %v2777 = vpop.f32.mrf.mxu0
        %v2778 = vadd.f32 0.0, %v2777
        %2779 = vdwg.mxu0
        %2780 = vmatpush.msra.mxu0 %v1364
        %2781 = vmatpush.msra.mxu0 %v1362
        %2782 = vmatpush.msra.mxu0 %v1360
        %2783 = vmatpush.msra.mxu0 %v1358
        %2784 = vmatpush.msra.mxu0 %v1356
        %2785 = vmatpush.msra.mxu0 %v1354
        %2786 = vmatpush.msra.mxu0 %v1352
        %2787 = vmatpush.msra.mxu0 %v1350
        %2788 = vmatpush.msra.mxu0 %v1348
        %2789 = vmatpush.msra.mxu0 %v1346
        %2790 = vmatpush.msra.mxu0 %v1344
        %2791 = vmatpush.msra.mxu0 %v1342
        %2792 = vmatpush.msra.mxu0 %v1340
        %2793 = vmatpush.msra.mxu0 %v1338
        %2794 = vmatpush.msra.mxu0 %v1336
        %2795 = vmatpush.msra.mxu0 %v1334
        %2796 = vmatmul.f32.gmra.mxu0 %v2618
        %v2797 = vpop.f32.mrf.mxu0
        %v2798 = vadd.f32 0.0, %v2797
        %2799 = vmatmul.f32.gmra.mxu0 %v2619
        %v2800 = vpop.f32.mrf.mxu0
        %v2801 = vadd.f32 0.0, %v2800
        %2802 = vmatmul.f32.gmra.mxu0 %v2620
        %v2803 = vpop.f32.mrf.mxu0
        %v2804 = vadd.f32 0.0, %v2803
        %2805 = vmatmul.f32.gmra.mxu0 %v2621
        %v2806 = vpop.f32.mrf.mxu0
        %v2807 = vadd.f32 0.0, %v2806
        %2808 = vmatmul.f32.gmra.mxu0 %v2622
        %v2809 = vpop.f32.mrf.mxu0
        %v2810 = vadd.f32 0.0, %v2809
        %2811 = vmatmul.f32.gmra.mxu0 %v2623
        %v2812 = vpop.f32.mrf.mxu0
        %v2813 = vadd.f32 0.0, %v2812
        %2814 = vmatmul.f32.gmra.mxu0 %v2624
        %v2815 = vpop.f32.mrf.mxu0
        %v2816 = vadd.f32 0.0, %v2815
        %2817 = vmatmul.f32.gmra.mxu0 %v2625
        %v2818 = vpop.f32.mrf.mxu0
        %v2819 = vadd.f32 0.0, %v2818
        %2820 = vmatmul.f32.gmra.mxu0 %v2626
        %v2821 = vpop.f32.mrf.mxu0
        %v2822 = vadd.f32 0.0, %v2821
        %2823 = vmatmul.f32.gmra.mxu0 %v2627
        %v2824 = vpop.f32.mrf.mxu0
        %v2825 = vadd.f32 0.0, %v2824
        %2826 = vmatmul.f32.gmra.mxu0 %v2628
        %v2827 = vpop.f32.mrf.mxu0
        %v2828 = vadd.f32 0.0, %v2827
        %2829 = vmatmul.f32.gmra.mxu0 %v2629
        %v2830 = vpop.f32.mrf.mxu0
        %v2831 = vadd.f32 0.0, %v2830
        %2832 = vmatmul.f32.gmra.mxu0 %v2630
        %v2833 = vpop.f32.mrf.mxu0
        %v2834 = vadd.f32 0.0, %v2833
        %2835 = vmatmul.f32.gmra.mxu0 %v2631
        %v2836 = vpop.f32.mrf.mxu0
        %v2837 = vadd.f32 0.0, %v2836
        %2838 = vmatmul.f32.gmra.mxu0 %v2632
        %v2839 = vpop.f32.mrf.mxu0
        %v2840 = vadd.f32 0.0, %v2839
        %2841 = vmatmul.f32.gmra.mxu0 %v2633
        %v2842 = vpop.f32.mrf.mxu0
        %v2843 = vadd.f32 0.0, %v2842
        %2844 = vdwg.mxu0
        %2845 = vmatpush.msra.mxu0 %v1412
        %2846 = vmatpush.msra.mxu0 %v1410
        %2847 = vmatpush.msra.mxu0 %v1408
        %2848 = vmatpush.msra.mxu0 %v1406
        %2849 = vmatpush.msra.mxu0 %v1404
        %2850 = vmatpush.msra.mxu0 %v1402
        %2851 = vmatpush.msra.mxu0 %v1400
        %2852 = vmatpush.msra.mxu0 %v1398
        %2853 = vmatpush.msra.mxu0 %v1396
        %2854 = vmatpush.msra.mxu0 %v1394
        %2855 = vmatpush.msra.mxu0 %v1392
        %2856 = vmatpush.msra.mxu0 %v1390
        %2857 = vmatpush.msra.mxu0 %v1388
        %2858 = vmatpush.msra.mxu0 %v1386
        %2859 = vmatpush.msra.mxu0 %v1384
        %2860 = vmatpush.msra.mxu0 %v1382
        %2861 = vmatmul.f32.gmra.mxu0 %v2634
        %v2862 = vpop.f32.mrf.mxu0
        %v2863 = vadd.f32 0.0, %v2862
        %2864 = vmatmul.f32.gmra.mxu0 %v2635
        %v2865 = vpop.f32.mrf.mxu0
        %v2866 = vadd.f32 0.0, %v2865
        %2867 = vmatmul.f32.gmra.mxu0 %v2636
        %v2868 = vpop.f32.mrf.mxu0
        %v2869 = vadd.f32 0.0, %v2868
        %2870 = vmatmul.f32.gmra.mxu0 %v2637
        %v2871 = vpop.f32.mrf.mxu0
        %v2872 = vadd.f32 0.0, %v2871
        %2873 = vmatmul.f32.gmra.mxu0 %v2638
        %v2874 = vpop.f32.mrf.mxu0
        %v2875 = vadd.f32 0.0, %v2874
        %2876 = vmatmul.f32.gmra.mxu0 %v2639
        %v2877 = vpop.f32.mrf.mxu0
        %v2878 = vadd.f32 0.0, %v2877
        %2879 = vmatmul.f32.gmra.mxu0 %v2640
        %v2880 = vpop.f32.mrf.mxu0
        %v2881 = vadd.f32 0.0, %v2880
        %2882 = vmatmul.f32.gmra.mxu0 %v2641
        %v2883 = vpop.f32.mrf.mxu0
        %v2884 = vadd.f32 0.0, %v2883
        %2885 = vmatmul.f32.gmra.mxu0 %v2642
        %v2886 = vpop.f32.mrf.mxu0
        %v2887 = vadd.f32 0.0, %v2886
        %2888 = vmatmul.f32.gmra.mxu0 %v2643
        %v2889 = vpop.f32.mrf.mxu0
        %v2890 = vadd.f32 0.0, %v2889
        %2891 = vmatmul.f32.gmra.mxu0 %v2644
        %v2892 = vpop.f32.mrf.mxu0
        %v2893 = vadd.f32 0.0, %v2892
        %2894 = vmatmul.f32.gmra.mxu0 %v2645
        %v2895 = vpop.f32.mrf.mxu0
        %v2896 = vadd.f32 0.0, %v2895
        %2897 = vmatmul.f32.gmra.mxu0 %v2646
        %v2898 = vpop.f32.mrf.mxu0
        %v2899 = vadd.f32 0.0, %v2898
        %2900 = vmatmul.f32.gmra.mxu0 %v2647
        %v2901 = vpop.f32.mrf.mxu0
        %v2902 = vadd.f32 0.0, %v2901
        %2903 = vmatmul.f32.gmra.mxu0 %v2648
        %v2904 = vpop.f32.mrf.mxu0
        %v2905 = vadd.f32 0.0, %v2904
        %2906 = vmatmul.f32.gmra.mxu0 %v2649
        %v2907 = vpop.f32.mrf.mxu0
        %v2908 = vadd.f32 0.0, %v2907
        %2909 = vdwg.mxu0
        %2926 = vrot.lane.b32.xlu0 %v2733, 32
        %v2927 = vpop.permute.xlu0 %2926
        %2928 = vrot.lane.b32.xlu0 %v2736, 32
        %v2929 = vpop.permute.xlu0 %2928
        %2930 = vrot.lane.b32.xlu0 %v2739, 32
        %v2931 = vpop.permute.xlu0 %2930
        %2932 = vrot.lane.b32.xlu0 %v2742, 32
        %v2933 = vpop.permute.xlu0 %2932
        %2934 = vrot.lane.b32.xlu0 %v2745, 32
        %v2935 = vpop.permute.xlu0 %2934
        %2936 = vrot.lane.b32.xlu0 %v2748, 32
        %v2937 = vpop.permute.xlu0 %2936
        %2938 = vrot.lane.b32.xlu0 %v2751, 32
        %v2939 = vpop.permute.xlu0 %2938
        %2940 = vrot.lane.b32.xlu0 %v2754, 32
        %v2941 = vpop.permute.xlu0 %2940
        %2942 = vrot.lane.b32.xlu0 %v2757, 32
        %v2943 = vpop.permute.xlu0 %2942
        %2944 = vrot.lane.b32.xlu0 %v2760, 32
        %v2945 = vpop.permute.xlu0 %2944
        %2946 = vrot.lane.b32.xlu0 %v2763, 32
        %v2947 = vpop.permute.xlu0 %2946
        %2948 = vrot.lane.b32.xlu0 %v2766, 32
        %v2949 = vpop.permute.xlu0 %2948
        %2950 = vrot.lane.b32.xlu0 %v2769, 32
        %v2951 = vpop.permute.xlu0 %2950
        %2952 = vrot.lane.b32.xlu0 %v2772, 32
        %v2953 = vpop.permute.xlu0 %2952
        %2954 = vrot.lane.b32.xlu0 %v2775, 32
        %v2955 = vpop.permute.xlu0 %2954
        %2956 = vrot.lane.b32.xlu0 %v2778, 32
        %v2957 = vpop.permute.xlu0 %2956
        %2990 = vrot.lane.b32.xlu0 %v2798, 64
        %v2991 = vpop.permute.xlu0 %2990
        %2992 = vrot.lane.b32.xlu0 %v2801, 64
        %v2993 = vpop.permute.xlu0 %2992
        %2994 = vrot.lane.b32.xlu0 %v2804, 64
        %v2995 = vpop.permute.xlu0 %2994
        %2996 = vrot.lane.b32.xlu0 %v2807, 64
        %v2997 = vpop.permute.xlu0 %2996
        %2998 = vrot.lane.b32.xlu0 %v2810, 64
        %v2999 = vpop.permute.xlu0 %2998
        %3000 = vrot.lane.b32.xlu0 %v2813, 64
        %v3001 = vpop.permute.xlu0 %3000
        %3002 = vrot.lane.b32.xlu0 %v2816, 64
        %v3003 = vpop.permute.xlu0 %3002
        %3004 = vrot.lane.b32.xlu0 %v2819, 64
        %v3005 = vpop.permute.xlu0 %3004
        %3006 = vrot.lane.b32.xlu0 %v2822, 64
        %v3007 = vpop.permute.xlu0 %3006
        %3008 = vrot.lane.b32.xlu0 %v2825, 64
        %v3009 = vpop.permute.xlu0 %3008
        %3010 = vrot.lane.b32.xlu0 %v2828, 64
        %v3011 = vpop.permute.xlu0 %3010
        %3012 = vrot.lane.b32.xlu0 %v2831, 64
        %v3013 = vpop.permute.xlu0 %3012
        %3014 = vrot.lane.b32.xlu0 %v2834, 64
        %v3015 = vpop.permute.xlu0 %3014
        %3016 = vrot.lane.b32.xlu0 %v2837, 64
        %v3017 = vpop.permute.xlu0 %3016
        %3018 = vrot.lane.b32.xlu0 %v2840, 64
        %v3019 = vpop.permute.xlu0 %3018
        %3020 = vrot.lane.b32.xlu0 %v2843, 64
        %v3021 = vpop.permute.xlu0 %3020
        %3054 = vrot.lane.b32.xlu0 %v2863, 96
        %v3055 = vpop.permute.xlu0 %3054
        %3056 = vrot.lane.b32.xlu0 %v2866, 96
        %v3057 = vpop.permute.xlu0 %3056
        %3058 = vrot.lane.b32.xlu0 %v2869, 96
        %v3059 = vpop.permute.xlu0 %3058
        %3060 = vrot.lane.b32.xlu0 %v2872, 96
        %v3061 = vpop.permute.xlu0 %3060
        %3062 = vrot.lane.b32.xlu0 %v2875, 96
        %v3063 = vpop.permute.xlu0 %3062
        %3064 = vrot.lane.b32.xlu0 %v2878, 96
        %v3065 = vpop.permute.xlu0 %3064
        %3066 = vrot.lane.b32.xlu0 %v2881, 96
        %v3067 = vpop.permute.xlu0 %3066
        %3068 = vrot.lane.b32.xlu0 %v2884, 96
        %v3069 = vpop.permute.xlu0 %3068
        %3070 = vrot.lane.b32.xlu0 %v2887, 96
        %v3071 = vpop.permute.xlu0 %3070
        %3072 = vrot.lane.b32.xlu0 %v2890, 96
        %v3073 = vpop.permute.xlu0 %3072
        %3074 = vrot.lane.b32.xlu0 %v2893, 96
        %v3075 = vpop.permute.xlu0 %3074
        %3076 = vrot.lane.b32.xlu0 %v2896, 96
        %v3077 = vpop.permute.xlu0 %3076
        %3078 = vrot.lane.b32.xlu0 %v2899, 96
        %v3079 = vpop.permute.xlu0 %3078
        %3080 = vrot.lane.b32.xlu0 %v2902, 96
        %v3081 = vpop.permute.xlu0 %3080
        %3082 = vrot.lane.b32.xlu0 %v2905, 96
        %v3083 = vpop.permute.xlu0 %3082
        %3084 = vrot.lane.b32.xlu0 %v2908, 96
        %v3085 = vpop.permute.xlu0 %3084
        %v3102 = vsel %vm1493, %v2668, %v2927
        %v3103 = vsel %vm1493, %v2671, %v2929
        %v3104 = vsel %vm1493, %v2674, %v2931
        %v3105 = vsel %vm1493, %v2677, %v2933
        %v3106 = vsel %vm1493, %v2680, %v2935
        %v3107 = vsel %vm1493, %v2683, %v2937
        %v3108 = vsel %vm1493, %v2686, %v2939
        %v3109 = vsel %vm1493, %v2689, %v2941
        %v3110 = vsel %vm1493, %v2692, %v2943
        %v3111 = vsel %vm1493, %v2695, %v2945
        %v3112 = vsel %vm1493, %v2698, %v2947
        %v3113 = vsel %vm1493, %v2701, %v2949
        %v3114 = vsel %vm1493, %v2704, %v2951
        %v3115 = vsel %vm1493, %v2707, %v2953
        %v3116 = vsel %vm1493, %v2710, %v2955
        %v3117 = vsel %vm1493, %v2713, %v2957
        %vm3118 = vcmask 523264
        %v3119 = vsel %vm3118, %v3102, %v2991
        %v3120 = vsel %vm3118, %v3103, %v2993
        %v3121 = vsel %vm3118, %v3104, %v2995
        %v3122 = vsel %vm3118, %v3105, %v2997
        %v3123 = vsel %vm3118, %v3106, %v2999
        %v3124 = vsel %vm3118, %v3107, %v3001
        %v3125 = vsel %vm3118, %v3108, %v3003
        %v3126 = vsel %vm3118, %v3109, %v3005
        %v3127 = vsel %vm3118, %v3110, %v3007
        %v3128 = vsel %vm3118, %v3111, %v3009
        %v3129 = vsel %vm3118, %v3112, %v3011
        %v3130 = vsel %vm3118, %v3113, %v3013
        %v3131 = vsel %vm3118, %v3114, %v3015
        %v3132 = vsel %vm3118, %v3115, %v3017
        %v3133 = vsel %vm3118, %v3116, %v3019
        %v3134 = vsel %vm3118, %v3117, %v3021
        %vm3135 = vcmask 785408
        %v3136 = vsel %vm3135, %v3119, %v3055
        %v3137 = vsel %vm3135, %v3120, %v3057
        %v3138 = vsel %vm3135, %v3121, %v3059
        %v3139 = vsel %vm3135, %v3122, %v3061
        %v3140 = vsel %vm3135, %v3123, %v3063
        %v3141 = vsel %vm3135, %v3124, %v3065
        %v3142 = vsel %vm3135, %v3125, %v3067
        %v3143 = vsel %vm3135, %v3126, %v3069
        %v3144 = vsel %vm3135, %v3127, %v3071
        %v3145 = vsel %vm3135, %v3128, %v3073
        %v3146 = vsel %vm3135, %v3129, %v3075
        %v3147 = vsel %vm3135, %v3130, %v3077
        %v3148 = vsel %vm3135, %v3131, %v3079
        %v3149 = vsel %vm3135, %v3132, %v3081
        %v3150 = vsel %vm3135, %v3133, %v3083
        %v3151 = vsel %vm3135, %v3134, %v3085
        %v3152 = vld [vmem:[#allocation9] sm:$0xff]
        %v3153 = vld [vmem:[#allocation9 + $0x8] sm:$0xff]
        %v3154 = vld [vmem:[#allocation9 + $0x10] sm:$0xff]
        %v3155 = vld [vmem:[#allocation9 + $0x18] sm:$0xff]
        %v3156 = vld [vmem:[#allocation9 + $0x20] sm:$0xff]
        %v3157 = vld [vmem:[#allocation9 + $0x28] sm:$0xff]
        %v3158 = vld [vmem:[#allocation9 + $0x30] sm:$0xff]
        %v3159 = vld [vmem:[#allocation9 + $0x38] sm:$0xff]
        %v3160 = vld [vmem:[#allocation9 + $0x40] sm:$0xff]
        %v3161 = vld [vmem:[#allocation9 + $0x48] sm:$0xff]
        %v3162 = vld [vmem:[#allocation9 + $0x50] sm:$0xff]
        %v3163 = vld [vmem:[#allocation9 + $0x58] sm:$0xff]
        %v3164 = vld [vmem:[#allocation9 + $0x60] sm:$0xff]
        %v3165 = vld [vmem:[#allocation9 + $0x68] sm:$0xff]
        %v3166 = vld [vmem:[#allocation9 + $0x70] sm:$0xff]
        %v3167 = vld [vmem:[#allocation9 + $0x78] sm:$0xff]
        %v3168 = vld [vmem:[%s6] sm:$0x1]
        %v3170 = vperm.slane %v3168, 0
        %3172 = vmatpush.msra.mxu0 %v3167
        %3173 = vmatpush.msra.mxu0 %v3166
        %3174 = vmatpush.msra.mxu0 %v3165
        %3175 = vmatpush.msra.mxu0 %v3164
        %3176 = vmatpush.msra.mxu0 %v3163
        %3177 = vmatpush.msra.mxu0 %v3162
        %3178 = vmatpush.msra.mxu0 %v3161
        %3179 = vmatpush.msra.mxu0 %v3160
        %3180 = vmatpush.msra.mxu0 %v3159
        %3181 = vmatpush.msra.mxu0 %v3158
        %3182 = vmatpush.msra.mxu0 %v3157
        %3183 = vmatpush.msra.mxu0 %v3156
        %3184 = vmatpush.msra.mxu0 %v3155
        %3185 = vmatpush.msra.mxu0 %v3154
        %3186 = vmatpush.msra.mxu0 %v3153
        %3187 = vmatpush.msra.mxu0 %v3152
        %3188 = vmatmul.f32.gmra.mxu0 %v3136
        %v3189 = vpop.f32.mrf.mxu0
        %v3190 = vadd.f32 %v3170, %v3189
        %3191 = vmatmul.f32.gmra.mxu0 %v3137
        %v3192 = vpop.f32.mrf.mxu0
        %v3193 = vadd.f32 %v3170, %v3192
        %3194 = vmatmul.f32.gmra.mxu0 %v3138
        %v3195 = vpop.f32.mrf.mxu0
        %v3196 = vadd.f32 %v3170, %v3195
        %3197 = vmatmul.f32.gmra.mxu0 %v3139
        %v3198 = vpop.f32.mrf.mxu0
        %v3199 = vadd.f32 %v3170, %v3198
        %3200 = vmatmul.f32.gmra.mxu0 %v3140
        %v3201 = vpop.f32.mrf.mxu0
        %v3202 = vadd.f32 %v3170, %v3201
        %3203 = vmatmul.f32.gmra.mxu0 %v3141
        %v3204 = vpop.f32.mrf.mxu0
        %v3205 = vadd.f32 %v3170, %v3204
        %3206 = vmatmul.f32.gmra.mxu0 %v3142
        %v3207 = vpop.f32.mrf.mxu0
        %v3208 = vadd.f32 %v3170, %v3207
        %3209 = vmatmul.f32.gmra.mxu0 %v3143
        %v3210 = vpop.f32.mrf.mxu0
        %v3211 = vadd.f32 %v3170, %v3210
        %3212 = vmatmul.f32.gmra.mxu0 %v3144
        %v3213 = vpop.f32.mrf.mxu0
        %v3214 = vadd.f32 %v3170, %v3213
        %3215 = vmatmul.f32.gmra.mxu0 %v3145
        %v3216 = vpop.f32.mrf.mxu0
        %v3217 = vadd.f32 %v3170, %v3216
        %3218 = vmatmul.f32.gmra.mxu0 %v3146
        %v3219 = vpop.f32.mrf.mxu0
        %v3220 = vadd.f32 %v3170, %v3219
        %3221 = vmatmul.f32.gmra.mxu0 %v3147
        %v3222 = vpop.f32.mrf.mxu0
        %v3223 = vadd.f32 %v3170, %v3222
        %3224 = vmatmul.f32.gmra.mxu0 %v3148
        %v3225 = vpop.f32.mrf.mxu0
        %v3226 = vadd.f32 %v3170, %v3225
        %3227 = vmatmul.f32.gmra.mxu0 %v3149
        %v3228 = vpop.f32.mrf.mxu0
        %v3229 = vadd.f32 %v3170, %v3228
        %3230 = vmatmul.f32.gmra.mxu0 %v3150
        %v3231 = vpop.f32.mrf.mxu0
        %v3232 = vadd.f32 %v3170, %v3231
        %3233 = vmatmul.f32.gmra.mxu0 %v3151
        %v3234 = vpop.f32.mrf.mxu0
        %v3235 = vadd.f32 %v3170, %v3234
        %3236 = vdwg.mxu0
        %v3237 = vadd.f32 %v363, %v3190
        %v3238 = vadd.f32 %v364, %v3193
        %v3239 = vadd.f32 %v365, %v3196
        %v3240 = vadd.f32 %v366, %v3199
        %v3241 = vadd.f32 %v367, %v3202
        %v3242 = vadd.f32 %v368, %v3205
        %v3243 = vadd.f32 %v369, %v3208
        %v3244 = vadd.f32 %v370, %v3211
        %v3245 = vadd.f32 %v371, %v3214
        %v3246 = vadd.f32 %v372, %v3217
        %v3247 = vadd.f32 %v373, %v3220
        %v3248 = vadd.f32 %v374, %v3223
        %v3249 = vadd.f32 %v375, %v3226
        %v3250 = vadd.f32 %v376, %v3229
        %v3251 = vadd.f32 %v377, %v3232
        %v3252 = vadd.f32 %v378, %v3235
        %3253 = vst [vmem:[%s362] sm:$0xff] %v3237
        %3254 = vst [vmem:[%s362 + $0x8] sm:$0xff] %v3238
        %3255 = vst [vmem:[%s362 + $0x10] sm:$0xff] %v3239
        %3256 = vst [vmem:[%s362 + $0x18] sm:$0xff] %v3240
        %3257 = vst [vmem:[%s362 + $0x20] sm:$0xff] %v3241
        %3258 = vst [vmem:[%s362 + $0x28] sm:$0xff] %v3242
        %3259 = vst [vmem:[%s362 + $0x30] sm:$0xff] %v3243
        %3260 = vst [vmem:[%s362 + $0x38] sm:$0xff] %v3244
        %3261 = vst [vmem:[%s362 + $0x40] sm:$0xff] %v3245
        %3262 = vst [vmem:[%s362 + $0x48] sm:$0xff] %v3246
        %3263 = vst [vmem:[%s362 + $0x50] sm:$0xff] %v3247
        %3264 = vst [vmem:[%s362 + $0x58] sm:$0xff] %v3248
        %3265 = vst [vmem:[%s362 + $0x60] sm:$0xff] %v3249
        %3266 = vst [vmem:[%s362 + $0x68] sm:$0xff] %v3250
        %3267 = vst [vmem:[%s362 + $0x70] sm:$0xff] %v3251
        %3268 = vst [vmem:[%s362 + $0x78] sm:$0xff] %v3252
        %p3269 = scmp.lt.s32.totalorder %s23, 1
        %s3270 = scalar_select %p3269, %s23, 1
        %s3271 = smul.addr %s3270, 16
        %s3272 = smul.addr %s3271, 8
        %s3273 = scalar_lea.vmem %s7, %s3272
        // Predicated region
        $region69: #{transformer_block.2} parent=47 // pred_check
          %p3274 = pneg %p193
        $region70: #{transformer_block.2} parent=47 // pred_check_branch
          %3276 = sbr.rel (%p3274) target = $region72
        $region71: #{transformer_block.2} parent=47 // pred_region
          _
        $region72: #{transformer_block.2} parent=47 // pred_fallthru
          _
      $region48: #{transformer_block.2} parent=5 // pred_fallthru
        _
      %p3277 = scmp.le.s32.totalorder 2, %s18
      // Predicated region
      $region73: #{transformer_block.2} parent=5 // pred_check
        %p3278 = pneg %p3277
      $region74: #{transformer_block.2} parent=5 // pred_check_branch
        %3280 = sbr.rel (%p3278) target = $region76
      $region75: #{transformer_block.2} parent=5 // pred_region
        %s3281 = ssub.s32 %s18, 2
        // Predicated region
        $region77: #{transformer_block.2} parent=75 // pred_check
          %p3282 = pneg %p199
        $region78: #{transformer_block.2} parent=75 // pred_check_branch
          %3284 = sbr.rel (%p3282) target = $region80
        $region79: #{transformer_block.2} parent=75 // pred_region
          %p3285 = scmp.lt.s32.totalorder %s24, 1
          %s3286 = scalar_select %p3285, %s24, 1
          %s3287 = smul.addr %s3286, 16
          %s3288 = smul.addr %s3287, 8
          %s3289 = scalar_lea.vmem %s7, %s3288
        $region80: #{transformer_block.2} parent=75 // pred_fallthru
          _
      $region76: #{transformer_block.2} parent=5 // pred_fallthru
        _
    $region6: #{transformer_block.2} parent=1 // loop_footer
      %s22 = sadd.s32 1, %s18
    $region7: #{transformer_block.2} parent=1 // loop_footer_branch
      %17 = sbr.rel target = $region3
    $region8: #{transformer_block.2} parent=1 // loop_exit
      _
    %3290 = vsyncpa [#allocation3], 1
    %s3291 = scalar_lea.sflag [#allocation3], 1
    %3292 = vsyncpa %s3291, 1
    %3293 = vsyncpa [#allocation5], 1
    %3294 = vsyncpa [#allocation8], 1

</llo_original>
